<compile_context>
chip_gen: v7x
topology: tpu7x:2x2x1
jax: 0.10.0
libtpu: 0.0.40
codegen_flags: <defaults>
</compile_context>

<pallas_src>
import jax
import jax.numpy as jnp
from jax.experimental import pallas as pl
from jax.experimental.pallas import tpu as pltpu

SUBLANE = 8
LANE = 128


def _round_up(x, m):
    return ((x + m - 1) // m) * m


# ----------------------------------------------------------------------------
# Fused forward kernel (built per static architecture)
# ----------------------------------------------------------------------------
def _make_fused_kernel(n_lstm, n_act, n_qf_rest, T, Bp, H):
    G = 4 * H

    def kernel(*refs):
        o_ref = refs[-1]                     # output: (Bp, 1)
        in_refs = refs[:-1]

        idx = 0
        xs_ref = in_refs[idx]; idx += 1      # (T*Bp, D) time-major, pre-flattened
        act_ref = in_refs[idx]; idx += 1     # (Bp, A)
        gscale_ref = in_refs[idx]; idx += 1  # (1, 4H)
        gshift_ref = in_refs[idx]; idx += 1  # (1, 4H)
        lstm_refs = []
        for _ in range(n_lstm):
            lstm_refs.append(in_refs[idx:idx + 3]); idx += 3      # wih, whh, b
        act_net_refs = []
        for _ in range(n_act):
            act_net_refs.append(in_refs[idx:idx + 2]); idx += 2   # w, b
        qf_ws_ref, qf_wa_ref, qf_b0_ref = in_refs[idx:idx + 3]; idx += 3
        qf_rest_refs = []
        for _ in range(n_qf_rest):
            qf_rest_refs.append(in_refs[idx:idx + 2]); idx += 2
        qf_out_w_ref, qf_out_b_ref = in_refs[idx:idx + 2]; idx += 2

        f32 = jnp.float32

        def mm(x, w):
            # cast the activation operand to the (possibly bf16) weight dtype;
            # accumulate in f32 on the MXU.
            return jnp.dot(x.astype(w.dtype), w, preferred_element_type=f32)

        # ---- per-lane gate activation constants (hoisted once) ----
        gscale = jnp.broadcast_to(gscale_ref[...], (Bp, G))
        gshift = jnp.broadcast_to(gshift_ref[...], (Bp, G))

        # ---- small loop-invariant weights / biases (a few vregs each) ----
        whh = [lstm_refs[l][1][...] for l in range(n_lstm)]           # (H, 4H)
        wih_hi = [lstm_refs[l][0][...] for l in range(1, n_lstm)]      # (H, 4H)
        bias = [jnp.broadcast_to(lstm_refs[l][2][...], (Bp, G)) for l in range(n_lstm)]

        # ---- layer-0 input projection for ALL timesteps in one matmul ----
        xproj0 = mm(xs_ref[...], lstm_refs[0][0][...])                 # (T*Bp, 4H)

        def lstm_step(l, x_gates, hl, cl):
            gates = x_gates + mm(hl, whh[l]) + bias[l]
            # sigmoid(i,f,o) and tanh(g) fused into a single tanh over all 4H lanes:
            # sigmoid(x) = 0.5*tanh(0.5*x) + 0.5 ; tanh(x) = 1.0*tanh(1.0*x) + 0.0
            act = jnp.tanh(gates * gscale) * gscale + gshift
            i = act[:, 0 * H:1 * H]
            f = act[:, 1 * H:2 * H]
            g = act[:, 2 * H:3 * H]
            o = act[:, 3 * H:4 * H]
            c_new = f * cl + i * g
            h_new = o * jnp.tanh(c_new)
            return h_new, c_new

        # ---- wavefronted stacked recurrence: h/c live in vregs, no VMEM scratch ----
        h = [jnp.zeros((Bp, H), f32) for _ in range(n_lstm)]
        c = [jnp.zeros((Bp, H), f32) for _ in range(n_lstm)]
        for t in range(T):                                            # static unroll
            h[0], c[0] = lstm_step(0, xproj0[t * Bp:(t + 1) * Bp, :], h[0], c[0])
            for l in range(1, n_lstm):
                h[l], c[l] = lstm_step(l, mm(h[l - 1], wih_hi[l - 1]), h[l], c[l])
        latent_state = h[n_lstm - 1]                                  # hn[-1]

        # ---- action_net: (Linear + ReLU)*, Tanh squash ----
        a = act_ref[...]
        for w_ref, b_ref in act_net_refs:
            a = jnp.maximum(mm(a, w_ref[...]) + b_ref[...], 0.0)
        latent_action = jnp.tanh(a)

        # ---- qf1: first layer split into state/action parts (no lane concat) ----
        z = (mm(latent_state, qf_ws_ref[...]) + mm(latent_action, qf_wa_ref[...])
             + qf_b0_ref[...])
        z = jnp.maximum(z, 0.0)
        for w_ref, b_ref in qf_rest_refs:
            z = jnp.maximum(mm(z, w_ref[...]) + b_ref[...], 0.0)

        # ---- final 1-wide head on VPU + XLU (no 1-column MXU pass) ----
        q = jnp.sum(z * qf_out_w_ref[...], axis=-1, keepdims=True) + qf_out_b_ref[...]
        o_ref[...] = jnp.tanh(q).astype(o_ref.dtype)

    return kernel


# ----------------------------------------------------------------------------
# Parameter construction (deterministic, synthetic, logical shapes)
# ----------------------------------------------------------------------------
def make_params(key, features_dim, hidden_size, num_layers,
                action_dim, net_arch_action, net_arch):
    params = {}
    keys = iter(jax.random.split(key, 64))

    def init(shape, scale=0.1):
        return jax.random.normal(next(keys), shape, jnp.float32) * scale

    # LSTM layers: weights stored pre-transposed as (in, 4H); combined bias (1, 4H)
    lstm = []
    in_dim = features_dim
    for _ in range(num_layers):
        lstm.append(dict(
            wih_t=init((in_dim, 4 * hidden_size)),
            whh_t=init((hidden_size, 4 * hidden_size)),
            b=init((1, 4 * hidden_size)),   # b_ih + b_hh folded together
        ))
        in_dim = hidden_size
    params["lstm"] = lstm

    # action_net: Linear+ReLU per net_arch_action entry, final Tanh squash
    act_layers = []
    d = action_dim
    for h in net_arch_action:
        act_layers.append(dict(w=init((d, h)), b=init((1, h))))
        d = h
    params["action_net"] = act_layers

    # qf1: hidden Linear+ReLU per net_arch entry, then Linear->1, Tanh squash
    qf_layers = []
    d = hidden_size + net_arch_action[-1]
    for h in net_arch:
        qf_layers.append(dict(w=init((d, h)), b=init((1, h))))
        d = h
    qf_layers.append(dict(w=init((d, 1)), b=init((1, 1))))
    params["qf1"] = qf_layers
    return params


# ----------------------------------------------------------------------------
# One-time layout prep of parameters for the kernel
# ----------------------------------------------------------------------------
def pad_params(params, hidden_size, matmul_dtype=jnp.float32):
    """Prepares the TPU layout:
      * gates stay PACKED (no per-gate lane padding: with H=32, 4H=128 already fills
        one lane group exactly),
      * the qf1 first layer is pre-split into a state part and an action part,
      * the 1-column output weight is stored as a (1, d) row for a VPU reduce,
      * per-lane gate-activation scale/shift vectors are prebuilt (one tanh for all
        four gates: sigmoid(x) = 0.5*tanh(0.5x)+0.5),
      * optionally weights are stored in bf16 for v6e/v7x MXU (biases stay f32)."""
    H = hidden_size

    def cast(w):
        return w.astype(matmul_dtype)

    pp = {"lstm": [], "action_net": [], "qf1_rest": []}
    for layer in params["lstm"]:
        pp["lstm"].append(dict(wih=cast(layer["wih_t"]),
                               whh=cast(layer["whh_t"]),
                               b=layer["b"]))
    for layer in params["action_net"]:
        pp["action_net"].append(dict(w=cast(layer["w"]), b=layer["b"]))

    # qf1 first layer: rows [:H] multiply latent_state, rows [H:] multiply latent_action
    first = params["qf1"][0]
    pp["qf1_ws"] = cast(first["w"][:H])
    pp["qf1_wa"] = cast(first["w"][H:])
    pp["qf1_b0"] = first["b"]
    for layer in params["qf1"][1:-1]:
        pp["qf1_rest"].append(dict(w=cast(layer["w"]), b=layer["b"]))
    pp["qf1_out_w_row"] = params["qf1"][-1]["w"].T        # (1, d_last), f32 (VPU reduce)
    pp["qf1_out_b"] = params["qf1"][-1]["b"]

    # gate activation constants (PyTorch gate order i, f, g, o)
    ones = jnp.ones((1, H), jnp.float32)
    pp["gate_scale"] = jnp.concatenate(
        [0.5 * ones, 0.5 * ones, 1.0 * ones, 0.5 * ones], axis=1)
    pp["gate_shift"] = jnp.concatenate(
        [0.5 * ones, 0.5 * ones, 0.0 * ones, 0.5 * ones], axis=1)
    return pp


# ----------------------------------------------------------------------------
# Forward pass: single fused pallas_call (JAX glue only for reshape/pad/slice)
# ----------------------------------------------------------------------------
def critic_forward(pp, obs, actions):
    """pp = prepared params (pad_params).  obs: (B, T, *state_shape), actions: (B, A)."""
    B, T = obs.shape[0], obs.shape[1]
    states = obs.reshape(B, T, -1).astype(jnp.float32)       # flatten(start_dim=2)
    xs = jnp.transpose(states, (1, 0, 2))                    # (T, B, D) time-major
    Bp = max(SUBLANE, _round_up(B, SUBLANE))                 # pad batch to full sublanes
    xs_p = jnp.pad(xs, ((0, 0), (0, Bp - B), (0, 0)))
    xs_flat = xs_p.reshape(T * Bp, -1)                       # flatten OUTSIDE the kernel
    act_p = jnp.pad(actions.astype(jnp.float32), ((0, Bp - B), (0, 0)))

    H = pp["lstm"][0]["whh"].shape[0]
    D = xs_flat.shape[1]
    A = act_p.shape[1]
    n_lstm = len(pp["lstm"])
    n_act = len(pp["action_net"])
    n_qf_rest = len(pp["qf1_rest"])

    inputs = [xs_flat, act_p, pp["gate_scale"], pp["gate_shift"]]
    for layer in pp["lstm"]:
        inputs += [layer["wih"], layer["whh"], layer["b"]]
    for layer in pp["action_net"]:
        inputs += [layer["w"], layer["b"]]
    inputs += [pp["qf1_ws"], pp["qf1_wa"], pp["qf1_b0"]]
    for layer in pp["qf1_rest"]:
        inputs += [layer["w"], layer["b"]]
    inputs += [pp["qf1_out_w_row"], pp["qf1_out_b"]]

    # ---- advisory cost estimate for the XLA scheduler ----
    flops = 2 * T * Bp * D * 4 * H                 # hoisted layer-0 input projection
    transcendentals = 0
    for l in range(n_lstm):
        flops += 2 * T * Bp * H * 4 * H            # recurrent matmul per step
        if l > 0:
            flops += 2 * T * Bp * H * 4 * H        # per-step input proj (layers > 0)
        transcendentals += T * Bp * 5 * H          # tanh over 4H gates + tanh(c)
    d = A
    for layer in pp["action_net"]:
        flops += 2 * Bp * d * layer["w"].shape[1]
        d = layer["w"].shape[1]
    transcendentals += Bp * d                      # tanh squash of latent_action
    d2 = pp["qf1_ws"].shape[1]
    flops += 2 * Bp * (H + d) * d2
    for layer in pp["qf1_rest"]:
        flops += 2 * Bp * d2 * layer["w"].shape[1]
        d2 = layer["w"].shape[1]
    flops += 2 * Bp * d2                           # final reduce head
    transcendentals += Bp                          # final tanh
    bytes_accessed = sum(int(x.size) * x.dtype.itemsize for x in inputs) + Bp * 4

    kernel = _make_fused_kernel(n_lstm, n_act, n_qf_rest, T, Bp, H)
    vmem_spec = pl.BlockSpec(memory_space=pltpu.MemorySpace.VMEM)
    q_full = pl.pallas_call(
        kernel,
        out_shape=jax.ShapeDtypeStruct((Bp, 1), jnp.float32),
        in_specs=[vmem_spec] * len(inputs),        # whole arrays in VMEM, no grid
        out_specs=vmem_spec,
        cost_estimate=pl.CostEstimate(flops=int(flops),
                                      transcendentals=int(transcendentals),
                                      bytes_accessed=int(bytes_accessed)),
    )(*inputs)
    return q_full[:B]                              # drop batch padding


# ----------------------------------------------------------------------------
# Pure-JAX reference (for correctness check, uses the logical params)
# ----------------------------------------------------------------------------
def critic_forward_ref(params, obs, actions):
    B, T = obs.shape[0], obs.shape[1]
    states = obs.reshape(B, T, -1)
    x = jnp.transpose(states, (1, 0, 2))
    for layer in params["lstm"]:
        H = layer["whh_t"].shape[0]

        def step(carry, xt, layer=layer, H=H):
            h, c = carry
            g = xt @ layer["wih_t"] + h @ layer["whh_t"] + layer["b"][0]
            i = jax.nn.sigmoid(g[:, :H])
            f = jax.nn.sigmoid(g[:, H:2 * H])
            gg = jnp.tanh(g[:, 2 * H:3 * H])
            o = jax.nn.sigmoid(g[:, 3 * H:])
            c = f * c + i * gg
            h = o * jnp.tanh(c)
            return (h, c), h

        init = (jnp.zeros((B, H), jnp.float32), jnp.zeros((B, H), jnp.float32))
        _, x = jax.lax.scan(step, init, x)
    latent_state = x[-1]

    a = actions
    for layer in params["action_net"]:
        a = jnp.maximum(a @ layer["w"] + layer["b"], 0.0)
    latent_action = jnp.tanh(a)

    z = jnp.concatenate([latent_state, latent_action], axis=1)
    for layer in params["qf1"][:-1]:
        z = jnp.maximum(z @ layer["w"] + layer["b"], 0.0)
    last = params["qf1"][-1]
    return jnp.tanh(z @ last["w"] + last["b"])


# ----------------------------------------------------------------------------
if __name__ == "__main__":
    # Small shapes consistent with the module
    B, T = 2, 8                       # batch, sequence length
    state_shape = (4, 4)              # flattened -> features_dim = 16
    features_dim = 16
    hidden_size = 32                  # 4H = 128 -> one lane group, no padding needed
    num_layers = 2
    action_dim = 4
    net_arch_action = [32, 32]
    net_arch = [64, 64]

    key = jax.random.PRNGKey(0)
    k_obs, k_act, k_par = jax.random.split(key, 3)

    obs = jax.random.normal(k_obs, (B, T) + state_shape, jnp.float32)
    actions = jax.random.normal(k_act, (B, action_dim), jnp.float32)
    params = make_params(k_par, features_dim, hidden_size, num_layers,
                         action_dim, net_arch_action, net_arch)
    # One-time layout prep (outside jit).  On v6e/v7x pass matmul_dtype=jnp.bfloat16
    # (loosen the allclose tolerance accordingly); kept f32 here for exact verification.
    padded = pad_params(params, hidden_size)

    fwd = jax.jit(critic_forward)
    q = jax.block_until_ready(fwd(padded, obs, actions))

    q_ref = critic_forward_ref(params, obs, actions)
    assert q.shape == (B, 1)
    assert jnp.allclose(q, q_ref, atol=2e-5, rtol=2e-5), (q, q_ref)

    print("KERNEL_OK")
</pallas_src>

<mosaic_0001>
module attributes {stable_mosaic.version = 11 : i64} {
  func.func @kernel(%arg0: memref<64x16xf32, #tpu.memory_space<vmem>>, %arg1: memref<8x4xf32, #tpu.memory_space<vmem>>, %arg2: memref<1x128xf32, #tpu.memory_space<vmem>>, %arg3: memref<1x128xf32, #tpu.memory_space<vmem>>, %arg4: memref<16x128xf32, #tpu.memory_space<vmem>>, %arg5: memref<32x128xf32, #tpu.memory_space<vmem>>, %arg6: memref<1x128xf32, #tpu.memory_space<vmem>>, %arg7: memref<32x128xf32, #tpu.memory_space<vmem>>, %arg8: memref<32x128xf32, #tpu.memory_space<vmem>>, %arg9: memref<1x128xf32, #tpu.memory_space<vmem>>, %arg10: memref<4x32xf32, #tpu.memory_space<vmem>>, %arg11: memref<1x32xf32, #tpu.memory_space<vmem>>, %arg12: memref<32x32xf32, #tpu.memory_space<vmem>>, %arg13: memref<1x32xf32, #tpu.memory_space<vmem>>, %arg14: memref<32x64xf32, #tpu.memory_space<vmem>>, %arg15: memref<32x64xf32, #tpu.memory_space<vmem>>, %arg16: memref<1x64xf32, #tpu.memory_space<vmem>>, %arg17: memref<64x64xf32, #tpu.memory_space<vmem>>, %arg18: memref<1x64xf32, #tpu.memory_space<vmem>>, %arg19: memref<1x64xf32, #tpu.memory_space<vmem>>, %arg20: memref<1x1xf32, #tpu.memory_space<vmem>>, %arg21: memref<8x1xf32, #tpu.memory_space<vmem>>) attributes {dimension_semantics = [], scalar_prefetch = 0 : i64, scratch_operands = 0 : i64, tpu.core_type = #tpu.core_type<tc>} {
    %c0 = arith.constant 0 : index
    %c0_0 = arith.constant 0 : index
    %0 = vector.load %arg2[%c0, %c0_0] : memref<1x128xf32, #tpu.memory_space<vmem>>, vector<1x128xf32>
    %1 = vector.shape_cast %0 : vector<1x128xf32> to vector<1x128xf32>
    %2 = vector.broadcast %1 : vector<1x128xf32> to vector<8x128xf32>
    %c0_1 = arith.constant 0 : index
    %c0_2 = arith.constant 0 : index
    %3 = vector.load %arg3[%c0_1, %c0_2] : memref<1x128xf32, #tpu.memory_space<vmem>>, vector<1x128xf32>
    %4 = vector.shape_cast %3 : vector<1x128xf32> to vector<1x128xf32>
    %5 = vector.broadcast %4 : vector<1x128xf32> to vector<8x128xf32>
    %c0_3 = arith.constant 0 : index
    %c0_4 = arith.constant 0 : index
    %6 = vector.load %arg5[%c0_3, %c0_4] : memref<32x128xf32, #tpu.memory_space<vmem>>, vector<32x128xf32>
    %c0_5 = arith.constant 0 : index
    %c0_6 = arith.constant 0 : index
    %7 = vector.load %arg8[%c0_5, %c0_6] : memref<32x128xf32, #tpu.memory_space<vmem>>, vector<32x128xf32>
    %c0_7 = arith.constant 0 : index
    %c0_8 = arith.constant 0 : index
    %8 = vector.load %arg7[%c0_7, %c0_8] : memref<32x128xf32, #tpu.memory_space<vmem>>, vector<32x128xf32>
    %c0_9 = arith.constant 0 : index
    %c0_10 = arith.constant 0 : index
    %9 = vector.load %arg6[%c0_9, %c0_10] : memref<1x128xf32, #tpu.memory_space<vmem>>, vector<1x128xf32>
    %10 = vector.shape_cast %9 : vector<1x128xf32> to vector<1x128xf32>
    %11 = vector.broadcast %10 : vector<1x128xf32> to vector<8x128xf32>
    %c0_11 = arith.constant 0 : index
    %c0_12 = arith.constant 0 : index
    %12 = vector.load %arg9[%c0_11, %c0_12] : memref<1x128xf32, #tpu.memory_space<vmem>>, vector<1x128xf32>
    %13 = vector.shape_cast %12 : vector<1x128xf32> to vector<1x128xf32>
    %14 = vector.broadcast %13 : vector<1x128xf32> to vector<8x128xf32>
    %c0_13 = arith.constant 0 : index
    %c0_14 = arith.constant 0 : index
    %15 = vector.load %arg0[%c0_13, %c0_14] : memref<64x16xf32, #tpu.memory_space<vmem>>, vector<64x16xf32>
    %c0_15 = arith.constant 0 : index
    %c0_16 = arith.constant 0 : index
    %16 = vector.load %arg4[%c0_15, %c0_16] : memref<16x128xf32, #tpu.memory_space<vmem>>, vector<16x128xf32>
    %cst = arith.constant dense<0.000000e+00> : vector<64x128xf32>
    %17 = tpu.matmul %15, %16, %cst {dimension_numbers = #tpu.dot_dimension_numbers<[1], [0], [0], [1], [0, 0, 1, 1], [], []>} : vector<64x16xf32>, vector<16x128xf32>, vector<64x128xf32> -> vector<64x128xf32>
    %cst_17 = arith.constant 0.000000e+00 : f32
    %18 = vector.broadcast %cst_17 : f32 to vector<8x32xf32>
    %cst_18 = arith.constant 0.000000e+00 : f32
    %19 = vector.broadcast %cst_18 : f32 to vector<8x32xf32>
    %cst_19 = arith.constant 0.000000e+00 : f32
    %20 = vector.broadcast %cst_19 : f32 to vector<8x32xf32>
    %cst_20 = arith.constant 0.000000e+00 : f32
    %21 = vector.broadcast %cst_20 : f32 to vector<8x32xf32>
    %22 = vector.extract_strided_slice %17 {offsets = [0, 0], sizes = [8, 128], strides = [1, 1]} : vector<64x128xf32> to vector<8x128xf32>
    %cst_21 = arith.constant dense<0.000000e+00> : vector<8x128xf32>
    %23 = tpu.matmul %18, %6, %cst_21 {dimension_numbers = #tpu.dot_dimension_numbers<[1], [0], [0], [1], [0, 0, 1, 1], [], []>} : vector<8x32xf32>, vector<32x128xf32>, vector<8x128xf32> -> vector<8x128xf32>
    %24 = arith.addf %22, %23 : vector<8x128xf32>
    %25 = arith.addf %24, %11 : vector<8x128xf32>
    %26 = arith.mulf %25, %2 : vector<8x128xf32>
    %27 = math.tanh %26 : vector<8x128xf32>
    %28 = arith.mulf %27, %2 : vector<8x128xf32>
    %29 = arith.addf %28, %5 : vector<8x128xf32>
    %30 = vector.extract_strided_slice %29 {offsets = [0, 0], sizes = [8, 32], strides = [1, 1]} : vector<8x128xf32> to vector<8x32xf32>
    %31 = vector.extract_strided_slice %29 {offsets = [0, 32], sizes = [8, 32], strides = [1, 1]} : vector<8x128xf32> to vector<8x32xf32>
    %32 = vector.extract_strided_slice %29 {offsets = [0, 64], sizes = [8, 32], strides = [1, 1]} : vector<8x128xf32> to vector<8x32xf32>
    %33 = vector.extract_strided_slice %29 {offsets = [0, 96], sizes = [8, 32], strides = [1, 1]} : vector<8x128xf32> to vector<8x32xf32>
    %34 = arith.mulf %31, %20 : vector<8x32xf32>
    %35 = arith.mulf %30, %32 : vector<8x32xf32>
    %36 = arith.addf %34, %35 : vector<8x32xf32>
    %37 = math.tanh %36 : vector<8x32xf32>
    %38 = arith.mulf %33, %37 : vector<8x32xf32>
    %cst_22 = arith.constant dense<0.000000e+00> : vector<8x128xf32>
    %39 = tpu.matmul %38, %8, %cst_22 {dimension_numbers = #tpu.dot_dimension_numbers<[1], [0], [0], [1], [0, 0, 1, 1], [], []>} : vector<8x32xf32>, vector<32x128xf32>, vector<8x128xf32> -> vector<8x128xf32>
    %cst_23 = arith.constant dense<0.000000e+00> : vector<8x128xf32>
    %40 = tpu.matmul %19, %7, %cst_23 {dimension_numbers = #tpu.dot_dimension_numbers<[1], [0], [0], [1], [0, 0, 1, 1], [], []>} : vector<8x32xf32>, vector<32x128xf32>, vector<8x128xf32> -> vector<8x128xf32>
    %41 = arith.addf %39, %40 : vector<8x128xf32>
    %42 = arith.addf %41, %14 : vector<8x128xf32>
    %43 = arith.mulf %42, %2 : vector<8x128xf32>
    %44 = math.tanh %43 : vector<8x128xf32>
    %45 = arith.mulf %44, %2 : vector<8x128xf32>
    %46 = arith.addf %45, %5 : vector<8x128xf32>
    %47 = vector.extract_strided_slice %46 {offsets = [0, 0], sizes = [8, 32], strides = [1, 1]} : vector<8x128xf32> to vector<8x32xf32>
    %48 = vector.extract_strided_slice %46 {offsets = [0, 32], sizes = [8, 32], strides = [1, 1]} : vector<8x128xf32> to vector<8x32xf32>
    %49 = vector.extract_strided_slice %46 {offsets = [0, 64], sizes = [8, 32], strides = [1, 1]} : vector<8x128xf32> to vector<8x32xf32>
    %50 = vector.extract_strided_slice %46 {offsets = [0, 96], sizes = [8, 32], strides = [1, 1]} : vector<8x128xf32> to vector<8x32xf32>
    %51 = arith.mulf %48, %21 : vector<8x32xf32>
    %52 = arith.mulf %47, %49 : vector<8x32xf32>
    %53 = arith.addf %51, %52 : vector<8x32xf32>
    %54 = math.tanh %53 : vector<8x32xf32>
    %55 = arith.mulf %50, %54 : vector<8x32xf32>
    %56 = vector.extract_strided_slice %17 {offsets = [8, 0], sizes = [8, 128], strides = [1, 1]} : vector<64x128xf32> to vector<8x128xf32>
    %cst_24 = arith.constant dense<0.000000e+00> : vector<8x128xf32>
    %57 = tpu.matmul %38, %6, %cst_24 {dimension_numbers = #tpu.dot_dimension_numbers<[1], [0], [0], [1], [0, 0, 1, 1], [], []>} : vector<8x32xf32>, vector<32x128xf32>, vector<8x128xf32> -> vector<8x128xf32>
    %58 = arith.addf %56, %57 : vector<8x128xf32>
    %59 = arith.addf %58, %11 : vector<8x128xf32>
    %60 = arith.mulf %59, %2 : vector<8x128xf32>
    %61 = math.tanh %60 : vector<8x128xf32>
    %62 = arith.mulf %61, %2 : vector<8x128xf32>
    %63 = arith.addf %62, %5 : vector<8x128xf32>
    %64 = vector.extract_strided_slice %63 {offsets = [0, 0], sizes = [8, 32], strides = [1, 1]} : vector<8x128xf32> to vector<8x32xf32>
    %65 = vector.extract_strided_slice %63 {offsets = [0, 32], sizes = [8, 32], strides = [1, 1]} : vector<8x128xf32> to vector<8x32xf32>
    %66 = vector.extract_strided_slice %63 {offsets = [0, 64], sizes = [8, 32], strides = [1, 1]} : vector<8x128xf32> to vector<8x32xf32>
    %67 = vector.extract_strided_slice %63 {offsets = [0, 96], sizes = [8, 32], strides = [1, 1]} : vector<8x128xf32> to vector<8x32xf32>
    %68 = arith.mulf %65, %36 : vector<8x32xf32>
    %69 = arith.mulf %64, %66 : vector<8x32xf32>
    %70 = arith.addf %68, %69 : vector<8x32xf32>
    %71 = math.tanh %70 : vector<8x32xf32>
    %72 = arith.mulf %67, %71 : vector<8x32xf32>
    %cst_25 = arith.constant dense<0.000000e+00> : vector<8x128xf32>
    %73 = tpu.matmul %72, %8, %cst_25 {dimension_numbers = #tpu.dot_dimension_numbers<[1], [0], [0], [1], [0, 0, 1, 1], [], []>} : vector<8x32xf32>, vector<32x128xf32>, vector<8x128xf32> -> vector<8x128xf32>
    %cst_26 = arith.constant dense<0.000000e+00> : vector<8x128xf32>
    %74 = tpu.matmul %55, %7, %cst_26 {dimension_numbers = #tpu.dot_dimension_numbers<[1], [0], [0], [1], [0, 0, 1, 1], [], []>} : vector<8x32xf32>, vector<32x128xf32>, vector<8x128xf32> -> vector<8x128xf32>
    %75 = arith.addf %73, %74 : vector<8x128xf32>
    %76 = arith.addf %75, %14 : vector<8x128xf32>
    %77 = arith.mulf %76, %2 : vector<8x128xf32>
    %78 = math.tanh %77 : vector<8x128xf32>
    %79 = arith.mulf %78, %2 : vector<8x128xf32>
    %80 = arith.addf %79, %5 : vector<8x128xf32>
    %81 = vector.extract_strided_slice %80 {offsets = [0, 0], sizes = [8, 32], strides = [1, 1]} : vector<8x128xf32> to vector<8x32xf32>
    %82 = vector.extract_strided_slice %80 {offsets = [0, 32], sizes = [8, 32], strides = [1, 1]} : vector<8x128xf32> to vector<8x32xf32>
    %83 = vector.extract_strided_slice %80 {offsets = [0, 64], sizes = [8, 32], strides = [1, 1]} : vector<8x128xf32> to vector<8x32xf32>
    %84 = vector.extract_strided_slice %80 {offsets = [0, 96], sizes = [8, 32], strides = [1, 1]} : vector<8x128xf32> to vector<8x32xf32>
    %85 = arith.mulf %82, %53 : vector<8x32xf32>
    %86 = arith.mulf %81, %83 : vector<8x32xf32>
    %87 = arith.addf %85, %86 : vector<8x32xf32>
    %88 = math.tanh %87 : vector<8x32xf32>
    %89 = arith.mulf %84, %88 : vector<8x32xf32>
    %90 = vector.extract_strided_slice %17 {offsets = [16, 0], sizes = [8, 128], strides = [1, 1]} : vector<64x128xf32> to vector<8x128xf32>
    %cst_27 = arith.constant dense<0.000000e+00> : vector<8x128xf32>
    %91 = tpu.matmul %72, %6, %cst_27 {dimension_numbers = #tpu.dot_dimension_numbers<[1], [0], [0], [1], [0, 0, 1, 1], [], []>} : vector<8x32xf32>, vector<32x128xf32>, vector<8x128xf32> -> vector<8x128xf32>
    %92 = arith.addf %90, %91 : vector<8x128xf32>
    %93 = arith.addf %92, %11 : vector<8x128xf32>
    %94 = arith.mulf %93, %2 : vector<8x128xf32>
    %95 = math.tanh %94 : vector<8x128xf32>
    %96 = arith.mulf %95, %2 : vector<8x128xf32>
    %97 = arith.addf %96, %5 : vector<8x128xf32>
    %98 = vector.extract_strided_slice %97 {offsets = [0, 0], sizes = [8, 32], strides = [1, 1]} : vector<8x128xf32> to vector<8x32xf32>
    %99 = vector.extract_strided_slice %97 {offsets = [0, 32], sizes = [8, 32], strides = [1, 1]} : vector<8x128xf32> to vector<8x32xf32>
    %100 = vector.extract_strided_slice %97 {offsets = [0, 64], sizes = [8, 32], strides = [1, 1]} : vector<8x128xf32> to vector<8x32xf32>
    %101 = vector.extract_strided_slice %97 {offsets = [0, 96], sizes = [8, 32], strides = [1, 1]} : vector<8x128xf32> to vector<8x32xf32>
    %102 = arith.mulf %99, %70 : vector<8x32xf32>
    %103 = arith.mulf %98, %100 : vector<8x32xf32>
    %104 = arith.addf %102, %103 : vector<8x32xf32>
    %105 = math.tanh %104 : vector<8x32xf32>
    %106 = arith.mulf %101, %105 : vector<8x32xf32>
    %cst_28 = arith.constant dense<0.000000e+00> : vector<8x128xf32>
    %107 = tpu.matmul %106, %8, %cst_28 {dimension_numbers = #tpu.dot_dimension_numbers<[1], [0], [0], [1], [0, 0, 1, 1], [], []>} : vector<8x32xf32>, vector<32x128xf32>, vector<8x128xf32> -> vector<8x128xf32>
    %cst_29 = arith.constant dense<0.000000e+00> : vector<8x128xf32>
    %108 = tpu.matmul %89, %7, %cst_29 {dimension_numbers = #tpu.dot_dimension_numbers<[1], [0], [0], [1], [0, 0, 1, 1], [], []>} : vector<8x32xf32>, vector<32x128xf32>, vector<8x128xf32> -> vector<8x128xf32>
    %109 = arith.addf %107, %108 : vector<8x128xf32>
    %110 = arith.addf %109, %14 : vector<8x128xf32>
    %111 = arith.mulf %110, %2 : vector<8x128xf32>
    %112 = math.tanh %111 : vector<8x128xf32>
    %113 = arith.mulf %112, %2 : vector<8x128xf32>
    %114 = arith.addf %113, %5 : vector<8x128xf32>
    %115 = vector.extract_strided_slice %114 {offsets = [0, 0], sizes = [8, 32], strides = [1, 1]} : vector<8x128xf32> to vector<8x32xf32>
    %116 = vector.extract_strided_slice %114 {offsets = [0, 32], sizes = [8, 32], strides = [1, 1]} : vector<8x128xf32> to vector<8x32xf32>
    %117 = vector.extract_strided_slice %114 {offsets = [0, 64], sizes = [8, 32], strides = [1, 1]} : vector<8x128xf32> to vector<8x32xf32>
    %118 = vector.extract_strided_slice %114 {offsets = [0, 96], sizes = [8, 32], strides = [1, 1]} : vector<8x128xf32> to vector<8x32xf32>
    %119 = arith.mulf %116, %87 : vector<8x32xf32>
    %120 = arith.mulf %115, %117 : vector<8x32xf32>
    %121 = arith.addf %119, %120 : vector<8x32xf32>
    %122 = math.tanh %121 : vector<8x32xf32>
    %123 = arith.mulf %118, %122 : vector<8x32xf32>
    %124 = vector.extract_strided_slice %17 {offsets = [24, 0], sizes = [8, 128], strides = [1, 1]} : vector<64x128xf32> to vector<8x128xf32>
    %cst_30 = arith.constant dense<0.000000e+00> : vector<8x128xf32>
    %125 = tpu.matmul %106, %6, %cst_30 {dimension_numbers = #tpu.dot_dimension_numbers<[1], [0], [0], [1], [0, 0, 1, 1], [], []>} : vector<8x32xf32>, vector<32x128xf32>, vector<8x128xf32> -> vector<8x128xf32>
    %126 = arith.addf %124, %125 : vector<8x128xf32>
    %127 = arith.addf %126, %11 : vector<8x128xf32>
    %128 = arith.mulf %127, %2 : vector<8x128xf32>
    %129 = math.tanh %128 : vector<8x128xf32>
    %130 = arith.mulf %129, %2 : vector<8x128xf32>
    %131 = arith.addf %130, %5 : vector<8x128xf32>
    %132 = vector.extract_strided_slice %131 {offsets = [0, 0], sizes = [8, 32], strides = [1, 1]} : vector<8x128xf32> to vector<8x32xf32>
    %133 = vector.extract_strided_slice %131 {offsets = [0, 32], sizes = [8, 32], strides = [1, 1]} : vector<8x128xf32> to vector<8x32xf32>
    %134 = vector.extract_strided_slice %131 {offsets = [0, 64], sizes = [8, 32], strides = [1, 1]} : vector<8x128xf32> to vector<8x32xf32>
    %135 = vector.extract_strided_slice %131 {offsets = [0, 96], sizes = [8, 32], strides = [1, 1]} : vector<8x128xf32> to vector<8x32xf32>
    %136 = arith.mulf %133, %104 : vector<8x32xf32>
    %137 = arith.mulf %132, %134 : vector<8x32xf32>
    %138 = arith.addf %136, %137 : vector<8x32xf32>
    %139 = math.tanh %138 : vector<8x32xf32>
    %140 = arith.mulf %135, %139 : vector<8x32xf32>
    %cst_31 = arith.constant dense<0.000000e+00> : vector<8x128xf32>
    %141 = tpu.matmul %140, %8, %cst_31 {dimension_numbers = #tpu.dot_dimension_numbers<[1], [0], [0], [1], [0, 0, 1, 1], [], []>} : vector<8x32xf32>, vector<32x128xf32>, vector<8x128xf32> -> vector<8x128xf32>
    %cst_32 = arith.constant dense<0.000000e+00> : vector<8x128xf32>
    %142 = tpu.matmul %123, %7, %cst_32 {dimension_numbers = #tpu.dot_dimension_numbers<[1], [0], [0], [1], [0, 0, 1, 1], [], []>} : vector<8x32xf32>, vector<32x128xf32>, vector<8x128xf32> -> vector<8x128xf32>
    %143 = arith.addf %141, %142 : vector<8x128xf32>
    %144 = arith.addf %143, %14 : vector<8x128xf32>
    %145 = arith.mulf %144, %2 : vector<8x128xf32>
    %146 = math.tanh %145 : vector<8x128xf32>
    %147 = arith.mulf %146, %2 : vector<8x128xf32>
    %148 = arith.addf %147, %5 : vector<8x128xf32>
    %149 = vector.extract_strided_slice %148 {offsets = [0, 0], sizes = [8, 32], strides = [1, 1]} : vector<8x128xf32> to vector<8x32xf32>
    %150 = vector.extract_strided_slice %148 {offsets = [0, 32], sizes = [8, 32], strides = [1, 1]} : vector<8x128xf32> to vector<8x32xf32>
    %151 = vector.extract_strided_slice %148 {offsets = [0, 64], sizes = [8, 32], strides = [1, 1]} : vector<8x128xf32> to vector<8x32xf32>
    %152 = vector.extract_strided_slice %148 {offsets = [0, 96], sizes = [8, 32], strides = [1, 1]} : vector<8x128xf32> to vector<8x32xf32>
    %153 = arith.mulf %150, %121 : vector<8x32xf32>
    %154 = arith.mulf %149, %151 : vector<8x32xf32>
    %155 = arith.addf %153, %154 : vector<8x32xf32>
    %156 = math.tanh %155 : vector<8x32xf32>
    %157 = arith.mulf %152, %156 : vector<8x32xf32>
    %158 = vector.extract_strided_slice %17 {offsets = [32, 0], sizes = [8, 128], strides = [1, 1]} : vector<64x128xf32> to vector<8x128xf32>
    %cst_33 = arith.constant dense<0.000000e+00> : vector<8x128xf32>
    %159 = tpu.matmul %140, %6, %cst_33 {dimension_numbers = #tpu.dot_dimension_numbers<[1], [0], [0], [1], [0, 0, 1, 1], [], []>} : vector<8x32xf32>, vector<32x128xf32>, vector<8x128xf32> -> vector<8x128xf32>
    %160 = arith.addf %158, %159 : vector<8x128xf32>
    %161 = arith.addf %160, %11 : vector<8x128xf32>
    %162 = arith.mulf %161, %2 : vector<8x128xf32>
    %163 = math.tanh %162 : vector<8x128xf32>
    %164 = arith.mulf %163, %2 : vector<8x128xf32>
    %165 = arith.addf %164, %5 : vector<8x128xf32>
    %166 = vector.extract_strided_slice %165 {offsets = [0, 0], sizes = [8, 32], strides = [1, 1]} : vector<8x128xf32> to vector<8x32xf32>
    %167 = vector.extract_strided_slice %165 {offsets = [0, 32], sizes = [8, 32], strides = [1, 1]} : vector<8x128xf32> to vector<8x32xf32>
    %168 = vector.extract_strided_slice %165 {offsets = [0, 64], sizes = [8, 32], strides = [1, 1]} : vector<8x128xf32> to vector<8x32xf32>
    %169 = vector.extract_strided_slice %165 {offsets = [0, 96], sizes = [8, 32], strides = [1, 1]} : vector<8x128xf32> to vector<8x32xf32>
    %170 = arith.mulf %167, %138 : vector<8x32xf32>
    %171 = arith.mulf %166, %168 : vector<8x32xf32>
    %172 = arith.addf %170, %171 : vector<8x32xf32>
    %173 = math.tanh %172 : vector<8x32xf32>
    %174 = arith.mulf %169, %173 : vector<8x32xf32>
    %cst_34 = arith.constant dense<0.000000e+00> : vector<8x128xf32>
    %175 = tpu.matmul %174, %8, %cst_34 {dimension_numbers = #tpu.dot_dimension_numbers<[1], [0], [0], [1], [0, 0, 1, 1], [], []>} : vector<8x32xf32>, vector<32x128xf32>, vector<8x128xf32> -> vector<8x128xf32>
    %cst_35 = arith.constant dense<0.000000e+00> : vector<8x128xf32>
    %176 = tpu.matmul %157, %7, %cst_35 {dimension_numbers = #tpu.dot_dimension_numbers<[1], [0], [0], [1], [0, 0, 1, 1], [], []>} : vector<8x32xf32>, vector<32x128xf32>, vector<8x128xf32> -> vector<8x128xf32>
    %177 = arith.addf %175, %176 : vector<8x128xf32>
    %178 = arith.addf %177, %14 : vector<8x128xf32>
    %179 = arith.mulf %178, %2 : vector<8x128xf32>
    %180 = math.tanh %179 : vector<8x128xf32>
    %181 = arith.mulf %180, %2 : vector<8x128xf32>
    %182 = arith.addf %181, %5 : vector<8x128xf32>
    %183 = vector.extract_strided_slice %182 {offsets = [0, 0], sizes = [8, 32], strides = [1, 1]} : vector<8x128xf32> to vector<8x32xf32>
    %184 = vector.extract_strided_slice %182 {offsets = [0, 32], sizes = [8, 32], strides = [1, 1]} : vector<8x128xf32> to vector<8x32xf32>
    %185 = vector.extract_strided_slice %182 {offsets = [0, 64], sizes = [8, 32], strides = [1, 1]} : vector<8x128xf32> to vector<8x32xf32>
    %186 = vector.extract_strided_slice %182 {offsets = [0, 96], sizes = [8, 32], strides = [1, 1]} : vector<8x128xf32> to vector<8x32xf32>
    %187 = arith.mulf %184, %155 : vector<8x32xf32>
    %188 = arith.mulf %183, %185 : vector<8x32xf32>
    %189 = arith.addf %187, %188 : vector<8x32xf32>
    %190 = math.tanh %189 : vector<8x32xf32>
    %191 = arith.mulf %186, %190 : vector<8x32xf32>
    %192 = vector.extract_strided_slice %17 {offsets = [40, 0], sizes = [8, 128], strides = [1, 1]} : vector<64x128xf32> to vector<8x128xf32>
    %cst_36 = arith.constant dense<0.000000e+00> : vector<8x128xf32>
    %193 = tpu.matmul %174, %6, %cst_36 {dimension_numbers = #tpu.dot_dimension_numbers<[1], [0], [0], [1], [0, 0, 1, 1], [], []>} : vector<8x32xf32>, vector<32x128xf32>, vector<8x128xf32> -> vector<8x128xf32>
    %194 = arith.addf %192, %193 : vector<8x128xf32>
    %195 = arith.addf %194, %11 : vector<8x128xf32>
    %196 = arith.mulf %195, %2 : vector<8x128xf32>
    %197 = math.tanh %196 : vector<8x128xf32>
    %198 = arith.mulf %197, %2 : vector<8x128xf32>
    %199 = arith.addf %198, %5 : vector<8x128xf32>
    %200 = vector.extract_strided_slice %199 {offsets = [0, 0], sizes = [8, 32], strides = [1, 1]} : vector<8x128xf32> to vector<8x32xf32>
    %201 = vector.extract_strided_slice %199 {offsets = [0, 32], sizes = [8, 32], strides = [1, 1]} : vector<8x128xf32> to vector<8x32xf32>
    %202 = vector.extract_strided_slice %199 {offsets = [0, 64], sizes = [8, 32], strides = [1, 1]} : vector<8x128xf32> to vector<8x32xf32>
    %203 = vector.extract_strided_slice %199 {offsets = [0, 96], sizes = [8, 32], strides = [1, 1]} : vector<8x128xf32> to vector<8x32xf32>
    %204 = arith.mulf %201, %172 : vector<8x32xf32>
    %205 = arith.mulf %200, %202 : vector<8x32xf32>
    %206 = arith.addf %204, %205 : vector<8x32xf32>
    %207 = math.tanh %206 : vector<8x32xf32>
    %208 = arith.mulf %203, %207 : vector<8x32xf32>
    %cst_37 = arith.constant dense<0.000000e+00> : vector<8x128xf32>
    %209 = tpu.matmul %208, %8, %cst_37 {dimension_numbers = #tpu.dot_dimension_numbers<[1], [0], [0], [1], [0, 0, 1, 1], [], []>} : vector<8x32xf32>, vector<32x128xf32>, vector<8x128xf32> -> vector<8x128xf32>
    %cst_38 = arith.constant dense<0.000000e+00> : vector<8x128xf32>
    %210 = tpu.matmul %191, %7, %cst_38 {dimension_numbers = #tpu.dot_dimension_numbers<[1], [0], [0], [1], [0, 0, 1, 1], [], []>} : vector<8x32xf32>, vector<32x128xf32>, vector<8x128xf32> -> vector<8x128xf32>
    %211 = arith.addf %209, %210 : vector<8x128xf32>
    %212 = arith.addf %211, %14 : vector<8x128xf32>
    %213 = arith.mulf %212, %2 : vector<8x128xf32>
    %214 = math.tanh %213 : vector<8x128xf32>
    %215 = arith.mulf %214, %2 : vector<8x128xf32>
    %216 = arith.addf %215, %5 : vector<8x128xf32>
    %217 = vector.extract_strided_slice %216 {offsets = [0, 0], sizes = [8, 32], strides = [1, 1]} : vector<8x128xf32> to vector<8x32xf32>
    %218 = vector.extract_strided_slice %216 {offsets = [0, 32], sizes = [8, 32], strides = [1, 1]} : vector<8x128xf32> to vector<8x32xf32>
    %219 = vector.extract_strided_slice %216 {offsets = [0, 64], sizes = [8, 32], strides = [1, 1]} : vector<8x128xf32> to vector<8x32xf32>
    %220 = vector.extract_strided_slice %216 {offsets = [0, 96], sizes = [8, 32], strides = [1, 1]} : vector<8x128xf32> to vector<8x32xf32>
    %221 = arith.mulf %218, %189 : vector<8x32xf32>
    %222 = arith.mulf %217, %219 : vector<8x32xf32>
    %223 = arith.addf %221, %222 : vector<8x32xf32>
    %224 = math.tanh %223 : vector<8x32xf32>
    %225 = arith.mulf %220, %224 : vector<8x32xf32>
    %226 = vector.extract_strided_slice %17 {offsets = [48, 0], sizes = [8, 128], strides = [1, 1]} : vector<64x128xf32> to vector<8x128xf32>
    %cst_39 = arith.constant dense<0.000000e+00> : vector<8x128xf32>
    %227 = tpu.matmul %208, %6, %cst_39 {dimension_numbers = #tpu.dot_dimension_numbers<[1], [0], [0], [1], [0, 0, 1, 1], [], []>} : vector<8x32xf32>, vector<32x128xf32>, vector<8x128xf32> -> vector<8x128xf32>
    %228 = arith.addf %226, %227 : vector<8x128xf32>
    %229 = arith.addf %228, %11 : vector<8x128xf32>
    %230 = arith.mulf %229, %2 : vector<8x128xf32>
    %231 = math.tanh %230 : vector<8x128xf32>
    %232 = arith.mulf %231, %2 : vector<8x128xf32>
    %233 = arith.addf %232, %5 : vector<8x128xf32>
    %234 = vector.extract_strided_slice %233 {offsets = [0, 0], sizes = [8, 32], strides = [1, 1]} : vector<8x128xf32> to vector<8x32xf32>
    %235 = vector.extract_strided_slice %233 {offsets = [0, 32], sizes = [8, 32], strides = [1, 1]} : vector<8x128xf32> to vector<8x32xf32>
    %236 = vector.extract_strided_slice %233 {offsets = [0, 64], sizes = [8, 32], strides = [1, 1]} : vector<8x128xf32> to vector<8x32xf32>
    %237 = vector.extract_strided_slice %233 {offsets = [0, 96], sizes = [8, 32], strides = [1, 1]} : vector<8x128xf32> to vector<8x32xf32>
    %238 = arith.mulf %235, %206 : vector<8x32xf32>
    %239 = arith.mulf %234, %236 : vector<8x32xf32>
    %240 = arith.addf %238, %239 : vector<8x32xf32>
    %241 = math.tanh %240 : vector<8x32xf32>
    %242 = arith.mulf %237, %241 : vector<8x32xf32>
    %cst_40 = arith.constant dense<0.000000e+00> : vector<8x128xf32>
    %243 = tpu.matmul %242, %8, %cst_40 {dimension_numbers = #tpu.dot_dimension_numbers<[1], [0], [0], [1], [0, 0, 1, 1], [], []>} : vector<8x32xf32>, vector<32x128xf32>, vector<8x128xf32> -> vector<8x128xf32>
    %cst_41 = arith.constant dense<0.000000e+00> : vector<8x128xf32>
    %244 = tpu.matmul %225, %7, %cst_41 {dimension_numbers = #tpu.dot_dimension_numbers<[1], [0], [0], [1], [0, 0, 1, 1], [], []>} : vector<8x32xf32>, vector<32x128xf32>, vector<8x128xf32> -> vector<8x128xf32>
    %245 = arith.addf %243, %244 : vector<8x128xf32>
    %246 = arith.addf %245, %14 : vector<8x128xf32>
    %247 = arith.mulf %246, %2 : vector<8x128xf32>
    %248 = math.tanh %247 : vector<8x128xf32>
    %249 = arith.mulf %248, %2 : vector<8x128xf32>
    %250 = arith.addf %249, %5 : vector<8x128xf32>
    %251 = vector.extract_strided_slice %250 {offsets = [0, 0], sizes = [8, 32], strides = [1, 1]} : vector<8x128xf32> to vector<8x32xf32>
    %252 = vector.extract_strided_slice %250 {offsets = [0, 32], sizes = [8, 32], strides = [1, 1]} : vector<8x128xf32> to vector<8x32xf32>
    %253 = vector.extract_strided_slice %250 {offsets = [0, 64], sizes = [8, 32], strides = [1, 1]} : vector<8x128xf32> to vector<8x32xf32>
    %254 = vector.extract_strided_slice %250 {offsets = [0, 96], sizes = [8, 32], strides = [1, 1]} : vector<8x128xf32> to vector<8x32xf32>
    %255 = arith.mulf %252, %223 : vector<8x32xf32>
    %256 = arith.mulf %251, %253 : vector<8x32xf32>
    %257 = arith.addf %255, %256 : vector<8x32xf32>
    %258 = math.tanh %257 : vector<8x32xf32>
    %259 = arith.mulf %254, %258 : vector<8x32xf32>
    %260 = vector.extract_strided_slice %17 {offsets = [56, 0], sizes = [8, 128], strides = [1, 1]} : vector<64x128xf32> to vector<8x128xf32>
    %cst_42 = arith.constant dense<0.000000e+00> : vector<8x128xf32>
    %261 = tpu.matmul %242, %6, %cst_42 {dimension_numbers = #tpu.dot_dimension_numbers<[1], [0], [0], [1], [0, 0, 1, 1], [], []>} : vector<8x32xf32>, vector<32x128xf32>, vector<8x128xf32> -> vector<8x128xf32>
    %262 = arith.addf %260, %261 : vector<8x128xf32>
    %263 = arith.addf %262, %11 : vector<8x128xf32>
    %264 = arith.mulf %263, %2 : vector<8x128xf32>
    %265 = math.tanh %264 : vector<8x128xf32>
    %266 = arith.mulf %265, %2 : vector<8x128xf32>
    %267 = arith.addf %266, %5 : vector<8x128xf32>
    %268 = vector.extract_strided_slice %267 {offsets = [0, 0], sizes = [8, 32], strides = [1, 1]} : vector<8x128xf32> to vector<8x32xf32>
    %269 = vector.extract_strided_slice %267 {offsets = [0, 32], sizes = [8, 32], strides = [1, 1]} : vector<8x128xf32> to vector<8x32xf32>
    %270 = vector.extract_strided_slice %267 {offsets = [0, 64], sizes = [8, 32], strides = [1, 1]} : vector<8x128xf32> to vector<8x32xf32>
    %271 = vector.extract_strided_slice %267 {offsets = [0, 96], sizes = [8, 32], strides = [1, 1]} : vector<8x128xf32> to vector<8x32xf32>
    %272 = arith.mulf %269, %240 : vector<8x32xf32>
    %273 = arith.mulf %268, %270 : vector<8x32xf32>
    %274 = arith.addf %272, %273 : vector<8x32xf32>
    %275 = math.tanh %274 : vector<8x32xf32>
    %276 = arith.mulf %271, %275 : vector<8x32xf32>
    %cst_43 = arith.constant dense<0.000000e+00> : vector<8x128xf32>
    %277 = tpu.matmul %276, %8, %cst_43 {dimension_numbers = #tpu.dot_dimension_numbers<[1], [0], [0], [1], [0, 0, 1, 1], [], []>} : vector<8x32xf32>, vector<32x128xf32>, vector<8x128xf32> -> vector<8x128xf32>
    %cst_44 = arith.constant dense<0.000000e+00> : vector<8x128xf32>
    %278 = tpu.matmul %259, %7, %cst_44 {dimension_numbers = #tpu.dot_dimension_numbers<[1], [0], [0], [1], [0, 0, 1, 1], [], []>} : vector<8x32xf32>, vector<32x128xf32>, vector<8x128xf32> -> vector<8x128xf32>
    %279 = arith.addf %277, %278 : vector<8x128xf32>
    %280 = arith.addf %279, %14 : vector<8x128xf32>
    %281 = arith.mulf %280, %2 : vector<8x128xf32>
    %282 = math.tanh %281 : vector<8x128xf32>
    %283 = arith.mulf %282, %2 : vector<8x128xf32>
    %284 = arith.addf %283, %5 : vector<8x128xf32>
    %285 = vector.extract_strided_slice %284 {offsets = [0, 0], sizes = [8, 32], strides = [1, 1]} : vector<8x128xf32> to vector<8x32xf32>
    %286 = vector.extract_strided_slice %284 {offsets = [0, 32], sizes = [8, 32], strides = [1, 1]} : vector<8x128xf32> to vector<8x32xf32>
    %287 = vector.extract_strided_slice %284 {offsets = [0, 64], sizes = [8, 32], strides = [1, 1]} : vector<8x128xf32> to vector<8x32xf32>
    %288 = vector.extract_strided_slice %284 {offsets = [0, 96], sizes = [8, 32], strides = [1, 1]} : vector<8x128xf32> to vector<8x32xf32>
    %289 = arith.mulf %286, %257 : vector<8x32xf32>
    %290 = arith.mulf %285, %287 : vector<8x32xf32>
    %291 = arith.addf %289, %290 : vector<8x32xf32>
    %292 = math.tanh %291 : vector<8x32xf32>
    %293 = arith.mulf %288, %292 : vector<8x32xf32>
    %c0_45 = arith.constant 0 : index
    %c0_46 = arith.constant 0 : index
    %294 = vector.load %arg1[%c0_45, %c0_46] : memref<8x4xf32, #tpu.memory_space<vmem>>, vector<8x4xf32>
    %c0_47 = arith.constant 0 : index
    %c0_48 = arith.constant 0 : index
    %295 = vector.load %arg10[%c0_47, %c0_48] : memref<4x32xf32, #tpu.memory_space<vmem>>, vector<4x32xf32>
    %cst_49 = arith.constant dense<0.000000e+00> : vector<8x32xf32>
    %296 = tpu.matmul %294, %295, %cst_49 {dimension_numbers = #tpu.dot_dimension_numbers<[1], [0], [0], [1], [0, 0, 1, 1], [], []>} : vector<8x4xf32>, vector<4x32xf32>, vector<8x32xf32> -> vector<8x32xf32>
    %c0_50 = arith.constant 0 : index
    %c0_51 = arith.constant 0 : index
    %297 = vector.load %arg11[%c0_50, %c0_51] : memref<1x32xf32, #tpu.memory_space<vmem>>, vector<1x32xf32>
    %298 = vector.broadcast %297 : vector<1x32xf32> to vector<8x32xf32>
    %299 = arith.addf %296, %298 : vector<8x32xf32>
    %cst_52 = arith.constant 0.000000e+00 : f32
    %300 = vector.broadcast %cst_52 : f32 to vector<8x32xf32>
    %301 = arith.maximumf %299, %300 : vector<8x32xf32>
    %c0_53 = arith.constant 0 : index
    %c0_54 = arith.constant 0 : index
    %302 = vector.load %arg12[%c0_53, %c0_54] : memref<32x32xf32, #tpu.memory_space<vmem>>, vector<32x32xf32>
    %cst_55 = arith.constant dense<0.000000e+00> : vector<8x32xf32>
    %303 = tpu.matmul %301, %302, %cst_55 {dimension_numbers = #tpu.dot_dimension_numbers<[1], [0], [0], [1], [0, 0, 1, 1], [], []>} : vector<8x32xf32>, vector<32x32xf32>, vector<8x32xf32> -> vector<8x32xf32>
    %c0_56 = arith.constant 0 : index
    %c0_57 = arith.constant 0 : index
    %304 = vector.load %arg13[%c0_56, %c0_57] : memref<1x32xf32, #tpu.memory_space<vmem>>, vector<1x32xf32>
    %305 = vector.broadcast %304 : vector<1x32xf32> to vector<8x32xf32>
    %306 = arith.addf %303, %305 : vector<8x32xf32>
    %cst_58 = arith.constant 0.000000e+00 : f32
    %307 = vector.broadcast %cst_58 : f32 to vector<8x32xf32>
    %308 = arith.maximumf %306, %307 : vector<8x32xf32>
    %309 = math.tanh %308 : vector<8x32xf32>
    %c0_59 = arith.constant 0 : index
    %c0_60 = arith.constant 0 : index
    %310 = vector.load %arg14[%c0_59, %c0_60] : memref<32x64xf32, #tpu.memory_space<vmem>>, vector<32x64xf32>
    %cst_61 = arith.constant dense<0.000000e+00> : vector<8x64xf32>
    %311 = tpu.matmul %293, %310, %cst_61 {dimension_numbers = #tpu.dot_dimension_numbers<[1], [0], [0], [1], [0, 0, 1, 1], [], []>} : vector<8x32xf32>, vector<32x64xf32>, vector<8x64xf32> -> vector<8x64xf32>
    %c0_62 = arith.constant 0 : index
    %c0_63 = arith.constant 0 : index
    %312 = vector.load %arg15[%c0_62, %c0_63] : memref<32x64xf32, #tpu.memory_space<vmem>>, vector<32x64xf32>
    %cst_64 = arith.constant dense<0.000000e+00> : vector<8x64xf32>
    %313 = tpu.matmul %309, %312, %cst_64 {dimension_numbers = #tpu.dot_dimension_numbers<[1], [0], [0], [1], [0, 0, 1, 1], [], []>} : vector<8x32xf32>, vector<32x64xf32>, vector<8x64xf32> -> vector<8x64xf32>
    %314 = arith.addf %311, %313 : vector<8x64xf32>
    %c0_65 = arith.constant 0 : index
    %c0_66 = arith.constant 0 : index
    %315 = vector.load %arg16[%c0_65, %c0_66] : memref<1x64xf32, #tpu.memory_space<vmem>>, vector<1x64xf32>
    %316 = vector.broadcast %315 : vector<1x64xf32> to vector<8x64xf32>
    %317 = arith.addf %314, %316 : vector<8x64xf32>
    %cst_67 = arith.constant 0.000000e+00 : f32
    %318 = vector.broadcast %cst_67 : f32 to vector<8x64xf32>
    %319 = arith.maximumf %317, %318 : vector<8x64xf32>
    %c0_68 = arith.constant 0 : index
    %c0_69 = arith.constant 0 : index
    %320 = vector.load %arg17[%c0_68, %c0_69] : memref<64x64xf32, #tpu.memory_space<vmem>>, vector<64x64xf32>
    %cst_70 = arith.constant dense<0.000000e+00> : vector<8x64xf32>
    %321 = tpu.matmul %319, %320, %cst_70 {dimension_numbers = #tpu.dot_dimension_numbers<[1], [0], [0], [1], [0, 0, 1, 1], [], []>} : vector<8x64xf32>, vector<64x64xf32>, vector<8x64xf32> -> vector<8x64xf32>
    %c0_71 = arith.constant 0 : index
    %c0_72 = arith.constant 0 : index
    %322 = vector.load %arg18[%c0_71, %c0_72] : memref<1x64xf32, #tpu.memory_space<vmem>>, vector<1x64xf32>
    %323 = vector.broadcast %322 : vector<1x64xf32> to vector<8x64xf32>
    %324 = arith.addf %321, %323 : vector<8x64xf32>
    %cst_73 = arith.constant 0.000000e+00 : f32
    %325 = vector.broadcast %cst_73 : f32 to vector<8x64xf32>
    %326 = arith.maximumf %324, %325 : vector<8x64xf32>
    %c0_74 = arith.constant 0 : index
    %c0_75 = arith.constant 0 : index
    %327 = vector.load %arg19[%c0_74, %c0_75] : memref<1x64xf32, #tpu.memory_space<vmem>>, vector<1x64xf32>
    %328 = vector.broadcast %327 : vector<1x64xf32> to vector<8x64xf32>
    %329 = arith.mulf %326, %328 : vector<8x64xf32>
    %cst_76 = arith.constant dense<0.000000e+00> : vector<8xf32>
    %330 = vector.multi_reduction <add>, %329, %cst_76 [1] : vector<8x64xf32> to vector<8xf32>
    %331 = vector.shape_cast %330 : vector<8xf32> to vector<8x1xf32>
    %c0_77 = arith.constant 0 : index
    %c0_78 = arith.constant 0 : index
    %332 = vector.load %arg20[%c0_77, %c0_78] : memref<1x1xf32, #tpu.memory_space<vmem>>, vector<1x1xf32>
    %333 = vector.broadcast %332 : vector<1x1xf32> to vector<8x1xf32>
    %334 = arith.addf %331, %333 : vector<8x1xf32>
    %335 = math.tanh %334 : vector<8x1xf32>
    %c0_79 = arith.constant 0 : index
    %c0_80 = arith.constant 0 : index
    %336 = vector.load %arg21[%c0_79, %c0_80] : memref<8x1xf32, #tpu.memory_space<vmem>>, vector<8x1xf32>
    tpu.vector_store %arg21[%c0_79, %c0_80], %335 {strides = array<i32>} : memref<8x1xf32, #tpu.memory_space<vmem>>, vector<8x1xf32>,
    return
  }
}

</mosaic_0001>

<llo_original>
// kernel: critic_forward.1
$region0: #{critic_forward.1}
  #allocation0 [shape = 'u32[]', space=smem, size = 0x4, offset = 0x4, fixed_abs, tag = 'smem constant byte address 0x4 - core index']
  #allocation1 [shape = 'u32[144,128]{1,0:T(1,128)}', space=vmem, size = 0x12000, scoped, tag = 'internal scratch']
  #allocation2 [shape = 'f32[1,1]{1,0:T(1,128)S(1)}', space=vmem, size = 0x200, scoped, tag = 'scoped memory for critic_forward.1']
  %s0 = inlined_call_operand.vmem [shape: f32[64,16], index: 0, kind: input, shape index: {}]
  %s1 = inlined_call_operand.vmem [shape: f32[8,4], index: 1, kind: input, shape index: {}]
  %s2 = inlined_call_operand.hbm [shape: f32[1,128], index: 2, kind: input, shape index: {}]
  %s3 = inlined_call_operand.hbm [shape: f32[1,128], index: 3, kind: input, shape index: {}]
  %s4 = inlined_call_operand.hbm [shape: f32[16,128], index: 4, kind: input, shape index: {}]
  %s5 = inlined_call_operand.vmem [shape: f32[32,128], index: 5, kind: input, shape index: {}]
  %s6 = inlined_call_operand.hbm [shape: f32[1,128], index: 6, kind: input, shape index: {}]
  %s7 = inlined_call_operand.vmem [shape: f32[32,128], index: 7, kind: input, shape index: {}]
  %s8 = inlined_call_operand.vmem [shape: f32[32,128], index: 8, kind: input, shape index: {}]
  %s9 = inlined_call_operand.hbm [shape: f32[1,128], index: 9, kind: input, shape index: {}]
  %s10 = inlined_call_operand.hbm [shape: f32[4,32], index: 10, kind: input, shape index: {}]
  %s11 = inlined_call_operand.hbm [shape: f32[1,32], index: 11, kind: input, shape index: {}]
  %s12 = inlined_call_operand.vmem [shape: f32[32,32], index: 12, kind: input, shape index: {}]
  %s13 = inlined_call_operand.hbm [shape: f32[1,32], index: 13, kind: input, shape index: {}]
  %s14 = inlined_call_operand.hbm [shape: f32[32,64], index: 14, kind: input, shape index: {}]
  %s15 = inlined_call_operand.hbm [shape: f32[32,64], index: 15, kind: input, shape index: {}]
  %s16 = inlined_call_operand.hbm [shape: f32[1,64], index: 16, kind: input, shape index: {}]
  %s17 = inlined_call_operand.vmem [shape: f32[64,64], index: 17, kind: input, shape index: {}]
  %s18 = inlined_call_operand.hbm [shape: f32[1,64], index: 18, kind: input, shape index: {}]
  %s19 = inlined_call_operand.hbm [shape: f32[1,64], index: 19, kind: input, shape index: {}]
  %s20 = inlined_call_operand.<no memory space> [shape: f32[1,1], index: 20, kind: input, shape index: {}]
  %s21 = inlined_call_operand.vmem [shape: f32[8,1], index: 21, kind: output, shape index: {}]
  %s22 = sld [smem:[#allocation0]]
  $region146: #{critic_forward.1} parent=0
    _
  %s24 = ssub.s32 1, %s22
  %s25 = scalar_select 0, %s24, %s22
  %v26 = vstv %s20
  %27 = vst [vmem:[#allocation2] sm:$0x1] %v26
  $region1: #{critic_forward.1} parent=0
    #allocation3 [shape = 'u8[512]{0}', space=vmem, size = 0x400, scoped, tag = 'input window, operand 2, single buffered']
    #allocation4 [shape = 's32[1]{0}', space=sflag, size = 0x4, scoped, tag = 'scoped memory for critic_forward.1']
    #allocation5 [shape = 'u8[512]{0}', space=vmem, size = 0x400, scoped, tag = 'input window, operand 3, single buffered']
    #allocation6 [shape = 's32[1]{0}', space=sflag, size = 0x4, scoped, tag = 'scoped memory for critic_forward.1']
    #allocation7 [shape = 'u8[8192]{0}', space=vmem, size = 0x2000, scoped, tag = 'input window, operand 4, single buffered']
    #allocation8 [shape = 'u8[512]{0}', space=vmem, size = 0x400, scoped, tag = 'input window, operand 6, single buffered']
    #allocation9 [shape = 's32[1]{0}', space=sflag, size = 0x4, scoped, tag = 'scoped memory for critic_forward.1']
    #allocation10 [shape = 'u8[512]{0}', space=vmem, size = 0x400, scoped, tag = 'input window, operand 9, single buffered']
    #allocation11 [shape = 'u8[2048]{0}', space=vmem, size = 0x800, scoped, tag = 'input window, operand 10, single buffered']
    #allocation12 [shape = 's32[1]{0}', space=sflag, size = 0x4, scoped, tag = 'scoped memory for critic_forward.1']
    #allocation13 [shape = 'u8[512]{0}', space=vmem, size = 0x400, scoped, tag = 'input window, operand 11, single buffered']
    #allocation14 [shape = 'u8[512]{0}', space=vmem, size = 0x400, scoped, tag = 'input window, operand 13, single buffered']
    #allocation15 [shape = 's32[1]{0}', space=sflag, size = 0x4, scoped, tag = 'scoped memory for critic_forward.1']
    #allocation16 [shape = 'u8[16384]{0}', space=vmem, size = 0x4000, scoped, tag = 'input window, operand 14, single buffered']
    #allocation17 [shape = 'u8[16384]{0}', space=vmem, size = 0x4000, scoped, tag = 'input window, operand 15, single buffered']
    #allocation18 [shape = 's32[1]{0}', space=sflag, size = 0x4, scoped, tag = 'scoped memory for critic_forward.1']
    #allocation19 [shape = 'u8[512]{0}', space=vmem, size = 0x400, scoped, tag = 'input window, operand 16, single buffered']
    #allocation20 [shape = 'u8[512]{0}', space=vmem, size = 0x400, scoped, tag = 'input window, operand 18, single buffered']
    #allocation21 [shape = 's32[1]{0}', space=sflag, size = 0x4, scoped, tag = 'scoped memory for critic_forward.1']
    #allocation22 [shape = 'u8[512]{0}', space=vmem, size = 0x400, scoped, tag = 'input window, operand 19, single buffered']
    %28 = vsyncpa [#allocation4], 0
    %29 = vsyncpa [#allocation6], 0
    %30 = vsyncpa [#allocation9], 0
    %31 = vsyncpa [#allocation12], 0
    %32 = vsyncpa [#allocation15], 0
    %33 = vsyncpa [#allocation18], 0
    %34 = vsyncpa [#allocation21], 0
    // Predicated region
    $region2: #{critic_forward.1} parent=1 // pred_check
      _
    $region3: #{critic_forward.1} parent=1 // pred_check_branch
      %36 = sbr.rel (0) target = $region5
    $region4: #{critic_forward.1} parent=1 // pred_region
      _
    $region5: #{critic_forward.1} parent=1 // pred_fallthru
      _
    // Predicated region
    $region6: #{critic_forward.1} parent=1 // pred_check
      _
    $region7: #{critic_forward.1} parent=1 // pred_check_branch
      %38 = sbr.rel (0) target = $region9
    $region8: #{critic_forward.1} parent=1 // pred_region
      _
    $region9: #{critic_forward.1} parent=1 // pred_fallthru
      _
    // Predicated region
    $region10: #{critic_forward.1} parent=1 // pred_check
      _
    $region11: #{critic_forward.1} parent=1 // pred_check_branch
      %40 = sbr.rel (0) target = $region13
    $region12: #{critic_forward.1} parent=1 // pred_region
      %s42 = ssub.s32 16, 16
      %43 = vsyncadd [#allocation4], %s42
      %s45 = sshll.u32 [#allocation3], 4
      %s46 = int_to_ptr.vmem [resolvable:$true] %s45
      %48 = dma.hbm_to_vmem [thread:$0]  %s2, 16, %s46, [#allocation4]
    $region13: #{critic_forward.1} parent=1 // pred_fallthru
      _
    // Predicated region
    $region14: #{critic_forward.1} parent=1 // pred_check
      _
    $region15: #{critic_forward.1} parent=1 // pred_check_branch
      %50 = sbr.rel (0) target = $region17
    $region16: #{critic_forward.1} parent=1 // pred_region
      %s52 = ssub.s32 16, 16
      %53 = vsyncadd [#allocation6], %s52
      %s55 = sshll.u32 [#allocation5], 4
      %s56 = int_to_ptr.vmem [resolvable:$true] %s55
      %58 = dma.hbm_to_vmem [thread:$0]  %s3, 16, %s56, [#allocation6]
    $region17: #{critic_forward.1} parent=1 // pred_fallthru
      _
    // Predicated region
    $region18: #{critic_forward.1} parent=1 // pred_check
      _
    $region19: #{critic_forward.1} parent=1 // pred_check_branch
      %60 = sbr.rel (0) target = $region21
    $region20: #{critic_forward.1} parent=1 // pred_region
      %s62 = ssub.s32 256, 256
      %63 = vsyncadd [#allocation6], %s62
      %s64 = sshll.u32 [#allocation7], 4
      %s65 = int_to_ptr.vmem [resolvable:$true] %s64
      %70 = dma.hbm_to_vmem [thread:$0]  %s4, 256, %s65, [#allocation6], 128, 128, 8
    $region21: #{critic_forward.1} parent=1 // pred_fallthru
      _
    // Predicated region
    $region22: #{critic_forward.1} parent=1 // pred_check
      _
    $region23: #{critic_forward.1} parent=1 // pred_check_branch
      %72 = sbr.rel (0) target = $region25
    $region24: #{critic_forward.1} parent=1 // pred_region
      _
    $region25: #{critic_forward.1} parent=1 // pred_fallthru
      _
    // Predicated region
    $region26: #{critic_forward.1} parent=1 // pred_check
      _
    $region27: #{critic_forward.1} parent=1 // pred_check_branch
      %74 = sbr.rel (0) target = $region29
    $region28: #{critic_forward.1} parent=1 // pred_region
      %s76 = ssub.s32 16, 16
      %77 = vsyncadd [#allocation9], %s76
      %s79 = sshll.u32 [#allocation8], 4
      %s80 = int_to_ptr.vmem [resolvable:$true] %s79
      %82 = dma.hbm_to_vmem [thread:$0]  %s6, 16, %s80, [#allocation9]
    $region29: #{critic_forward.1} parent=1 // pred_fallthru
      _
    // Predicated region
    $region30: #{critic_forward.1} parent=1 // pred_check
      _
    $region31: #{critic_forward.1} parent=1 // pred_check_branch
      %84 = sbr.rel (0) target = $region33
    $region32: #{critic_forward.1} parent=1 // pred_region
      _
    $region33: #{critic_forward.1} parent=1 // pred_fallthru
      _
    // Predicated region
    $region34: #{critic_forward.1} parent=1 // pred_check
      _
    $region35: #{critic_forward.1} parent=1 // pred_check_branch
      %86 = sbr.rel (0) target = $region37
    $region36: #{critic_forward.1} parent=1 // pred_region
      _
    $region37: #{critic_forward.1} parent=1 // pred_fallthru
      _
    // Predicated region
    $region38: #{critic_forward.1} parent=1 // pred_check
      _
    $region39: #{critic_forward.1} parent=1 // pred_check_branch
      %88 = sbr.rel (0) target = $region41
    $region40: #{critic_forward.1} parent=1 // pred_region
      %s90 = ssub.s32 16, 16
      %91 = vsyncadd [#allocation9], %s90
      %s93 = sshll.u32 [#allocation10], 4
      %s94 = int_to_ptr.vmem [resolvable:$true] %s93
      %96 = dma.hbm_to_vmem [thread:$0]  %s9, 16, %s94, [#allocation9]
    $region41: #{critic_forward.1} parent=1 // pred_fallthru
      _
    // Predicated region
    $region42: #{critic_forward.1} parent=1 // pred_check
      _
    $region43: #{critic_forward.1} parent=1 // pred_check_branch
      %98 = sbr.rel (0) target = $region45
    $region44: #{critic_forward.1} parent=1 // pred_region
      %s100 = ssub.s32 64, 64
      %101 = vsyncadd [#allocation12], %s100
      %s103 = sshll.u32 [#allocation11], 4
      %s104 = int_to_ptr.vmem [resolvable:$true] %s103
      %106 = dma.hbm_to_vmem [thread:$0]  %s10, 64, %s104, [#allocation12]
    $region45: #{critic_forward.1} parent=1 // pred_fallthru
      _
    // Predicated region
    $region46: #{critic_forward.1} parent=1 // pred_check
      _
    $region47: #{critic_forward.1} parent=1 // pred_check_branch
      %108 = sbr.rel (0) target = $region49
    $region48: #{critic_forward.1} parent=1 // pred_region
      %s110 = ssub.s32 16, 16
      %111 = vsyncadd [#allocation12], %s110
      %s113 = sshll.u32 [#allocation13], 4
      %s114 = int_to_ptr.vmem [resolvable:$true] %s113
      %116 = dma.hbm_to_vmem [thread:$0]  %s11, 16, %s114, [#allocation12]
    $region49: #{critic_forward.1} parent=1 // pred_fallthru
      _
    // Predicated region
    $region50: #{critic_forward.1} parent=1 // pred_check
      _
    $region51: #{critic_forward.1} parent=1 // pred_check_branch
      %118 = sbr.rel (0) target = $region53
    $region52: #{critic_forward.1} parent=1 // pred_region
      _
    $region53: #{critic_forward.1} parent=1 // pred_fallthru
      _
    // Predicated region
    $region54: #{critic_forward.1} parent=1 // pred_check
      _
    $region55: #{critic_forward.1} parent=1 // pred_check_branch
      %120 = sbr.rel (0) target = $region57
    $region56: #{critic_forward.1} parent=1 // pred_region
      %s122 = ssub.s32 16, 16
      %123 = vsyncadd [#allocation15], %s122
      %s125 = sshll.u32 [#allocation14], 4
      %s126 = int_to_ptr.vmem [resolvable:$true] %s125
      %128 = dma.hbm_to_vmem [thread:$0]  %s13, 16, %s126, [#allocation15]
    $region57: #{critic_forward.1} parent=1 // pred_fallthru
      _
    // Predicated region
    $region58: #{critic_forward.1} parent=1 // pred_check
      _
    $region59: #{critic_forward.1} parent=1 // pred_check_branch
      %130 = sbr.rel (0) target = $region61
    $region60: #{critic_forward.1} parent=1 // pred_region
      %s132 = ssub.s32 512, 512
      %133 = vsyncadd [#allocation15], %s132
      %s134 = sshll.u32 [#allocation16], 4
      %s135 = int_to_ptr.vmem [resolvable:$true] %s134
      %140 = dma.hbm_to_vmem [thread:$0]  %s14, 512, %s135, [#allocation15], 128, 128, 8
    $region61: #{critic_forward.1} parent=1 // pred_fallthru
      _
    // Predicated region
    $region62: #{critic_forward.1} parent=1 // pred_check
      _
    $region63: #{critic_forward.1} parent=1 // pred_check_branch
      %142 = sbr.rel (0) target = $region65
    $region64: #{critic_forward.1} parent=1 // pred_region
      %s144 = ssub.s32 512, 512
      %145 = vsyncadd [#allocation18], %s144
      %s146 = sshll.u32 [#allocation17], 4
      %s147 = int_to_ptr.vmem [resolvable:$true] %s146
      %152 = dma.hbm_to_vmem [thread:$0]  %s15, 512, %s147, [#allocation18], 128, 128, 8
    $region65: #{critic_forward.1} parent=1 // pred_fallthru
      _
    // Predicated region
    $region66: #{critic_forward.1} parent=1 // pred_check
      _
    $region67: #{critic_forward.1} parent=1 // pred_check_branch
      %154 = sbr.rel (0) target = $region69
    $region68: #{critic_forward.1} parent=1 // pred_region
      %s156 = ssub.s32 16, 16
      %157 = vsyncadd [#allocation18], %s156
      %s159 = sshll.u32 [#allocation19], 4
      %s160 = int_to_ptr.vmem [resolvable:$true] %s159
      %162 = dma.hbm_to_vmem [thread:$0]  %s16, 16, %s160, [#allocation18]
    $region69: #{critic_forward.1} parent=1 // pred_fallthru
      _
    // Predicated region
    $region70: #{critic_forward.1} parent=1 // pred_check
      _
    $region71: #{critic_forward.1} parent=1 // pred_check_branch
      %164 = sbr.rel (0) target = $region73
    $region72: #{critic_forward.1} parent=1 // pred_region
      _
    $region73: #{critic_forward.1} parent=1 // pred_fallthru
      _
    // Predicated region
    $region74: #{critic_forward.1} parent=1 // pred_check
      _
    $region75: #{critic_forward.1} parent=1 // pred_check_branch
      %166 = sbr.rel (0) target = $region77
    $region76: #{critic_forward.1} parent=1 // pred_region
      %s168 = ssub.s32 16, 16
      %169 = vsyncadd [#allocation21], %s168
      %s171 = sshll.u32 [#allocation20], 4
      %s172 = int_to_ptr.vmem [resolvable:$true] %s171
      %174 = dma.hbm_to_vmem [thread:$0]  %s18, 16, %s172, [#allocation21]
    $region77: #{critic_forward.1} parent=1 // pred_fallthru
      _
    // Predicated region
    $region78: #{critic_forward.1} parent=1 // pred_check
      _
    $region79: #{critic_forward.1} parent=1 // pred_check_branch
      %176 = sbr.rel (0) target = $region81
    $region80: #{critic_forward.1} parent=1 // pred_region
      %s178 = ssub.s32 16, 16
      %179 = vsyncadd [#allocation21], %s178
      %s181 = sshll.u32 [#allocation22], 4
      %s182 = int_to_ptr.vmem [resolvable:$true] %s181
      %184 = dma.hbm_to_vmem [thread:$0]  %s19, 16, %s182, [#allocation21]
    $region81: #{critic_forward.1} parent=1 // pred_fallthru
      _
    // Predicated region
    $region82: #{critic_forward.1} parent=1 // pred_check
      _
    $region83: #{critic_forward.1} parent=1 // pred_check_branch
      %186 = sbr.rel (0) target = $region85
    $region84: #{critic_forward.1} parent=1 // pred_region
      _
    $region85: #{critic_forward.1} parent=1 // pred_fallthru
      _
    // Predicated region
    $region86: #{critic_forward.1} parent=1 // pred_check
      _
    $region87: #{critic_forward.1} parent=1 // pred_check_branch
      %188 = sbr.rel (0) target = $region89
    $region88: #{critic_forward.1} parent=1 // pred_region
      %189 = dma.done [#allocation4], 16
    $region89: #{critic_forward.1} parent=1 // pred_fallthru
      _
    // Predicated region
    $region90: #{critic_forward.1} parent=1 // pred_check
      _
    $region91: #{critic_forward.1} parent=1 // pred_check_branch
      %191 = sbr.rel (0) target = $region93
    $region92: #{critic_forward.1} parent=1 // pred_region
      %192 = dma.done [#allocation6], 16
    $region93: #{critic_forward.1} parent=1 // pred_fallthru
      _
    // Predicated region
    $region94: #{critic_forward.1} parent=1 // pred_check
      _
    $region95: #{critic_forward.1} parent=1 // pred_check_branch
      %194 = sbr.rel (0) target = $region97
    $region96: #{critic_forward.1} parent=1 // pred_region
      %195 = dma.done [#allocation6], 256
    $region97: #{critic_forward.1} parent=1 // pred_fallthru
      _
    // Predicated region
    $region98: #{critic_forward.1} parent=1 // pred_check
      _
    $region99: #{critic_forward.1} parent=1 // pred_check_branch
      %197 = sbr.rel (0) target = $region101
    $region100: #{critic_forward.1} parent=1 // pred_region
      %198 = dma.done [#allocation9], 16
    $region101: #{critic_forward.1} parent=1 // pred_fallthru
      _
    // Predicated region
    $region102: #{critic_forward.1} parent=1 // pred_check
      _
    $region103: #{critic_forward.1} parent=1 // pred_check_branch
      %200 = sbr.rel (0) target = $region105
    $region104: #{critic_forward.1} parent=1 // pred_region
      %201 = dma.done [#allocation9], 16
    $region105: #{critic_forward.1} parent=1 // pred_fallthru
      _
    // Predicated region
    $region106: #{critic_forward.1} parent=1 // pred_check
      _
    $region107: #{critic_forward.1} parent=1 // pred_check_branch
      %203 = sbr.rel (0) target = $region109
    $region108: #{critic_forward.1} parent=1 // pred_region
      %204 = dma.done [#allocation12], 64
    $region109: #{critic_forward.1} parent=1 // pred_fallthru
      _
    // Predicated region
    $region110: #{critic_forward.1} parent=1 // pred_check
      _
    $region111: #{critic_forward.1} parent=1 // pred_check_branch
      %206 = sbr.rel (0) target = $region113
    $region112: #{critic_forward.1} parent=1 // pred_region
      %207 = dma.done [#allocation12], 16
    $region113: #{critic_forward.1} parent=1 // pred_fallthru
      _
    // Predicated region
    $region114: #{critic_forward.1} parent=1 // pred_check
      _
    $region115: #{critic_forward.1} parent=1 // pred_check_branch
      %209 = sbr.rel (0) target = $region117
    $region116: #{critic_forward.1} parent=1 // pred_region
      %210 = dma.done [#allocation15], 16
    $region117: #{critic_forward.1} parent=1 // pred_fallthru
      _
    // Predicated region
    $region118: #{critic_forward.1} parent=1 // pred_check
      _
    $region119: #{critic_forward.1} parent=1 // pred_check_branch
      %212 = sbr.rel (0) target = $region121
    $region120: #{critic_forward.1} parent=1 // pred_region
      %213 = dma.done [#allocation15], 512
    $region121: #{critic_forward.1} parent=1 // pred_fallthru
      _
    // Predicated region
    $region122: #{critic_forward.1} parent=1 // pred_check
      _
    $region123: #{critic_forward.1} parent=1 // pred_check_branch
      %215 = sbr.rel (0) target = $region125
    $region124: #{critic_forward.1} parent=1 // pred_region
      %216 = dma.done [#allocation18], 512
    $region125: #{critic_forward.1} parent=1 // pred_fallthru
      _
    // Predicated region
    $region126: #{critic_forward.1} parent=1 // pred_check
      _
    $region127: #{critic_forward.1} parent=1 // pred_check_branch
      %218 = sbr.rel (0) target = $region129
    $region128: #{critic_forward.1} parent=1 // pred_region
      %219 = dma.done [#allocation18], 16
    $region129: #{critic_forward.1} parent=1 // pred_fallthru
      _
    // Predicated region
    $region130: #{critic_forward.1} parent=1 // pred_check
      _
    $region131: #{critic_forward.1} parent=1 // pred_check_branch
      %221 = sbr.rel (0) target = $region133
    $region132: #{critic_forward.1} parent=1 // pred_region
      %222 = dma.done [#allocation21], 16
    $region133: #{critic_forward.1} parent=1 // pred_fallthru
      _
    // Predicated region
    $region134: #{critic_forward.1} parent=1 // pred_check
      _
    $region135: #{critic_forward.1} parent=1 // pred_check_branch
      %224 = sbr.rel (0) target = $region137
    $region136: #{critic_forward.1} parent=1 // pred_region
      %225 = dma.done [#allocation21], 16
    $region137: #{critic_forward.1} parent=1 // pred_fallthru
      _
    %v226 = vld [vmem:[#allocation3] sm:$0x1]
    %v228 = vlaneseq
    %v229 = vshrl.u32 %v228, 7
    %v230 = vsub.s32 0, %v229
    %v231 = vrot.slane %v226, %v230
    %v233 = vld [vmem:[#allocation5] sm:$0x1]
    %v235 = vlaneseq
    %v236 = vshrl.u32 %v235, 7
    %v237 = vsub.s32 0, %v236
    %v238 = vrot.slane %v233, %v237
    %v240 = vld [vmem:[%s5] sm:$0xff]
    %v241 = vld [vmem:[%s5 + $0x8] sm:$0xff]
    %v242 = vld [vmem:[%s5 + $0x10] sm:$0xff]
    %v243 = vld [vmem:[%s5 + $0x18] sm:$0xff]
    %v244 = vld [vmem:[%s8] sm:$0xff]
    %v245 = vld [vmem:[%s8 + $0x8] sm:$0xff]
    %v246 = vld [vmem:[%s8 + $0x10] sm:$0xff]
    %v247 = vld [vmem:[%s8 + $0x18] sm:$0xff]
    %v248 = vld [vmem:[%s7] sm:$0xff]
    %v249 = vld [vmem:[%s7 + $0x8] sm:$0xff]
    %v250 = vld [vmem:[%s7 + $0x10] sm:$0xff]
    %v251 = vld [vmem:[%s7 + $0x18] sm:$0xff]
    %v252 = vld [vmem:[#allocation8] sm:$0x1]
    %v254 = vlaneseq
    %v255 = vshrl.u32 %v254, 7
    %v256 = vsub.s32 0, %v255
    %v257 = vrot.slane %v252, %v256
    %v259 = vld [vmem:[#allocation10] sm:$0x1]
    %v261 = vlaneseq
    %v262 = vshrl.u32 %v261, 7
    %v263 = vsub.s32 0, %v262
    %v264 = vrot.slane %v259, %v263
    %v266 = vld [vmem:[%s0] sm:$0xff]
    %v267 = vld [vmem:[%s0 + $0x8] sm:$0xff]
    %v268 = vld [vmem:[%s0 + $0x10] sm:$0xff]
    %v269 = vld [vmem:[%s0 + $0x18] sm:$0xff]
    %v270 = vld [vmem:[%s0 + $0x20] sm:$0xff]
    %v271 = vld [vmem:[%s0 + $0x28] sm:$0xff]
    %v272 = vld [vmem:[%s0 + $0x30] sm:$0xff]
    %v273 = vld [vmem:[%s0 + $0x38] sm:$0xff]
    %v274 = vld [vmem:[#allocation7] sm:$0xff]
    %v275 = vld [vmem:[#allocation7 + $0x8] sm:$0xff]
    %vm276 = vcmask 130048
    %v278 = vsel %vm276, %v266, 0
    %v281 = vsel %vm276, %v267, 0
    %v284 = vsel %vm276, %v268, 0
    %v287 = vsel %vm276, %v269, 0
    %v290 = vsel %vm276, %v270, 0
    %v293 = vsel %vm276, %v271, 0
    %v296 = vsel %vm276, %v272, 0
    %v299 = vsel %vm276, %v273, 0
    %301 = vmatprep.subr.mxu0 0.0
    %302 = vmatpush1.msra.mxu0 %v274
    %303 = vmatprep.subr.mxu0 0.0
    %304 = vmatpush1.msra.mxu0 %v275
    %305 = vmatprep.subr.mxu0 0.0
    %306 = vmatpush1.msra.mxu0 0.0
    %307 = vmatprep.subr.mxu0 0.0
    %308 = vmatpush1.msra.mxu0 0.0
    %309 = vmatprep.subr.mxu0 0.0
    %310 = vmatpush1.msra.mxu0 0.0
    %311 = vmatprep.subr.mxu0 0.0
    %312 = vmatpush1.msra.mxu0 0.0
    %313 = vmatprep.subr.mxu0 0.0
    %314 = vmatpush1.msra.mxu0 0.0
    %315 = vmatprep.subr.mxu0 0.0
    %316 = vmatpush1.msra.mxu0 0.0
    %317 = vmatprep.subr.mxu0 0.0
    %318 = vmatpush1.msra.mxu0 0.0
    %319 = vmatprep.subr.mxu0 0.0
    %320 = vmatpush1.msra.mxu0 0.0
    %321 = vmatprep.subr.mxu0 0.0
    %322 = vmatpush1.msra.mxu0 0.0
    %323 = vmatprep.subr.mxu0 0.0
    %324 = vmatpush1.msra.mxu0 0.0
    %325 = vmatprep.subr.mxu0 0.0
    %326 = vmatpush1.msra.mxu0 0.0
    %327 = vmatprep.subr.mxu0 0.0
    %328 = vmatpush1.msra.mxu0 0.0
    %329 = vmatprep.subr.mxu0 0.0
    %330 = vmatpush1.msra.mxu0 0.0
    %331 = vmatprep.subr.mxu0 0.0
    %332 = vmatpush1.msra.mxu0 0.0
    %333 = vmatprep.subr.mxu0 0.0
    %334 = vmatpush1.msra.mxu0 0.0
    %335 = vmatprep.subr.mxu0 0.0
    %336 = vmatpush1.msra.mxu0 0.0
    %337 = vmatprep.subr.mxu0 0.0
    %338 = vmatpush1.msra.mxu0 0.0
    %339 = vmatprep.subr.mxu0 0.0
    %340 = vmatpush1.msra.mxu0 0.0
    %341 = vmatprep.subr.mxu0 0.0
    %342 = vmatpush1.msra.mxu0 0.0
    %343 = vmatprep.subr.mxu0 0.0
    %344 = vmatpush1.msra.mxu0 0.0
    %345 = vmatprep.subr.mxu0 0.0
    %346 = vmatpush1.msra.mxu0 0.0
    %347 = vmatprep.subr.mxu0 0.0
    %348 = vmatpush1.msra.mxu0 0.0
    %349 = vmatprep.subr.mxu0 0.0
    %350 = vmatpush1.msra.mxu0 0.0
    %351 = vmatprep.subr.mxu0 0.0
    %352 = vmatpush1.msra.mxu0 0.0
    %353 = vmatprep.subr.mxu0 0.0
    %354 = vmatpush1.msra.mxu0 0.0
    %355 = vmatprep.subr.mxu0 0.0
    %356 = vmatpush1.msra.mxu0 0.0
    %357 = vmatprep.subr.mxu0 0.0
    %358 = vmatpush1.msra.mxu0 0.0
    %359 = vmatprep.subr.mxu0 0.0
    %360 = vmatpush1.msra.mxu0 0.0
    %361 = vmatprep.subr.mxu0 0.0
    %362 = vmatpush1.msra.mxu0 0.0
    %363 = vmatprep.subr.mxu0 0.0
    %364 = vmatpush1.msra.mxu0 0.0
    %365 = vmatprep.mubr.f32.mxu0 0.0
    %366 = vmatmul.mubr.f32.gmra.mrb[0].mxu0 %v278
    %v367 = vpop.f32.mrb[0].mxu0
    %v368 = vadd.f32 0.0, %v367
    %v369 = vpop.f32.mrb[0].mxu0
    %370 = vmatprep.mubr.f32.mxu0 0.0
    %371 = vmatmul.mubr.f32.gmra.mrb[0].mxu0 %v281
    %v372 = vpop.f32.mrb[0].mxu0
    %v373 = vadd.f32 0.0, %v372
    %v374 = vpop.f32.mrb[0].mxu0
    %375 = vmatprep.mubr.f32.mxu0 0.0
    %376 = vmatmul.mubr.f32.gmra.mrb[0].mxu0 %v284
    %v377 = vpop.f32.mrb[0].mxu0
    %v378 = vadd.f32 0.0, %v377
    %v379 = vpop.f32.mrb[0].mxu0
    %380 = vmatprep.mubr.f32.mxu0 0.0
    %381 = vmatmul.mubr.f32.gmra.mrb[0].mxu0 %v287
    %v382 = vpop.f32.mrb[0].mxu0
    %v383 = vadd.f32 0.0, %v382
    %v384 = vpop.f32.mrb[0].mxu0
    %385 = vmatprep.mubr.f32.mxu0 0.0
    %386 = vmatmul.mubr.f32.gmra.mrb[0].mxu0 %v290
    %v387 = vpop.f32.mrb[0].mxu0
    %v388 = vadd.f32 0.0, %v387
    %v389 = vpop.f32.mrb[0].mxu0
    %390 = vmatprep.mubr.f32.mxu0 0.0
    %391 = vmatmul.mubr.f32.gmra.mrb[0].mxu0 %v293
    %v392 = vpop.f32.mrb[0].mxu0
    %v393 = vadd.f32 0.0, %v392
    %v394 = vpop.f32.mrb[0].mxu0
    %395 = vmatprep.mubr.f32.mxu0 0.0
    %396 = vmatmul.mubr.f32.gmra.mrb[0].mxu0 %v296
    %v397 = vpop.f32.mrb[0].mxu0
    %v398 = vadd.f32 0.0, %v397
    %v399 = vpop.f32.mrb[0].mxu0
    %400 = vmatprep.mubr.f32.mxu0 0.0
    %401 = vmatmul.mubr.f32.gmra.mrb[0].mxu0 %v299
    %v402 = vpop.f32.mrb[0].mxu0
    %v403 = vadd.f32 0.0, %v402
    %v404 = vpop.f32.mrb[0].mxu0
    %405 = vdwg.mxu0
    %vm406 = vcmask 261120
    %v408 = vsel %vm406, 0.0, 0
    %410 = vmatprep.subr.mxu0 0.0
    %411 = vmatpush1.msra.mxu0 %v240
    %412 = vmatprep.subr.mxu0 0.0
    %413 = vmatpush1.msra.mxu0 %v241
    %414 = vmatprep.subr.mxu0 0.0
    %415 = vmatpush1.msra.mxu0 %v242
    %416 = vmatprep.subr.mxu0 0.0
    %417 = vmatpush1.msra.mxu0 %v243
    %418 = vmatprep.subr.mxu0 0.0
    %419 = vmatpush1.msra.mxu0 0.0
    %420 = vmatprep.subr.mxu0 0.0
    %421 = vmatpush1.msra.mxu0 0.0
    %422 = vmatprep.subr.mxu0 0.0
    %423 = vmatpush1.msra.mxu0 0.0
    %424 = vmatprep.subr.mxu0 0.0
    %425 = vmatpush1.msra.mxu0 0.0
    %426 = vmatprep.subr.mxu0 0.0
    %427 = vmatpush1.msra.mxu0 0.0
    %428 = vmatprep.subr.mxu0 0.0
    %429 = vmatpush1.msra.mxu0 0.0
    %430 = vmatprep.subr.mxu0 0.0
    %431 = vmatpush1.msra.mxu0 0.0
    %432 = vmatprep.subr.mxu0 0.0
    %433 = vmatpush1.msra.mxu0 0.0
    %434 = vmatprep.subr.mxu0 0.0
    %435 = vmatpush1.msra.mxu0 0.0
    %436 = vmatprep.subr.mxu0 0.0
    %437 = vmatpush1.msra.mxu0 0.0
    %438 = vmatprep.subr.mxu0 0.0
    %439 = vmatpush1.msra.mxu0 0.0
    %440 = vmatprep.subr.mxu0 0.0
    %441 = vmatpush1.msra.mxu0 0.0
    %442 = vmatprep.subr.mxu0 0.0
    %443 = vmatpush1.msra.mxu0 0.0
    %444 = vmatprep.subr.mxu0 0.0
    %445 = vmatpush1.msra.mxu0 0.0
    %446 = vmatprep.subr.mxu0 0.0
    %447 = vmatpush1.msra.mxu0 0.0
    %448 = vmatprep.subr.mxu0 0.0
    %449 = vmatpush1.msra.mxu0 0.0
    %450 = vmatprep.subr.mxu0 0.0
    %451 = vmatpush1.msra.mxu0 0.0
    %452 = vmatprep.subr.mxu0 0.0
    %453 = vmatpush1.msra.mxu0 0.0
    %454 = vmatprep.subr.mxu0 0.0
    %455 = vmatpush1.msra.mxu0 0.0
    %456 = vmatprep.subr.mxu0 0.0
    %457 = vmatpush1.msra.mxu0 0.0
    %458 = vmatprep.subr.mxu0 0.0
    %459 = vmatpush1.msra.mxu0 0.0
    %460 = vmatprep.subr.mxu0 0.0
    %461 = vmatpush1.msra.mxu0 0.0
    %462 = vmatprep.subr.mxu0 0.0
    %463 = vmatpush1.msra.mxu0 0.0
    %464 = vmatprep.subr.mxu0 0.0
    %465 = vmatpush1.msra.mxu0 0.0
    %466 = vmatprep.subr.mxu0 0.0
    %467 = vmatpush1.msra.mxu0 0.0
    %468 = vmatprep.subr.mxu0 0.0
    %469 = vmatpush1.msra.mxu0 0.0
    %470 = vmatprep.subr.mxu0 0.0
    %471 = vmatpush1.msra.mxu0 0.0
    %472 = vmatprep.subr.mxu0 0.0
    %473 = vmatpush1.msra.mxu0 0.0
    %474 = vmatprep.mubr.f32.mxu0 0.0
    %475 = vmatmul.mubr.f32.gmra.mrb[0].mxu0 %v408
    %v476 = vpop.f32.mrb[0].mxu0
    %v477 = vadd.f32 0.0, %v476
    %v478 = vpop.f32.mrb[0].mxu0
    %479 = vdwg.mxu0
    %v480 = vadd.f32 %v368, %v477
    %v481 = vadd.f32 %v480, %v257
    %v482 = vmul.f32 %v481, %v231
    %v483 = vtanh.pop %v482
    %v484 = vmul.f32 %v483, %v231
    %v485 = vadd.f32 %v484, %v238
    %v486 = vmul.f32 %v485, 0.0
    %488 = vrot.lane.b32.xlu0 %v485, 64
    %v489 = vpop.permute.xlu0 %488
    %v491 = vmul.f32 %v485, %v489
    %493 = vrot.lane.b32.xlu0 %v491, 32
    %v494 = vpop.permute.xlu0 %493
    %v496 = vadd.f32 %v486, %v494
    %v497 = vtanh.pop %v496
    %499 = vrot.lane.b32.xlu0 %v497, 64
    %v500 = vpop.permute.xlu0 %499
    %v502 = vmul.f32 %v485, %v500
    %503 = vmatprep.subr.mxu0 0.0
    %504 = vmatpush1.msra.mxu0 %v244
    %505 = vmatprep.subr.mxu0 0.0
    %506 = vmatpush1.msra.mxu0 %v245
    %507 = vmatprep.subr.mxu0 0.0
    %508 = vmatpush1.msra.mxu0 %v246
    %509 = vmatprep.subr.mxu0 0.0
    %510 = vmatpush1.msra.mxu0 %v247
    %511 = vmatprep.subr.mxu0 0.0
    %512 = vmatpush1.msra.mxu0 0.0
    %513 = vmatprep.subr.mxu0 0.0
    %514 = vmatpush1.msra.mxu0 0.0
    %515 = vmatprep.subr.mxu0 0.0
    %516 = vmatpush1.msra.mxu0 0.0
    %517 = vmatprep.subr.mxu0 0.0
    %518 = vmatpush1.msra.mxu0 0.0
    %519 = vmatprep.subr.mxu0 0.0
    %520 = vmatpush1.msra.mxu0 0.0
    %521 = vmatprep.subr.mxu0 0.0
    %522 = vmatpush1.msra.mxu0 0.0
    %523 = vmatprep.subr.mxu0 0.0
    %524 = vmatpush1.msra.mxu0 0.0
    %525 = vmatprep.subr.mxu0 0.0
    %526 = vmatpush1.msra.mxu0 0.0
    %527 = vmatprep.subr.mxu0 0.0
    %528 = vmatpush1.msra.mxu0 0.0
    %529 = vmatprep.subr.mxu0 0.0
    %530 = vmatpush1.msra.mxu0 0.0
    %531 = vmatprep.subr.mxu0 0.0
    %532 = vmatpush1.msra.mxu0 0.0
    %533 = vmatprep.subr.mxu0 0.0
    %534 = vmatpush1.msra.mxu0 0.0
    %535 = vmatprep.subr.mxu0 0.0
    %536 = vmatpush1.msra.mxu0 0.0
    %537 = vmatprep.subr.mxu0 0.0
    %538 = vmatpush1.msra.mxu0 0.0
    %539 = vmatprep.subr.mxu0 0.0
    %540 = vmatpush1.msra.mxu0 0.0
    %541 = vmatprep.subr.mxu0 0.0
    %542 = vmatpush1.msra.mxu0 0.0
    %543 = vmatprep.subr.mxu0 0.0
    %544 = vmatpush1.msra.mxu0 0.0
    %545 = vmatprep.subr.mxu0 0.0
    %546 = vmatpush1.msra.mxu0 0.0
    %547 = vmatprep.subr.mxu0 0.0
    %548 = vmatpush1.msra.mxu0 0.0
    %549 = vmatprep.subr.mxu0 0.0
    %550 = vmatpush1.msra.mxu0 0.0
    %551 = vmatprep.subr.mxu0 0.0
    %552 = vmatpush1.msra.mxu0 0.0
    %553 = vmatprep.subr.mxu0 0.0
    %554 = vmatpush1.msra.mxu0 0.0
    %555 = vmatprep.subr.mxu0 0.0
    %556 = vmatpush1.msra.mxu0 0.0
    %557 = vmatprep.subr.mxu0 0.0
    %558 = vmatpush1.msra.mxu0 0.0
    %559 = vmatprep.subr.mxu0 0.0
    %560 = vmatpush1.msra.mxu0 0.0
    %561 = vmatprep.subr.mxu0 0.0
    %562 = vmatpush1.msra.mxu0 0.0
    %563 = vmatprep.subr.mxu0 0.0
    %564 = vmatpush1.msra.mxu0 0.0
    %565 = vmatprep.subr.mxu0 0.0
    %566 = vmatpush1.msra.mxu0 0.0
    %567 = vmatprep.mubr.f32.mxu0 0.0
    %568 = vmatmul.mubr.f32.gmra.mrb[0].mxu0 %v408
    %v569 = vpop.f32.mrb[0].mxu0
    %v570 = vadd.f32 0.0, %v569
    %v571 = vpop.f32.mrb[0].mxu0
    %572 = vdwg.mxu0
    %574 = vrot.lane.b32.xlu0 %v502, 32
    %v575 = vpop.permute.xlu0 %574
    %v576 = vsel %vm406, %v575, 0
    %578 = vmatprep.subr.mxu0 0.0
    %579 = vmatpush1.msra.mxu0 %v248
    %580 = vmatprep.subr.mxu0 0.0
    %581 = vmatpush1.msra.mxu0 %v249
    %582 = vmatprep.subr.mxu0 0.0
    %583 = vmatpush1.msra.mxu0 %v250
    %584 = vmatprep.subr.mxu0 0.0
    %585 = vmatpush1.msra.mxu0 %v251
    %586 = vmatprep.subr.mxu0 0.0
    %587 = vmatpush1.msra.mxu0 0.0
    %588 = vmatprep.subr.mxu0 0.0
    %589 = vmatpush1.msra.mxu0 0.0
    %590 = vmatprep.subr.mxu0 0.0
    %591 = vmatpush1.msra.mxu0 0.0
    %592 = vmatprep.subr.mxu0 0.0
    %593 = vmatpush1.msra.mxu0 0.0
    %594 = vmatprep.subr.mxu0 0.0
    %595 = vmatpush1.msra.mxu0 0.0
    %596 = vmatprep.subr.mxu0 0.0
    %597 = vmatpush1.msra.mxu0 0.0
    %598 = vmatprep.subr.mxu0 0.0
    %599 = vmatpush1.msra.mxu0 0.0
    %600 = vmatprep.subr.mxu0 0.0
    %601 = vmatpush1.msra.mxu0 0.0
    %602 = vmatprep.subr.mxu0 0.0
    %603 = vmatpush1.msra.mxu0 0.0
    %604 = vmatprep.subr.mxu0 0.0
    %605 = vmatpush1.msra.mxu0 0.0
    %606 = vmatprep.subr.mxu0 0.0
    %607 = vmatpush1.msra.mxu0 0.0
    %608 = vmatprep.subr.mxu0 0.0
    %609 = vmatpush1.msra.mxu0 0.0
    %610 = vmatprep.subr.mxu0 0.0
    %611 = vmatpush1.msra.mxu0 0.0
    %612 = vmatprep.subr.mxu0 0.0
    %613 = vmatpush1.msra.mxu0 0.0
    %614 = vmatprep.subr.mxu0 0.0
    %615 = vmatpush1.msra.mxu0 0.0
    %616 = vmatprep.subr.mxu0 0.0
    %617 = vmatpush1.msra.mxu0 0.0
    %618 = vmatprep.subr.mxu0 0.0
    %619 = vmatpush1.msra.mxu0 0.0
    %620 = vmatprep.subr.mxu0 0.0
    %621 = vmatpush1.msra.mxu0 0.0
    %622 = vmatprep.subr.mxu0 0.0
    %623 = vmatpush1.msra.mxu0 0.0
    %624 = vmatprep.subr.mxu0 0.0
    %625 = vmatpush1.msra.mxu0 0.0
    %626 = vmatprep.subr.mxu0 0.0
    %627 = vmatpush1.msra.mxu0 0.0
    %628 = vmatprep.subr.mxu0 0.0
    %629 = vmatpush1.msra.mxu0 0.0
    %630 = vmatprep.subr.mxu0 0.0
    %631 = vmatpush1.msra.mxu0 0.0
    %632 = vmatprep.subr.mxu0 0.0
    %633 = vmatpush1.msra.mxu0 0.0
    %634 = vmatprep.subr.mxu0 0.0
    %635 = vmatpush1.msra.mxu0 0.0
    %636 = vmatprep.subr.mxu0 0.0
    %637 = vmatpush1.msra.mxu0 0.0
    %638 = vmatprep.subr.mxu0 0.0
    %639 = vmatpush1.msra.mxu0 0.0
    %640 = vmatprep.subr.mxu0 0.0
    %641 = vmatpush1.msra.mxu0 0.0
    %642 = vmatprep.mubr.f32.mxu0 0.0
    %643 = vmatmul.mubr.f32.gmra.mrb[0].mxu0 %v576
    %v644 = vpop.f32.mrb[0].mxu0
    %v645 = vadd.f32 %v570, %v644
    %v646 = vpop.f32.mrb[0].mxu0
    %647 = vdwg.mxu0
    %v648 = vadd.f32 %v645, %v264
    %v649 = vmul.f32 %v648, %v231
    %v650 = vtanh.pop %v649
    %v651 = vmul.f32 %v650, %v231
    %v652 = vadd.f32 %v651, %v238
    %v653 = vmul.f32 %v652, 0.0
    %655 = vrot.lane.b32.xlu0 %v652, 64
    %v656 = vpop.permute.xlu0 %655
    %v658 = vmul.f32 %v652, %v656
    %660 = vrot.lane.b32.xlu0 %v658, 32
    %v661 = vpop.permute.xlu0 %660
    %v663 = vadd.f32 %v653, %v661
    %v664 = vtanh.pop %v663
    %666 = vrot.lane.b32.xlu0 %v664, 64
    %v667 = vpop.permute.xlu0 %666
    %v669 = vmul.f32 %v652, %v667
    %670 = vmatprep.subr.mxu0 0.0
    %671 = vmatpush1.msra.mxu0 %v240
    %672 = vmatprep.subr.mxu0 0.0
    %673 = vmatpush1.msra.mxu0 %v241
    %674 = vmatprep.subr.mxu0 0.0
    %675 = vmatpush1.msra.mxu0 %v242
    %676 = vmatprep.subr.mxu0 0.0
    %677 = vmatpush1.msra.mxu0 %v243
    %678 = vmatprep.subr.mxu0 0.0
    %679 = vmatpush1.msra.mxu0 0.0
    %680 = vmatprep.subr.mxu0 0.0
    %681 = vmatpush1.msra.mxu0 0.0
    %682 = vmatprep.subr.mxu0 0.0
    %683 = vmatpush1.msra.mxu0 0.0
    %684 = vmatprep.subr.mxu0 0.0
    %685 = vmatpush1.msra.mxu0 0.0
    %686 = vmatprep.subr.mxu0 0.0
    %687 = vmatpush1.msra.mxu0 0.0
    %688 = vmatprep.subr.mxu0 0.0
    %689 = vmatpush1.msra.mxu0 0.0
    %690 = vmatprep.subr.mxu0 0.0
    %691 = vmatpush1.msra.mxu0 0.0
    %692 = vmatprep.subr.mxu0 0.0
    %693 = vmatpush1.msra.mxu0 0.0
    %694 = vmatprep.subr.mxu0 0.0
    %695 = vmatpush1.msra.mxu0 0.0
    %696 = vmatprep.subr.mxu0 0.0
    %697 = vmatpush1.msra.mxu0 0.0
    %698 = vmatprep.subr.mxu0 0.0
    %699 = vmatpush1.msra.mxu0 0.0
    %700 = vmatprep.subr.mxu0 0.0
    %701 = vmatpush1.msra.mxu0 0.0
    %702 = vmatprep.subr.mxu0 0.0
    %703 = vmatpush1.msra.mxu0 0.0
    %704 = vmatprep.subr.mxu0 0.0
    %705 = vmatpush1.msra.mxu0 0.0
    %706 = vmatprep.subr.mxu0 0.0
    %707 = vmatpush1.msra.mxu0 0.0
    %708 = vmatprep.subr.mxu0 0.0
    %709 = vmatpush1.msra.mxu0 0.0
    %710 = vmatprep.subr.mxu0 0.0
    %711 = vmatpush1.msra.mxu0 0.0
    %712 = vmatprep.subr.mxu0 0.0
    %713 = vmatpush1.msra.mxu0 0.0
    %714 = vmatprep.subr.mxu0 0.0
    %715 = vmatpush1.msra.mxu0 0.0
    %716 = vmatprep.subr.mxu0 0.0
    %717 = vmatpush1.msra.mxu0 0.0
    %718 = vmatprep.subr.mxu0 0.0
    %719 = vmatpush1.msra.mxu0 0.0
    %720 = vmatprep.subr.mxu0 0.0
    %721 = vmatpush1.msra.mxu0 0.0
    %722 = vmatprep.subr.mxu0 0.0
    %723 = vmatpush1.msra.mxu0 0.0
    %724 = vmatprep.subr.mxu0 0.0
    %725 = vmatpush1.msra.mxu0 0.0
    %726 = vmatprep.subr.mxu0 0.0
    %727 = vmatpush1.msra.mxu0 0.0
    %728 = vmatprep.subr.mxu0 0.0
    %729 = vmatpush1.msra.mxu0 0.0
    %730 = vmatprep.subr.mxu0 0.0
    %731 = vmatpush1.msra.mxu0 0.0
    %732 = vmatprep.subr.mxu0 0.0
    %733 = vmatpush1.msra.mxu0 0.0
    %734 = vmatprep.mubr.f32.mxu0 0.0
    %735 = vmatmul.mubr.f32.gmra.mrb[0].mxu0 %v576
    %v736 = vpop.f32.mrb[0].mxu0
    %v737 = vadd.f32 0.0, %v736
    %v738 = vpop.f32.mrb[0].mxu0
    %739 = vdwg.mxu0
    %v740 = vadd.f32 %v373, %v737
    %v741 = vadd.f32 %v740, %v257
    %v742 = vmul.f32 %v741, %v231
    %v743 = vtanh.pop %v742
    %v744 = vmul.f32 %v743, %v231
    %v745 = vadd.f32 %v744, %v238
    %v746 = vmul.f32 %v745, %v496
    %748 = vrot.lane.b32.xlu0 %v745, 64
    %v749 = vpop.permute.xlu0 %748
    %v751 = vmul.f32 %v745, %v749
    %753 = vrot.lane.b32.xlu0 %v751, 32
    %v754 = vpop.permute.xlu0 %753
    %v756 = vadd.f32 %v746, %v754
    %v757 = vtanh.pop %v756
    %759 = vrot.lane.b32.xlu0 %v757, 64
    %v760 = vpop.permute.xlu0 %759
    %v762 = vmul.f32 %v745, %v760
    %764 = vrot.lane.b32.xlu0 %v669, 32
    %v765 = vpop.permute.xlu0 %764
    %v766 = vsel %vm406, %v765, 0
    %768 = vmatprep.subr.mxu0 0.0
    %769 = vmatpush1.msra.mxu0 %v244
    %770 = vmatprep.subr.mxu0 0.0
    %771 = vmatpush1.msra.mxu0 %v245
    %772 = vmatprep.subr.mxu0 0.0
    %773 = vmatpush1.msra.mxu0 %v246
    %774 = vmatprep.subr.mxu0 0.0
    %775 = vmatpush1.msra.mxu0 %v247
    %776 = vmatprep.subr.mxu0 0.0
    %777 = vmatpush1.msra.mxu0 0.0
    %778 = vmatprep.subr.mxu0 0.0
    %779 = vmatpush1.msra.mxu0 0.0
    %780 = vmatprep.subr.mxu0 0.0
    %781 = vmatpush1.msra.mxu0 0.0
    %782 = vmatprep.subr.mxu0 0.0
    %783 = vmatpush1.msra.mxu0 0.0
    %784 = vmatprep.subr.mxu0 0.0
    %785 = vmatpush1.msra.mxu0 0.0
    %786 = vmatprep.subr.mxu0 0.0
    %787 = vmatpush1.msra.mxu0 0.0
    %788 = vmatprep.subr.mxu0 0.0
    %789 = vmatpush1.msra.mxu0 0.0
    %790 = vmatprep.subr.mxu0 0.0
    %791 = vmatpush1.msra.mxu0 0.0
    %792 = vmatprep.subr.mxu0 0.0
    %793 = vmatpush1.msra.mxu0 0.0
    %794 = vmatprep.subr.mxu0 0.0
    %795 = vmatpush1.msra.mxu0 0.0
    %796 = vmatprep.subr.mxu0 0.0
    %797 = vmatpush1.msra.mxu0 0.0
    %798 = vmatprep.subr.mxu0 0.0
    %799 = vmatpush1.msra.mxu0 0.0
    %800 = vmatprep.subr.mxu0 0.0
    %801 = vmatpush1.msra.mxu0 0.0
    %802 = vmatprep.subr.mxu0 0.0
    %803 = vmatpush1.msra.mxu0 0.0
    %804 = vmatprep.subr.mxu0 0.0
    %805 = vmatpush1.msra.mxu0 0.0
    %806 = vmatprep.subr.mxu0 0.0
    %807 = vmatpush1.msra.mxu0 0.0
    %808 = vmatprep.subr.mxu0 0.0
    %809 = vmatpush1.msra.mxu0 0.0
    %810 = vmatprep.subr.mxu0 0.0
    %811 = vmatpush1.msra.mxu0 0.0
    %812 = vmatprep.subr.mxu0 0.0
    %813 = vmatpush1.msra.mxu0 0.0
    %814 = vmatprep.subr.mxu0 0.0
    %815 = vmatpush1.msra.mxu0 0.0
    %816 = vmatprep.subr.mxu0 0.0
    %817 = vmatpush1.msra.mxu0 0.0
    %818 = vmatprep.subr.mxu0 0.0
    %819 = vmatpush1.msra.mxu0 0.0
    %820 = vmatprep.subr.mxu0 0.0
    %821 = vmatpush1.msra.mxu0 0.0
    %822 = vmatprep.subr.mxu0 0.0
    %823 = vmatpush1.msra.mxu0 0.0
    %824 = vmatprep.subr.mxu0 0.0
    %825 = vmatpush1.msra.mxu0 0.0
    %826 = vmatprep.subr.mxu0 0.0
    %827 = vmatpush1.msra.mxu0 0.0
    %828 = vmatprep.subr.mxu0 0.0
    %829 = vmatpush1.msra.mxu0 0.0
    %830 = vmatprep.subr.mxu0 0.0
    %831 = vmatpush1.msra.mxu0 0.0
    %832 = vmatprep.mubr.f32.mxu0 0.0
    %833 = vmatmul.mubr.f32.gmra.mrb[0].mxu0 %v766
    %v834 = vpop.f32.mrb[0].mxu0
    %v835 = vadd.f32 0.0, %v834
    %v836 = vpop.f32.mrb[0].mxu0
    %837 = vdwg.mxu0
    %839 = vrot.lane.b32.xlu0 %v762, 32
    %v840 = vpop.permute.xlu0 %839
    %v841 = vsel %vm406, %v840, 0
    %843 = vmatprep.subr.mxu0 0.0
    %844 = vmatpush1.msra.mxu0 %v248
    %845 = vmatprep.subr.mxu0 0.0
    %846 = vmatpush1.msra.mxu0 %v249
    %847 = vmatprep.subr.mxu0 0.0
    %848 = vmatpush1.msra.mxu0 %v250
    %849 = vmatprep.subr.mxu0 0.0
    %850 = vmatpush1.msra.mxu0 %v251
    %851 = vmatprep.subr.mxu0 0.0
    %852 = vmatpush1.msra.mxu0 0.0
    %853 = vmatprep.subr.mxu0 0.0
    %854 = vmatpush1.msra.mxu0 0.0
    %855 = vmatprep.subr.mxu0 0.0
    %856 = vmatpush1.msra.mxu0 0.0
    %857 = vmatprep.subr.mxu0 0.0
    %858 = vmatpush1.msra.mxu0 0.0
    %859 = vmatprep.subr.mxu0 0.0
    %860 = vmatpush1.msra.mxu0 0.0
    %861 = vmatprep.subr.mxu0 0.0
    %862 = vmatpush1.msra.mxu0 0.0
    %863 = vmatprep.subr.mxu0 0.0
    %864 = vmatpush1.msra.mxu0 0.0
    %865 = vmatprep.subr.mxu0 0.0
    %866 = vmatpush1.msra.mxu0 0.0
    %867 = vmatprep.subr.mxu0 0.0
    %868 = vmatpush1.msra.mxu0 0.0
    %869 = vmatprep.subr.mxu0 0.0
    %870 = vmatpush1.msra.mxu0 0.0
    %871 = vmatprep.subr.mxu0 0.0
    %872 = vmatpush1.msra.mxu0 0.0
    %873 = vmatprep.subr.mxu0 0.0
    %874 = vmatpush1.msra.mxu0 0.0
    %875 = vmatprep.subr.mxu0 0.0
    %876 = vmatpush1.msra.mxu0 0.0
    %877 = vmatprep.subr.mxu0 0.0
    %878 = vmatpush1.msra.mxu0 0.0
    %879 = vmatprep.subr.mxu0 0.0
    %880 = vmatpush1.msra.mxu0 0.0
    %881 = vmatprep.subr.mxu0 0.0
    %882 = vmatpush1.msra.mxu0 0.0
    %883 = vmatprep.subr.mxu0 0.0
    %884 = vmatpush1.msra.mxu0 0.0
    %885 = vmatprep.subr.mxu0 0.0
    %886 = vmatpush1.msra.mxu0 0.0
    %887 = vmatprep.subr.mxu0 0.0
    %888 = vmatpush1.msra.mxu0 0.0
    %889 = vmatprep.subr.mxu0 0.0
    %890 = vmatpush1.msra.mxu0 0.0
    %891 = vmatprep.subr.mxu0 0.0
    %892 = vmatpush1.msra.mxu0 0.0
    %893 = vmatprep.subr.mxu0 0.0
    %894 = vmatpush1.msra.mxu0 0.0
    %895 = vmatprep.subr.mxu0 0.0
    %896 = vmatpush1.msra.mxu0 0.0
    %897 = vmatprep.subr.mxu0 0.0
    %898 = vmatpush1.msra.mxu0 0.0
    %899 = vmatprep.subr.mxu0 0.0
    %900 = vmatpush1.msra.mxu0 0.0
    %901 = vmatprep.subr.mxu0 0.0
    %902 = vmatpush1.msra.mxu0 0.0
    %903 = vmatprep.subr.mxu0 0.0
    %904 = vmatpush1.msra.mxu0 0.0
    %905 = vmatprep.subr.mxu0 0.0
    %906 = vmatpush1.msra.mxu0 0.0
    %907 = vmatprep.mubr.f32.mxu0 0.0
    %908 = vmatmul.mubr.f32.gmra.mrb[0].mxu0 %v841
    %v909 = vpop.f32.mrb[0].mxu0
    %v910 = vadd.f32 %v835, %v909
    %v911 = vpop.f32.mrb[0].mxu0
    %912 = vdwg.mxu0
    %v913 = vadd.f32 %v910, %v264
    %v914 = vmul.f32 %v913, %v231
    %v915 = vtanh.pop %v914
    %v916 = vmul.f32 %v915, %v231
    %v917 = vadd.f32 %v916, %v238
    %v918 = vmul.f32 %v917, %v663
    %920 = vrot.lane.b32.xlu0 %v917, 64
    %v921 = vpop.permute.xlu0 %920
    %v923 = vmul.f32 %v917, %v921
    %925 = vrot.lane.b32.xlu0 %v923, 32
    %v926 = vpop.permute.xlu0 %925
    %v928 = vadd.f32 %v918, %v926
    %v929 = vtanh.pop %v928
    %931 = vrot.lane.b32.xlu0 %v929, 64
    %v932 = vpop.permute.xlu0 %931
    %v934 = vmul.f32 %v917, %v932
    %935 = vmatprep.subr.mxu0 0.0
    %936 = vmatpush1.msra.mxu0 %v240
    %937 = vmatprep.subr.mxu0 0.0
    %938 = vmatpush1.msra.mxu0 %v241
    %939 = vmatprep.subr.mxu0 0.0
    %940 = vmatpush1.msra.mxu0 %v242
    %941 = vmatprep.subr.mxu0 0.0
    %942 = vmatpush1.msra.mxu0 %v243
    %943 = vmatprep.subr.mxu0 0.0
    %944 = vmatpush1.msra.mxu0 0.0
    %945 = vmatprep.subr.mxu0 0.0
    %946 = vmatpush1.msra.mxu0 0.0
    %947 = vmatprep.subr.mxu0 0.0
    %948 = vmatpush1.msra.mxu0 0.0
    %949 = vmatprep.subr.mxu0 0.0
    %950 = vmatpush1.msra.mxu0 0.0
    %951 = vmatprep.subr.mxu0 0.0
    %952 = vmatpush1.msra.mxu0 0.0
    %953 = vmatprep.subr.mxu0 0.0
    %954 = vmatpush1.msra.mxu0 0.0
    %955 = vmatprep.subr.mxu0 0.0
    %956 = vmatpush1.msra.mxu0 0.0
    %957 = vmatprep.subr.mxu0 0.0
    %958 = vmatpush1.msra.mxu0 0.0
    %959 = vmatprep.subr.mxu0 0.0
    %960 = vmatpush1.msra.mxu0 0.0
    %961 = vmatprep.subr.mxu0 0.0
    %962 = vmatpush1.msra.mxu0 0.0
    %963 = vmatprep.subr.mxu0 0.0
    %964 = vmatpush1.msra.mxu0 0.0
    %965 = vmatprep.subr.mxu0 0.0
    %966 = vmatpush1.msra.mxu0 0.0
    %967 = vmatprep.subr.mxu0 0.0
    %968 = vmatpush1.msra.mxu0 0.0
    %969 = vmatprep.subr.mxu0 0.0
    %970 = vmatpush1.msra.mxu0 0.0
    %971 = vmatprep.subr.mxu0 0.0
    %972 = vmatpush1.msra.mxu0 0.0
    %973 = vmatprep.subr.mxu0 0.0
    %974 = vmatpush1.msra.mxu0 0.0
    %975 = vmatprep.subr.mxu0 0.0
    %976 = vmatpush1.msra.mxu0 0.0
    %977 = vmatprep.subr.mxu0 0.0
    %978 = vmatpush1.msra.mxu0 0.0
    %979 = vmatprep.subr.mxu0 0.0
    %980 = vmatpush1.msra.mxu0 0.0
    %981 = vmatprep.subr.mxu0 0.0
    %982 = vmatpush1.msra.mxu0 0.0
    %983 = vmatprep.subr.mxu0 0.0
    %984 = vmatpush1.msra.mxu0 0.0
    %985 = vmatprep.subr.mxu0 0.0
    %986 = vmatpush1.msra.mxu0 0.0
    %987 = vmatprep.subr.mxu0 0.0
    %988 = vmatpush1.msra.mxu0 0.0
    %989 = vmatprep.subr.mxu0 0.0
    %990 = vmatpush1.msra.mxu0 0.0
    %991 = vmatprep.subr.mxu0 0.0
    %992 = vmatpush1.msra.mxu0 0.0
    %993 = vmatprep.subr.mxu0 0.0
    %994 = vmatpush1.msra.mxu0 0.0
    %995 = vmatprep.subr.mxu0 0.0
    %996 = vmatpush1.msra.mxu0 0.0
    %997 = vmatprep.subr.mxu0 0.0
    %998 = vmatpush1.msra.mxu0 0.0
    %999 = vmatprep.mubr.f32.mxu0 0.0
    %1000 = vmatmul.mubr.f32.gmra.mrb[0].mxu0 %v841
    %v1001 = vpop.f32.mrb[0].mxu0
    %v1002 = vadd.f32 0.0, %v1001
    %v1003 = vpop.f32.mrb[0].mxu0
    %1004 = vdwg.mxu0
    %v1005 = vadd.f32 %v378, %v1002
    %v1006 = vadd.f32 %v1005, %v257
    %v1007 = vmul.f32 %v1006, %v231
    %v1008 = vtanh.pop %v1007
    %v1009 = vmul.f32 %v1008, %v231
    %v1010 = vadd.f32 %v1009, %v238
    %v1011 = vmul.f32 %v1010, %v756
    %1013 = vrot.lane.b32.xlu0 %v1010, 64
    %v1014 = vpop.permute.xlu0 %1013
    %v1016 = vmul.f32 %v1010, %v1014
    %1018 = vrot.lane.b32.xlu0 %v1016, 32
    %v1019 = vpop.permute.xlu0 %1018
    %v1021 = vadd.f32 %v1011, %v1019
    %v1022 = vtanh.pop %v1021
    %1024 = vrot.lane.b32.xlu0 %v1022, 64
    %v1025 = vpop.permute.xlu0 %1024
    %v1027 = vmul.f32 %v1010, %v1025
    %1029 = vrot.lane.b32.xlu0 %v934, 32
    %v1030 = vpop.permute.xlu0 %1029
    %v1031 = vsel %vm406, %v1030, 0
    %1033 = vmatprep.subr.mxu0 0.0
    %1034 = vmatpush1.msra.mxu0 %v244
    %1035 = vmatprep.subr.mxu0 0.0
    %1036 = vmatpush1.msra.mxu0 %v245
    %1037 = vmatprep.subr.mxu0 0.0
    %1038 = vmatpush1.msra.mxu0 %v246
    %1039 = vmatprep.subr.mxu0 0.0
    %1040 = vmatpush1.msra.mxu0 %v247
    %1041 = vmatprep.subr.mxu0 0.0
    %1042 = vmatpush1.msra.mxu0 0.0
    %1043 = vmatprep.subr.mxu0 0.0
    %1044 = vmatpush1.msra.mxu0 0.0
    %1045 = vmatprep.subr.mxu0 0.0
    %1046 = vmatpush1.msra.mxu0 0.0
    %1047 = vmatprep.subr.mxu0 0.0
    %1048 = vmatpush1.msra.mxu0 0.0
    %1049 = vmatprep.subr.mxu0 0.0
    %1050 = vmatpush1.msra.mxu0 0.0
    %1051 = vmatprep.subr.mxu0 0.0
    %1052 = vmatpush1.msra.mxu0 0.0
    %1053 = vmatprep.subr.mxu0 0.0
    %1054 = vmatpush1.msra.mxu0 0.0
    %1055 = vmatprep.subr.mxu0 0.0
    %1056 = vmatpush1.msra.mxu0 0.0
    %1057 = vmatprep.subr.mxu0 0.0
    %1058 = vmatpush1.msra.mxu0 0.0
    %1059 = vmatprep.subr.mxu0 0.0
    %1060 = vmatpush1.msra.mxu0 0.0
    %1061 = vmatprep.subr.mxu0 0.0
    %1062 = vmatpush1.msra.mxu0 0.0
    %1063 = vmatprep.subr.mxu0 0.0
    %1064 = vmatpush1.msra.mxu0 0.0
    %1065 = vmatprep.subr.mxu0 0.0
    %1066 = vmatpush1.msra.mxu0 0.0
    %1067 = vmatprep.subr.mxu0 0.0
    %1068 = vmatpush1.msra.mxu0 0.0
    %1069 = vmatprep.subr.mxu0 0.0
    %1070 = vmatpush1.msra.mxu0 0.0
    %1071 = vmatprep.subr.mxu0 0.0
    %1072 = vmatpush1.msra.mxu0 0.0
    %1073 = vmatprep.subr.mxu0 0.0
    %1074 = vmatpush1.msra.mxu0 0.0
    %1075 = vmatprep.subr.mxu0 0.0
    %1076 = vmatpush1.msra.mxu0 0.0
    %1077 = vmatprep.subr.mxu0 0.0
    %1078 = vmatpush1.msra.mxu0 0.0
    %1079 = vmatprep.subr.mxu0 0.0
    %1080 = vmatpush1.msra.mxu0 0.0
    %1081 = vmatprep.subr.mxu0 0.0
    %1082 = vmatpush1.msra.mxu0 0.0
    %1083 = vmatprep.subr.mxu0 0.0
    %1084 = vmatpush1.msra.mxu0 0.0
    %1085 = vmatprep.subr.mxu0 0.0
    %1086 = vmatpush1.msra.mxu0 0.0
    %1087 = vmatprep.subr.mxu0 0.0
    %1088 = vmatpush1.msra.mxu0 0.0
    %1089 = vmatprep.subr.mxu0 0.0
    %1090 = vmatpush1.msra.mxu0 0.0
    %1091 = vmatprep.subr.mxu0 0.0
    %1092 = vmatpush1.msra.mxu0 0.0
    %1093 = vmatprep.subr.mxu0 0.0
    %1094 = vmatpush1.msra.mxu0 0.0
    %1095 = vmatprep.subr.mxu0 0.0
    %1096 = vmatpush1.msra.mxu0 0.0
    %1097 = vmatprep.mubr.f32.mxu0 0.0
    %1098 = vmatmul.mubr.f32.gmra.mrb[0].mxu0 %v1031
    %v1099 = vpop.f32.mrb[0].mxu0
    %v1100 = vadd.f32 0.0, %v1099
    %v1101 = vpop.f32.mrb[0].mxu0
    %1102 = vdwg.mxu0
    %1104 = vrot.lane.b32.xlu0 %v1027, 32
    %v1105 = vpop.permute.xlu0 %1104
    %v1106 = vsel %vm406, %v1105, 0
    %1108 = vmatprep.subr.mxu0 0.0
    %1109 = vmatpush1.msra.mxu0 %v248
    %1110 = vmatprep.subr.mxu0 0.0
    %1111 = vmatpush1.msra.mxu0 %v249
    %1112 = vmatprep.subr.mxu0 0.0
    %1113 = vmatpush1.msra.mxu0 %v250
    %1114 = vmatprep.subr.mxu0 0.0
    %1115 = vmatpush1.msra.mxu0 %v251
    %1116 = vmatprep.subr.mxu0 0.0
    %1117 = vmatpush1.msra.mxu0 0.0
    %1118 = vmatprep.subr.mxu0 0.0
    %1119 = vmatpush1.msra.mxu0 0.0
    %1120 = vmatprep.subr.mxu0 0.0
    %1121 = vmatpush1.msra.mxu0 0.0
    %1122 = vmatprep.subr.mxu0 0.0
    %1123 = vmatpush1.msra.mxu0 0.0
    %1124 = vmatprep.subr.mxu0 0.0
    %1125 = vmatpush1.msra.mxu0 0.0
    %1126 = vmatprep.subr.mxu0 0.0
    %1127 = vmatpush1.msra.mxu0 0.0
    %1128 = vmatprep.subr.mxu0 0.0
    %1129 = vmatpush1.msra.mxu0 0.0
    %1130 = vmatprep.subr.mxu0 0.0
    %1131 = vmatpush1.msra.mxu0 0.0
    %1132 = vmatprep.subr.mxu0 0.0
    %1133 = vmatpush1.msra.mxu0 0.0
    %1134 = vmatprep.subr.mxu0 0.0
    %1135 = vmatpush1.msra.mxu0 0.0
    %1136 = vmatprep.subr.mxu0 0.0
    %1137 = vmatpush1.msra.mxu0 0.0
    %1138 = vmatprep.subr.mxu0 0.0
    %1139 = vmatpush1.msra.mxu0 0.0
    %1140 = vmatprep.subr.mxu0 0.0
    %1141 = vmatpush1.msra.mxu0 0.0
    %1142 = vmatprep.subr.mxu0 0.0
    %1143 = vmatpush1.msra.mxu0 0.0
    %1144 = vmatprep.subr.mxu0 0.0
    %1145 = vmatpush1.msra.mxu0 0.0
    %1146 = vmatprep.subr.mxu0 0.0
    %1147 = vmatpush1.msra.mxu0 0.0
    %1148 = vmatprep.subr.mxu0 0.0
    %1149 = vmatpush1.msra.mxu0 0.0
    %1150 = vmatprep.subr.mxu0 0.0
    %1151 = vmatpush1.msra.mxu0 0.0
    %1152 = vmatprep.subr.mxu0 0.0
    %1153 = vmatpush1.msra.mxu0 0.0
    %1154 = vmatprep.subr.mxu0 0.0
    %1155 = vmatpush1.msra.mxu0 0.0
    %1156 = vmatprep.subr.mxu0 0.0
    %1157 = vmatpush1.msra.mxu0 0.0
    %1158 = vmatprep.subr.mxu0 0.0
    %1159 = vmatpush1.msra.mxu0 0.0
    %1160 = vmatprep.subr.mxu0 0.0
    %1161 = vmatpush1.msra.mxu0 0.0
    %1162 = vmatprep.subr.mxu0 0.0
    %1163 = vmatpush1.msra.mxu0 0.0
    %1164 = vmatprep.subr.mxu0 0.0
    %1165 = vmatpush1.msra.mxu0 0.0
    %1166 = vmatprep.subr.mxu0 0.0
    %1167 = vmatpush1.msra.mxu0 0.0
    %1168 = vmatprep.subr.mxu0 0.0
    %1169 = vmatpush1.msra.mxu0 0.0
    %1170 = vmatprep.subr.mxu0 0.0
    %1171 = vmatpush1.msra.mxu0 0.0
    %1172 = vmatprep.mubr.f32.mxu0 0.0
    %1173 = vmatmul.mubr.f32.gmra.mrb[0].mxu0 %v1106
    %v1174 = vpop.f32.mrb[0].mxu0
    %v1175 = vadd.f32 %v1100, %v1174
    %v1176 = vpop.f32.mrb[0].mxu0
    %1177 = vdwg.mxu0
    %v1178 = vadd.f32 %v1175, %v264
    %v1179 = vmul.f32 %v1178, %v231
    %v1180 = vtanh.pop %v1179
    %v1181 = vmul.f32 %v1180, %v231
    %v1182 = vadd.f32 %v1181, %v238
    %v1183 = vmul.f32 %v1182, %v928
    %1185 = vrot.lane.b32.xlu0 %v1182, 64
    %v1186 = vpop.permute.xlu0 %1185
    %v1188 = vmul.f32 %v1182, %v1186
    %1190 = vrot.lane.b32.xlu0 %v1188, 32
    %v1191 = vpop.permute.xlu0 %1190
    %v1193 = vadd.f32 %v1183, %v1191
    %v1194 = vtanh.pop %v1193
    %1196 = vrot.lane.b32.xlu0 %v1194, 64
    %v1197 = vpop.permute.xlu0 %1196
    %v1199 = vmul.f32 %v1182, %v1197
    %1200 = vmatprep.subr.mxu0 0.0
    %1201 = vmatpush1.msra.mxu0 %v240
    %1202 = vmatprep.subr.mxu0 0.0
    %1203 = vmatpush1.msra.mxu0 %v241
    %1204 = vmatprep.subr.mxu0 0.0
    %1205 = vmatpush1.msra.mxu0 %v242
    %1206 = vmatprep.subr.mxu0 0.0
    %1207 = vmatpush1.msra.mxu0 %v243
    %1208 = vmatprep.subr.mxu0 0.0
    %1209 = vmatpush1.msra.mxu0 0.0
    %1210 = vmatprep.subr.mxu0 0.0
    %1211 = vmatpush1.msra.mxu0 0.0
    %1212 = vmatprep.subr.mxu0 0.0
    %1213 = vmatpush1.msra.mxu0 0.0
    %1214 = vmatprep.subr.mxu0 0.0
    %1215 = vmatpush1.msra.mxu0 0.0
    %1216 = vmatprep.subr.mxu0 0.0
    %1217 = vmatpush1.msra.mxu0 0.0
    %1218 = vmatprep.subr.mxu0 0.0
    %1219 = vmatpush1.msra.mxu0 0.0
    %1220 = vmatprep.subr.mxu0 0.0
    %1221 = vmatpush1.msra.mxu0 0.0
    %1222 = vmatprep.subr.mxu0 0.0
    %1223 = vmatpush1.msra.mxu0 0.0
    %1224 = vmatprep.subr.mxu0 0.0
    %1225 = vmatpush1.msra.mxu0 0.0
    %1226 = vmatprep.subr.mxu0 0.0
    %1227 = vmatpush1.msra.mxu0 0.0
    %1228 = vmatprep.subr.mxu0 0.0
    %1229 = vmatpush1.msra.mxu0 0.0
    %1230 = vmatprep.subr.mxu0 0.0
    %1231 = vmatpush1.msra.mxu0 0.0
    %1232 = vmatprep.subr.mxu0 0.0
    %1233 = vmatpush1.msra.mxu0 0.0
    %1234 = vmatprep.subr.mxu0 0.0
    %1235 = vmatpush1.msra.mxu0 0.0
    %1236 = vmatprep.subr.mxu0 0.0
    %1237 = vmatpush1.msra.mxu0 0.0
    %1238 = vmatprep.subr.mxu0 0.0
    %1239 = vmatpush1.msra.mxu0 0.0
    %1240 = vmatprep.subr.mxu0 0.0
    %1241 = vmatpush1.msra.mxu0 0.0
    %1242 = vmatprep.subr.mxu0 0.0
    %1243 = vmatpush1.msra.mxu0 0.0
    %1244 = vmatprep.subr.mxu0 0.0
    %1245 = vmatpush1.msra.mxu0 0.0
    %1246 = vmatprep.subr.mxu0 0.0
    %1247 = vmatpush1.msra.mxu0 0.0
    %1248 = vmatprep.subr.mxu0 0.0
    %1249 = vmatpush1.msra.mxu0 0.0
    %1250 = vmatprep.subr.mxu0 0.0
    %1251 = vmatpush1.msra.mxu0 0.0
    %1252 = vmatprep.subr.mxu0 0.0
    %1253 = vmatpush1.msra.mxu0 0.0
    %1254 = vmatprep.subr.mxu0 0.0
    %1255 = vmatpush1.msra.mxu0 0.0
    %1256 = vmatprep.subr.mxu0 0.0
    %1257 = vmatpush1.msra.mxu0 0.0
    %1258 = vmatprep.subr.mxu0 0.0
    %1259 = vmatpush1.msra.mxu0 0.0
    %1260 = vmatprep.subr.mxu0 0.0
    %1261 = vmatpush1.msra.mxu0 0.0
    %1262 = vmatprep.subr.mxu0 0.0
    %1263 = vmatpush1.msra.mxu0 0.0
    %1264 = vmatprep.mubr.f32.mxu0 0.0
    %1265 = vmatmul.mubr.f32.gmra.mrb[0].mxu0 %v1106
    %v1266 = vpop.f32.mrb[0].mxu0
    %v1267 = vadd.f32 0.0, %v1266
    %v1268 = vpop.f32.mrb[0].mxu0
    %1269 = vdwg.mxu0
    %v1270 = vadd.f32 %v383, %v1267
    %v1271 = vadd.f32 %v1270, %v257
    %v1272 = vmul.f32 %v1271, %v231
    %v1273 = vtanh.pop %v1272
    %v1274 = vmul.f32 %v1273, %v231
    %v1275 = vadd.f32 %v1274, %v238
    %v1276 = vmul.f32 %v1275, %v1021
    %1278 = vrot.lane.b32.xlu0 %v1275, 64
    %v1279 = vpop.permute.xlu0 %1278
    %v1281 = vmul.f32 %v1275, %v1279
    %1283 = vrot.lane.b32.xlu0 %v1281, 32
    %v1284 = vpop.permute.xlu0 %1283
    %v1286 = vadd.f32 %v1276, %v1284
    %v1287 = vtanh.pop %v1286
    %1289 = vrot.lane.b32.xlu0 %v1287, 64
    %v1290 = vpop.permute.xlu0 %1289
    %v1292 = vmul.f32 %v1275, %v1290
    %1294 = vrot.lane.b32.xlu0 %v1199, 32
    %v1295 = vpop.permute.xlu0 %1294
    %v1296 = vsel %vm406, %v1295, 0
    %1298 = vmatprep.subr.mxu0 0.0
    %1299 = vmatpush1.msra.mxu0 %v244
    %1300 = vmatprep.subr.mxu0 0.0
    %1301 = vmatpush1.msra.mxu0 %v245
    %1302 = vmatprep.subr.mxu0 0.0
    %1303 = vmatpush1.msra.mxu0 %v246
    %1304 = vmatprep.subr.mxu0 0.0
    %1305 = vmatpush1.msra.mxu0 %v247
    %1306 = vmatprep.subr.mxu0 0.0
    %1307 = vmatpush1.msra.mxu0 0.0
    %1308 = vmatprep.subr.mxu0 0.0
    %1309 = vmatpush1.msra.mxu0 0.0
    %1310 = vmatprep.subr.mxu0 0.0
    %1311 = vmatpush1.msra.mxu0 0.0
    %1312 = vmatprep.subr.mxu0 0.0
    %1313 = vmatpush1.msra.mxu0 0.0
    %1314 = vmatprep.subr.mxu0 0.0
    %1315 = vmatpush1.msra.mxu0 0.0
    %1316 = vmatprep.subr.mxu0 0.0
    %1317 = vmatpush1.msra.mxu0 0.0
    %1318 = vmatprep.subr.mxu0 0.0
    %1319 = vmatpush1.msra.mxu0 0.0
    %1320 = vmatprep.subr.mxu0 0.0
    %1321 = vmatpush1.msra.mxu0 0.0
    %1322 = vmatprep.subr.mxu0 0.0
    %1323 = vmatpush1.msra.mxu0 0.0
    %1324 = vmatprep.subr.mxu0 0.0
    %1325 = vmatpush1.msra.mxu0 0.0
    %1326 = vmatprep.subr.mxu0 0.0
    %1327 = vmatpush1.msra.mxu0 0.0
    %1328 = vmatprep.subr.mxu0 0.0
    %1329 = vmatpush1.msra.mxu0 0.0
    %1330 = vmatprep.subr.mxu0 0.0
    %1331 = vmatpush1.msra.mxu0 0.0
    %1332 = vmatprep.subr.mxu0 0.0
    %1333 = vmatpush1.msra.mxu0 0.0
    %1334 = vmatprep.subr.mxu0 0.0
    %1335 = vmatpush1.msra.mxu0 0.0
    %1336 = vmatprep.subr.mxu0 0.0
    %1337 = vmatpush1.msra.mxu0 0.0
    %1338 = vmatprep.subr.mxu0 0.0
    %1339 = vmatpush1.msra.mxu0 0.0
    %1340 = vmatprep.subr.mxu0 0.0
    %1341 = vmatpush1.msra.mxu0 0.0
    %1342 = vmatprep.subr.mxu0 0.0
    %1343 = vmatpush1.msra.mxu0 0.0
    %1344 = vmatprep.subr.mxu0 0.0
    %1345 = vmatpush1.msra.mxu0 0.0
    %1346 = vmatprep.subr.mxu0 0.0
    %1347 = vmatpush1.msra.mxu0 0.0
    %1348 = vmatprep.subr.mxu0 0.0
    %1349 = vmatpush1.msra.mxu0 0.0
    %1350 = vmatprep.subr.mxu0 0.0
    %1351 = vmatpush1.msra.mxu0 0.0
    %1352 = vmatprep.subr.mxu0 0.0
    %1353 = vmatpush1.msra.mxu0 0.0
    %1354 = vmatprep.subr.mxu0 0.0
    %1355 = vmatpush1.msra.mxu0 0.0
    %1356 = vmatprep.subr.mxu0 0.0
    %1357 = vmatpush1.msra.mxu0 0.0
    %1358 = vmatprep.subr.mxu0 0.0
    %1359 = vmatpush1.msra.mxu0 0.0
    %1360 = vmatprep.subr.mxu0 0.0
    %1361 = vmatpush1.msra.mxu0 0.0
    %1362 = vmatprep.mubr.f32.mxu0 0.0
    %1363 = vmatmul.mubr.f32.gmra.mrb[0].mxu0 %v1296
    %v1364 = vpop.f32.mrb[0].mxu0
    %v1365 = vadd.f32 0.0, %v1364
    %v1366 = vpop.f32.mrb[0].mxu0
    %1367 = vdwg.mxu0
    %1369 = vrot.lane.b32.xlu0 %v1292, 32
    %v1370 = vpop.permute.xlu0 %1369
    %v1371 = vsel %vm406, %v1370, 0
    %1373 = vmatprep.subr.mxu0 0.0
    %1374 = vmatpush1.msra.mxu0 %v248
    %1375 = vmatprep.subr.mxu0 0.0
    %1376 = vmatpush1.msra.mxu0 %v249
    %1377 = vmatprep.subr.mxu0 0.0
    %1378 = vmatpush1.msra.mxu0 %v250
    %1379 = vmatprep.subr.mxu0 0.0
    %1380 = vmatpush1.msra.mxu0 %v251
    %1381 = vmatprep.subr.mxu0 0.0
    %1382 = vmatpush1.msra.mxu0 0.0
    %1383 = vmatprep.subr.mxu0 0.0
    %1384 = vmatpush1.msra.mxu0 0.0
    %1385 = vmatprep.subr.mxu0 0.0
    %1386 = vmatpush1.msra.mxu0 0.0
    %1387 = vmatprep.subr.mxu0 0.0
    %1388 = vmatpush1.msra.mxu0 0.0
    %1389 = vmatprep.subr.mxu0 0.0
    %1390 = vmatpush1.msra.mxu0 0.0
    %1391 = vmatprep.subr.mxu0 0.0
    %1392 = vmatpush1.msra.mxu0 0.0
    %1393 = vmatprep.subr.mxu0 0.0
    %1394 = vmatpush1.msra.mxu0 0.0
    %1395 = vmatprep.subr.mxu0 0.0
    %1396 = vmatpush1.msra.mxu0 0.0
    %1397 = vmatprep.subr.mxu0 0.0
    %1398 = vmatpush1.msra.mxu0 0.0
    %1399 = vmatprep.subr.mxu0 0.0
    %1400 = vmatpush1.msra.mxu0 0.0
    %1401 = vmatprep.subr.mxu0 0.0
    %1402 = vmatpush1.msra.mxu0 0.0
    %1403 = vmatprep.subr.mxu0 0.0
    %1404 = vmatpush1.msra.mxu0 0.0
    %1405 = vmatprep.subr.mxu0 0.0
    %1406 = vmatpush1.msra.mxu0 0.0
    %1407 = vmatprep.subr.mxu0 0.0
    %1408 = vmatpush1.msra.mxu0 0.0
    %1409 = vmatprep.subr.mxu0 0.0
    %1410 = vmatpush1.msra.mxu0 0.0
    %1411 = vmatprep.subr.mxu0 0.0
    %1412 = vmatpush1.msra.mxu0 0.0
    %1413 = vmatprep.subr.mxu0 0.0
    %1414 = vmatpush1.msra.mxu0 0.0
    %1415 = vmatprep.subr.mxu0 0.0
    %1416 = vmatpush1.msra.mxu0 0.0
    %1417 = vmatprep.subr.mxu0 0.0
    %1418 = vmatpush1.msra.mxu0 0.0
    %1419 = vmatprep.subr.mxu0 0.0
    %1420 = vmatpush1.msra.mxu0 0.0
    %1421 = vmatprep.subr.mxu0 0.0
    %1422 = vmatpush1.msra.mxu0 0.0
    %1423 = vmatprep.subr.mxu0 0.0
    %1424 = vmatpush1.msra.mxu0 0.0
    %1425 = vmatprep.subr.mxu0 0.0
    %1426 = vmatpush1.msra.mxu0 0.0
    %1427 = vmatprep.subr.mxu0 0.0
    %1428 = vmatpush1.msra.mxu0 0.0
    %1429 = vmatprep.subr.mxu0 0.0
    %1430 = vmatpush1.msra.mxu0 0.0
    %1431 = vmatprep.subr.mxu0 0.0
    %1432 = vmatpush1.msra.mxu0 0.0
    %1433 = vmatprep.subr.mxu0 0.0
    %1434 = vmatpush1.msra.mxu0 0.0
    %1435 = vmatprep.subr.mxu0 0.0
    %1436 = vmatpush1.msra.mxu0 0.0
    %1437 = vmatprep.mubr.f32.mxu0 0.0
    %1438 = vmatmul.mubr.f32.gmra.mrb[0].mxu0 %v1371
    %v1439 = vpop.f32.mrb[0].mxu0
    %v1440 = vadd.f32 %v1365, %v1439
    %v1441 = vpop.f32.mrb[0].mxu0
    %1442 = vdwg.mxu0
    %v1443 = vadd.f32 %v1440, %v264
    %v1444 = vmul.f32 %v1443, %v231
    %v1445 = vtanh.pop %v1444
    %v1446 = vmul.f32 %v1445, %v231
    %v1447 = vadd.f32 %v1446, %v238
    %v1448 = vmul.f32 %v1447, %v1193
    %1450 = vrot.lane.b32.xlu0 %v1447, 64
    %v1451 = vpop.permute.xlu0 %1450
    %v1453 = vmul.f32 %v1447, %v1451
    %1455 = vrot.lane.b32.xlu0 %v1453, 32
    %v1456 = vpop.permute.xlu0 %1455
    %v1458 = vadd.f32 %v1448, %v1456
    %v1459 = vtanh.pop %v1458
    %1461 = vrot.lane.b32.xlu0 %v1459, 64
    %v1462 = vpop.permute.xlu0 %1461
    %v1464 = vmul.f32 %v1447, %v1462
    %1465 = vmatprep.subr.mxu0 0.0
    %1466 = vmatpush1.msra.mxu0 %v240
    %1467 = vmatprep.subr.mxu0 0.0
    %1468 = vmatpush1.msra.mxu0 %v241
    %1469 = vmatprep.subr.mxu0 0.0
    %1470 = vmatpush1.msra.mxu0 %v242
    %1471 = vmatprep.subr.mxu0 0.0
    %1472 = vmatpush1.msra.mxu0 %v243
    %1473 = vmatprep.subr.mxu0 0.0
    %1474 = vmatpush1.msra.mxu0 0.0
    %1475 = vmatprep.subr.mxu0 0.0
    %1476 = vmatpush1.msra.mxu0 0.0
    %1477 = vmatprep.subr.mxu0 0.0
    %1478 = vmatpush1.msra.mxu0 0.0
    %1479 = vmatprep.subr.mxu0 0.0
    %1480 = vmatpush1.msra.mxu0 0.0
    %1481 = vmatprep.subr.mxu0 0.0
    %1482 = vmatpush1.msra.mxu0 0.0
    %1483 = vmatprep.subr.mxu0 0.0
    %1484 = vmatpush1.msra.mxu0 0.0
    %1485 = vmatprep.subr.mxu0 0.0
    %1486 = vmatpush1.msra.mxu0 0.0
    %1487 = vmatprep.subr.mxu0 0.0
    %1488 = vmatpush1.msra.mxu0 0.0
    %1489 = vmatprep.subr.mxu0 0.0
    %1490 = vmatpush1.msra.mxu0 0.0
    %1491 = vmatprep.subr.mxu0 0.0
    %1492 = vmatpush1.msra.mxu0 0.0
    %1493 = vmatprep.subr.mxu0 0.0
    %1494 = vmatpush1.msra.mxu0 0.0
    %1495 = vmatprep.subr.mxu0 0.0
    %1496 = vmatpush1.msra.mxu0 0.0
    %1497 = vmatprep.subr.mxu0 0.0
    %1498 = vmatpush1.msra.mxu0 0.0
    %1499 = vmatprep.subr.mxu0 0.0
    %1500 = vmatpush1.msra.mxu0 0.0
    %1501 = vmatprep.subr.mxu0 0.0
    %1502 = vmatpush1.msra.mxu0 0.0
    %1503 = vmatprep.subr.mxu0 0.0
    %1504 = vmatpush1.msra.mxu0 0.0
    %1505 = vmatprep.subr.mxu0 0.0
    %1506 = vmatpush1.msra.mxu0 0.0
    %1507 = vmatprep.subr.mxu0 0.0
    %1508 = vmatpush1.msra.mxu0 0.0
    %1509 = vmatprep.subr.mxu0 0.0
    %1510 = vmatpush1.msra.mxu0 0.0
    %1511 = vmatprep.subr.mxu0 0.0
    %1512 = vmatpush1.msra.mxu0 0.0
    %1513 = vmatprep.subr.mxu0 0.0
    %1514 = vmatpush1.msra.mxu0 0.0
    %1515 = vmatprep.subr.mxu0 0.0
    %1516 = vmatpush1.msra.mxu0 0.0
    %1517 = vmatprep.subr.mxu0 0.0
    %1518 = vmatpush1.msra.mxu0 0.0
    %1519 = vmatprep.subr.mxu0 0.0
    %1520 = vmatpush1.msra.mxu0 0.0
    %1521 = vmatprep.subr.mxu0 0.0
    %1522 = vmatpush1.msra.mxu0 0.0
    %1523 = vmatprep.subr.mxu0 0.0
    %1524 = vmatpush1.msra.mxu0 0.0
    %1525 = vmatprep.subr.mxu0 0.0
    %1526 = vmatpush1.msra.mxu0 0.0
    %1527 = vmatprep.subr.mxu0 0.0
    %1528 = vmatpush1.msra.mxu0 0.0
    %1529 = vmatprep.mubr.f32.mxu0 0.0
    %1530 = vmatmul.mubr.f32.gmra.mrb[0].mxu0 %v1371
    %v1531 = vpop.f32.mrb[0].mxu0
    %v1532 = vadd.f32 0.0, %v1531
    %v1533 = vpop.f32.mrb[0].mxu0
    %1534 = vdwg.mxu0
    %v1535 = vadd.f32 %v388, %v1532
    %v1536 = vadd.f32 %v1535, %v257
    %v1537 = vmul.f32 %v1536, %v231
    %v1538 = vtanh.pop %v1537
    %v1539 = vmul.f32 %v1538, %v231
    %v1540 = vadd.f32 %v1539, %v238
    %v1541 = vmul.f32 %v1540, %v1286
    %1543 = vrot.lane.b32.xlu0 %v1540, 64
    %v1544 = vpop.permute.xlu0 %1543
    %v1546 = vmul.f32 %v1540, %v1544
    %1548 = vrot.lane.b32.xlu0 %v1546, 32
    %v1549 = vpop.permute.xlu0 %1548
    %v1551 = vadd.f32 %v1541, %v1549
    %v1552 = vtanh.pop %v1551
    %1554 = vrot.lane.b32.xlu0 %v1552, 64
    %v1555 = vpop.permute.xlu0 %1554
    %v1557 = vmul.f32 %v1540, %v1555
    %1559 = vrot.lane.b32.xlu0 %v1464, 32
    %v1560 = vpop.permute.xlu0 %1559
    %v1561 = vsel %vm406, %v1560, 0
    %1563 = vmatprep.subr.mxu0 0.0
    %1564 = vmatpush1.msra.mxu0 %v244
    %1565 = vmatprep.subr.mxu0 0.0
    %1566 = vmatpush1.msra.mxu0 %v245
    %1567 = vmatprep.subr.mxu0 0.0
    %1568 = vmatpush1.msra.mxu0 %v246
    %1569 = vmatprep.subr.mxu0 0.0
    %1570 = vmatpush1.msra.mxu0 %v247
    %1571 = vmatprep.subr.mxu0 0.0
    %1572 = vmatpush1.msra.mxu0 0.0
    %1573 = vmatprep.subr.mxu0 0.0
    %1574 = vmatpush1.msra.mxu0 0.0
    %1575 = vmatprep.subr.mxu0 0.0
    %1576 = vmatpush1.msra.mxu0 0.0
    %1577 = vmatprep.subr.mxu0 0.0
    %1578 = vmatpush1.msra.mxu0 0.0
    %1579 = vmatprep.subr.mxu0 0.0
    %1580 = vmatpush1.msra.mxu0 0.0
    %1581 = vmatprep.subr.mxu0 0.0
    %1582 = vmatpush1.msra.mxu0 0.0
    %1583 = vmatprep.subr.mxu0 0.0
    %1584 = vmatpush1.msra.mxu0 0.0
    %1585 = vmatprep.subr.mxu0 0.0
    %1586 = vmatpush1.msra.mxu0 0.0
    %1587 = vmatprep.subr.mxu0 0.0
    %1588 = vmatpush1.msra.mxu0 0.0
    %1589 = vmatprep.subr.mxu0 0.0
    %1590 = vmatpush1.msra.mxu0 0.0
    %1591 = vmatprep.subr.mxu0 0.0
    %1592 = vmatpush1.msra.mxu0 0.0
    %1593 = vmatprep.subr.mxu0 0.0
    %1594 = vmatpush1.msra.mxu0 0.0
    %1595 = vmatprep.subr.mxu0 0.0
    %1596 = vmatpush1.msra.mxu0 0.0
    %1597 = vmatprep.subr.mxu0 0.0
    %1598 = vmatpush1.msra.mxu0 0.0
    %1599 = vmatprep.subr.mxu0 0.0
    %1600 = vmatpush1.msra.mxu0 0.0
    %1601 = vmatprep.subr.mxu0 0.0
    %1602 = vmatpush1.msra.mxu0 0.0
    %1603 = vmatprep.subr.mxu0 0.0
    %1604 = vmatpush1.msra.mxu0 0.0
    %1605 = vmatprep.subr.mxu0 0.0
    %1606 = vmatpush1.msra.mxu0 0.0
    %1607 = vmatprep.subr.mxu0 0.0
    %1608 = vmatpush1.msra.mxu0 0.0
    %1609 = vmatprep.subr.mxu0 0.0
    %1610 = vmatpush1.msra.mxu0 0.0
    %1611 = vmatprep.subr.mxu0 0.0
    %1612 = vmatpush1.msra.mxu0 0.0
    %1613 = vmatprep.subr.mxu0 0.0
    %1614 = vmatpush1.msra.mxu0 0.0
    %1615 = vmatprep.subr.mxu0 0.0
    %1616 = vmatpush1.msra.mxu0 0.0
    %1617 = vmatprep.subr.mxu0 0.0
    %1618 = vmatpush1.msra.mxu0 0.0
    %1619 = vmatprep.subr.mxu0 0.0
    %1620 = vmatpush1.msra.mxu0 0.0
    %1621 = vmatprep.subr.mxu0 0.0
    %1622 = vmatpush1.msra.mxu0 0.0
    %1623 = vmatprep.subr.mxu0 0.0
    %1624 = vmatpush1.msra.mxu0 0.0
    %1625 = vmatprep.subr.mxu0 0.0
    %1626 = vmatpush1.msra.mxu0 0.0
    %1627 = vmatprep.mubr.f32.mxu0 0.0
    %1628 = vmatmul.mubr.f32.gmra.mrb[0].mxu0 %v1561
    %v1629 = vpop.f32.mrb[0].mxu0
    %v1630 = vadd.f32 0.0, %v1629
    %v1631 = vpop.f32.mrb[0].mxu0
    %1632 = vdwg.mxu0
    %1634 = vrot.lane.b32.xlu0 %v1557, 32
    %v1635 = vpop.permute.xlu0 %1634
    %v1636 = vsel %vm406, %v1635, 0
    %1638 = vmatprep.subr.mxu0 0.0
    %1639 = vmatpush1.msra.mxu0 %v248
    %1640 = vmatprep.subr.mxu0 0.0
    %1641 = vmatpush1.msra.mxu0 %v249
    %1642 = vmatprep.subr.mxu0 0.0
    %1643 = vmatpush1.msra.mxu0 %v250
    %1644 = vmatprep.subr.mxu0 0.0
    %1645 = vmatpush1.msra.mxu0 %v251
    %1646 = vmatprep.subr.mxu0 0.0
    %1647 = vmatpush1.msra.mxu0 0.0
    %1648 = vmatprep.subr.mxu0 0.0
    %1649 = vmatpush1.msra.mxu0 0.0
    %1650 = vmatprep.subr.mxu0 0.0
    %1651 = vmatpush1.msra.mxu0 0.0
    %1652 = vmatprep.subr.mxu0 0.0
    %1653 = vmatpush1.msra.mxu0 0.0
    %1654 = vmatprep.subr.mxu0 0.0
    %1655 = vmatpush1.msra.mxu0 0.0
    %1656 = vmatprep.subr.mxu0 0.0
    %1657 = vmatpush1.msra.mxu0 0.0
    %1658 = vmatprep.subr.mxu0 0.0
    %1659 = vmatpush1.msra.mxu0 0.0
    %1660 = vmatprep.subr.mxu0 0.0
    %1661 = vmatpush1.msra.mxu0 0.0
    %1662 = vmatprep.subr.mxu0 0.0
    %1663 = vmatpush1.msra.mxu0 0.0
    %1664 = vmatprep.subr.mxu0 0.0
    %1665 = vmatpush1.msra.mxu0 0.0
    %1666 = vmatprep.subr.mxu0 0.0
    %1667 = vmatpush1.msra.mxu0 0.0
    %1668 = vmatprep.subr.mxu0 0.0
    %1669 = vmatpush1.msra.mxu0 0.0
    %1670 = vmatprep.subr.mxu0 0.0
    %1671 = vmatpush1.msra.mxu0 0.0
    %1672 = vmatprep.subr.mxu0 0.0
    %1673 = vmatpush1.msra.mxu0 0.0
    %1674 = vmatprep.subr.mxu0 0.0
    %1675 = vmatpush1.msra.mxu0 0.0
    %1676 = vmatprep.subr.mxu0 0.0
    %1677 = vmatpush1.msra.mxu0 0.0
    %1678 = vmatprep.subr.mxu0 0.0
    %1679 = vmatpush1.msra.mxu0 0.0
    %1680 = vmatprep.subr.mxu0 0.0
    %1681 = vmatpush1.msra.mxu0 0.0
    %1682 = vmatprep.subr.mxu0 0.0
    %1683 = vmatpush1.msra.mxu0 0.0
    %1684 = vmatprep.subr.mxu0 0.0
    %1685 = vmatpush1.msra.mxu0 0.0
    %1686 = vmatprep.subr.mxu0 0.0
    %1687 = vmatpush1.msra.mxu0 0.0
    %1688 = vmatprep.subr.mxu0 0.0
    %1689 = vmatpush1.msra.mxu0 0.0
    %1690 = vmatprep.subr.mxu0 0.0
    %1691 = vmatpush1.msra.mxu0 0.0
    %1692 = vmatprep.subr.mxu0 0.0
    %1693 = vmatpush1.msra.mxu0 0.0
    %1694 = vmatprep.subr.mxu0 0.0
    %1695 = vmatpush1.msra.mxu0 0.0
    %1696 = vmatprep.subr.mxu0 0.0
    %1697 = vmatpush1.msra.mxu0 0.0
    %1698 = vmatprep.subr.mxu0 0.0
    %1699 = vmatpush1.msra.mxu0 0.0
    %1700 = vmatprep.subr.mxu0 0.0
    %1701 = vmatpush1.msra.mxu0 0.0
    %1702 = vmatprep.mubr.f32.mxu0 0.0
    %1703 = vmatmul.mubr.f32.gmra.mrb[0].mxu0 %v1636
    %v1704 = vpop.f32.mrb[0].mxu0
    %v1705 = vadd.f32 %v1630, %v1704
    %v1706 = vpop.f32.mrb[0].mxu0
    %1707 = vdwg.mxu0
    %v1708 = vadd.f32 %v1705, %v264
    %v1709 = vmul.f32 %v1708, %v231
    %v1710 = vtanh.pop %v1709
    %v1711 = vmul.f32 %v1710, %v231
    %v1712 = vadd.f32 %v1711, %v238
    %v1713 = vmul.f32 %v1712, %v1458
    %1715 = vrot.lane.b32.xlu0 %v1712, 64
    %v1716 = vpop.permute.xlu0 %1715
    %v1718 = vmul.f32 %v1712, %v1716
    %1720 = vrot.lane.b32.xlu0 %v1718, 32
    %v1721 = vpop.permute.xlu0 %1720
    %v1723 = vadd.f32 %v1713, %v1721
    %v1724 = vtanh.pop %v1723
    %1726 = vrot.lane.b32.xlu0 %v1724, 64
    %v1727 = vpop.permute.xlu0 %1726
    %v1729 = vmul.f32 %v1712, %v1727
    %1730 = vmatprep.subr.mxu0 0.0
    %1731 = vmatpush1.msra.mxu0 %v240
    %1732 = vmatprep.subr.mxu0 0.0
    %1733 = vmatpush1.msra.mxu0 %v241
    %1734 = vmatprep.subr.mxu0 0.0
    %1735 = vmatpush1.msra.mxu0 %v242
    %1736 = vmatprep.subr.mxu0 0.0
    %1737 = vmatpush1.msra.mxu0 %v243
    %1738 = vmatprep.subr.mxu0 0.0
    %1739 = vmatpush1.msra.mxu0 0.0
    %1740 = vmatprep.subr.mxu0 0.0
    %1741 = vmatpush1.msra.mxu0 0.0
    %1742 = vmatprep.subr.mxu0 0.0
    %1743 = vmatpush1.msra.mxu0 0.0
    %1744 = vmatprep.subr.mxu0 0.0
    %1745 = vmatpush1.msra.mxu0 0.0
    %1746 = vmatprep.subr.mxu0 0.0
    %1747 = vmatpush1.msra.mxu0 0.0
    %1748 = vmatprep.subr.mxu0 0.0
    %1749 = vmatpush1.msra.mxu0 0.0
    %1750 = vmatprep.subr.mxu0 0.0
    %1751 = vmatpush1.msra.mxu0 0.0
    %1752 = vmatprep.subr.mxu0 0.0
    %1753 = vmatpush1.msra.mxu0 0.0
    %1754 = vmatprep.subr.mxu0 0.0
    %1755 = vmatpush1.msra.mxu0 0.0
    %1756 = vmatprep.subr.mxu0 0.0
    %1757 = vmatpush1.msra.mxu0 0.0
    %1758 = vmatprep.subr.mxu0 0.0
    %1759 = vmatpush1.msra.mxu0 0.0
    %1760 = vmatprep.subr.mxu0 0.0
    %1761 = vmatpush1.msra.mxu0 0.0
    %1762 = vmatprep.subr.mxu0 0.0
    %1763 = vmatpush1.msra.mxu0 0.0
    %1764 = vmatprep.subr.mxu0 0.0
    %1765 = vmatpush1.msra.mxu0 0.0
    %1766 = vmatprep.subr.mxu0 0.0
    %1767 = vmatpush1.msra.mxu0 0.0
    %1768 = vmatprep.subr.mxu0 0.0
    %1769 = vmatpush1.msra.mxu0 0.0
    %1770 = vmatprep.subr.mxu0 0.0
    %1771 = vmatpush1.msra.mxu0 0.0
    %1772 = vmatprep.subr.mxu0 0.0
    %1773 = vmatpush1.msra.mxu0 0.0
    %1774 = vmatprep.subr.mxu0 0.0
    %1775 = vmatpush1.msra.mxu0 0.0
    %1776 = vmatprep.subr.mxu0 0.0
    %1777 = vmatpush1.msra.mxu0 0.0
    %1778 = vmatprep.subr.mxu0 0.0
    %1779 = vmatpush1.msra.mxu0 0.0
    %1780 = vmatprep.subr.mxu0 0.0
    %1781 = vmatpush1.msra.mxu0 0.0
    %1782 = vmatprep.subr.mxu0 0.0
    %1783 = vmatpush1.msra.mxu0 0.0
    %1784 = vmatprep.subr.mxu0 0.0
    %1785 = vmatpush1.msra.mxu0 0.0
    %1786 = vmatprep.subr.mxu0 0.0
    %1787 = vmatpush1.msra.mxu0 0.0
    %1788 = vmatprep.subr.mxu0 0.0
    %1789 = vmatpush1.msra.mxu0 0.0
    %1790 = vmatprep.subr.mxu0 0.0
    %1791 = vmatpush1.msra.mxu0 0.0
    %1792 = vmatprep.subr.mxu0 0.0
    %1793 = vmatpush1.msra.mxu0 0.0
    %1794 = vmatprep.mubr.f32.mxu0 0.0
    %1795 = vmatmul.mubr.f32.gmra.mrb[0].mxu0 %v1636
    %v1796 = vpop.f32.mrb[0].mxu0
    %v1797 = vadd.f32 0.0, %v1796
    %v1798 = vpop.f32.mrb[0].mxu0
    %1799 = vdwg.mxu0
    %v1800 = vadd.f32 %v393, %v1797
    %v1801 = vadd.f32 %v1800, %v257
    %v1802 = vmul.f32 %v1801, %v231
    %v1803 = vtanh.pop %v1802
    %v1804 = vmul.f32 %v1803, %v231
    %v1805 = vadd.f32 %v1804, %v238
    %v1806 = vmul.f32 %v1805, %v1551
    %1808 = vrot.lane.b32.xlu0 %v1805, 64
    %v1809 = vpop.permute.xlu0 %1808
    %v1811 = vmul.f32 %v1805, %v1809
    %1813 = vrot.lane.b32.xlu0 %v1811, 32
    %v1814 = vpop.permute.xlu0 %1813
    %v1816 = vadd.f32 %v1806, %v1814
    %v1817 = vtanh.pop %v1816
    %1819 = vrot.lane.b32.xlu0 %v1817, 64
    %v1820 = vpop.permute.xlu0 %1819
    %v1822 = vmul.f32 %v1805, %v1820
    %1824 = vrot.lane.b32.xlu0 %v1729, 32
    %v1825 = vpop.permute.xlu0 %1824
    %v1826 = vsel %vm406, %v1825, 0
    %1828 = vmatprep.subr.mxu0 0.0
    %1829 = vmatpush1.msra.mxu0 %v244
    %1830 = vmatprep.subr.mxu0 0.0
    %1831 = vmatpush1.msra.mxu0 %v245
    %1832 = vmatprep.subr.mxu0 0.0
    %1833 = vmatpush1.msra.mxu0 %v246
    %1834 = vmatprep.subr.mxu0 0.0
    %1835 = vmatpush1.msra.mxu0 %v247
    %1836 = vmatprep.subr.mxu0 0.0
    %1837 = vmatpush1.msra.mxu0 0.0
    %1838 = vmatprep.subr.mxu0 0.0
    %1839 = vmatpush1.msra.mxu0 0.0
    %1840 = vmatprep.subr.mxu0 0.0
    %1841 = vmatpush1.msra.mxu0 0.0
    %1842 = vmatprep.subr.mxu0 0.0
    %1843 = vmatpush1.msra.mxu0 0.0
    %1844 = vmatprep.subr.mxu0 0.0
    %1845 = vmatpush1.msra.mxu0 0.0
    %1846 = vmatprep.subr.mxu0 0.0
    %1847 = vmatpush1.msra.mxu0 0.0
    %1848 = vmatprep.subr.mxu0 0.0
    %1849 = vmatpush1.msra.mxu0 0.0
    %1850 = vmatprep.subr.mxu0 0.0
    %1851 = vmatpush1.msra.mxu0 0.0
    %1852 = vmatprep.subr.mxu0 0.0
    %1853 = vmatpush1.msra.mxu0 0.0
    %1854 = vmatprep.subr.mxu0 0.0
    %1855 = vmatpush1.msra.mxu0 0.0
    %1856 = vmatprep.subr.mxu0 0.0
    %1857 = vmatpush1.msra.mxu0 0.0
    %1858 = vmatprep.subr.mxu0 0.0
    %1859 = vmatpush1.msra.mxu0 0.0
    %1860 = vmatprep.subr.mxu0 0.0
    %1861 = vmatpush1.msra.mxu0 0.0
    %1862 = vmatprep.subr.mxu0 0.0
    %1863 = vmatpush1.msra.mxu0 0.0
    %1864 = vmatprep.subr.mxu0 0.0
    %1865 = vmatpush1.msra.mxu0 0.0
    %1866 = vmatprep.subr.mxu0 0.0
    %1867 = vmatpush1.msra.mxu0 0.0
    %1868 = vmatprep.subr.mxu0 0.0
    %1869 = vmatpush1.msra.mxu0 0.0
    %1870 = vmatprep.subr.mxu0 0.0
    %1871 = vmatpush1.msra.mxu0 0.0
    %1872 = vmatprep.subr.mxu0 0.0
    %1873 = vmatpush1.msra.mxu0 0.0
    %1874 = vmatprep.subr.mxu0 0.0
    %1875 = vmatpush1.msra.mxu0 0.0
    %1876 = vmatprep.subr.mxu0 0.0
    %1877 = vmatpush1.msra.mxu0 0.0
    %1878 = vmatprep.subr.mxu0 0.0
    %1879 = vmatpush1.msra.mxu0 0.0
    %1880 = vmatprep.subr.mxu0 0.0
    %1881 = vmatpush1.msra.mxu0 0.0
    %1882 = vmatprep.subr.mxu0 0.0
    %1883 = vmatpush1.msra.mxu0 0.0
    %1884 = vmatprep.subr.mxu0 0.0
    %1885 = vmatpush1.msra.mxu0 0.0
    %1886 = vmatprep.subr.mxu0 0.0
    %1887 = vmatpush1.msra.mxu0 0.0
    %1888 = vmatprep.subr.mxu0 0.0
    %1889 = vmatpush1.msra.mxu0 0.0
    %1890 = vmatprep.subr.mxu0 0.0
    %1891 = vmatpush1.msra.mxu0 0.0
    %1892 = vmatprep.mubr.f32.mxu0 0.0
    %1893 = vmatmul.mubr.f32.gmra.mrb[0].mxu0 %v1826
    %v1894 = vpop.f32.mrb[0].mxu0
    %v1895 = vadd.f32 0.0, %v1894
    %v1896 = vpop.f32.mrb[0].mxu0
    %1897 = vdwg.mxu0
    %1899 = vrot.lane.b32.xlu0 %v1822, 32
    %v1900 = vpop.permute.xlu0 %1899
    %v1901 = vsel %vm406, %v1900, 0
    %1903 = vmatprep.subr.mxu0 0.0
    %1904 = vmatpush1.msra.mxu0 %v248
    %1905 = vmatprep.subr.mxu0 0.0
    %1906 = vmatpush1.msra.mxu0 %v249
    %1907 = vmatprep.subr.mxu0 0.0
    %1908 = vmatpush1.msra.mxu0 %v250
    %1909 = vmatprep.subr.mxu0 0.0
    %1910 = vmatpush1.msra.mxu0 %v251
    %1911 = vmatprep.subr.mxu0 0.0
    %1912 = vmatpush1.msra.mxu0 0.0
    %1913 = vmatprep.subr.mxu0 0.0
    %1914 = vmatpush1.msra.mxu0 0.0
    %1915 = vmatprep.subr.mxu0 0.0
    %1916 = vmatpush1.msra.mxu0 0.0
    %1917 = vmatprep.subr.mxu0 0.0
    %1918 = vmatpush1.msra.mxu0 0.0
    %1919 = vmatprep.subr.mxu0 0.0
    %1920 = vmatpush1.msra.mxu0 0.0
    %1921 = vmatprep.subr.mxu0 0.0
    %1922 = vmatpush1.msra.mxu0 0.0
    %1923 = vmatprep.subr.mxu0 0.0
    %1924 = vmatpush1.msra.mxu0 0.0
    %1925 = vmatprep.subr.mxu0 0.0
    %1926 = vmatpush1.msra.mxu0 0.0
    %1927 = vmatprep.subr.mxu0 0.0
    %1928 = vmatpush1.msra.mxu0 0.0
    %1929 = vmatprep.subr.mxu0 0.0
    %1930 = vmatpush1.msra.mxu0 0.0
    %1931 = vmatprep.subr.mxu0 0.0
    %1932 = vmatpush1.msra.mxu0 0.0
    %1933 = vmatprep.subr.mxu0 0.0
    %1934 = vmatpush1.msra.mxu0 0.0
    %1935 = vmatprep.subr.mxu0 0.0
    %1936 = vmatpush1.msra.mxu0 0.0
    %1937 = vmatprep.subr.mxu0 0.0
    %1938 = vmatpush1.msra.mxu0 0.0
    %1939 = vmatprep.subr.mxu0 0.0
    %1940 = vmatpush1.msra.mxu0 0.0
    %1941 = vmatprep.subr.mxu0 0.0
    %1942 = vmatpush1.msra.mxu0 0.0
    %1943 = vmatprep.subr.mxu0 0.0
    %1944 = vmatpush1.msra.mxu0 0.0
    %1945 = vmatprep.subr.mxu0 0.0
    %1946 = vmatpush1.msra.mxu0 0.0
    %1947 = vmatprep.subr.mxu0 0.0
    %1948 = vmatpush1.msra.mxu0 0.0
    %1949 = vmatprep.subr.mxu0 0.0
    %1950 = vmatpush1.msra.mxu0 0.0
    %1951 = vmatprep.subr.mxu0 0.0
    %1952 = vmatpush1.msra.mxu0 0.0
    %1953 = vmatprep.subr.mxu0 0.0
    %1954 = vmatpush1.msra.mxu0 0.0
    %1955 = vmatprep.subr.mxu0 0.0
    %1956 = vmatpush1.msra.mxu0 0.0
    %1957 = vmatprep.subr.mxu0 0.0
    %1958 = vmatpush1.msra.mxu0 0.0
    %1959 = vmatprep.subr.mxu0 0.0
    %1960 = vmatpush1.msra.mxu0 0.0
    %1961 = vmatprep.subr.mxu0 0.0
    %1962 = vmatpush1.msra.mxu0 0.0
    %1963 = vmatprep.subr.mxu0 0.0
    %1964 = vmatpush1.msra.mxu0 0.0
    %1965 = vmatprep.subr.mxu0 0.0
    %1966 = vmatpush1.msra.mxu0 0.0
    %1967 = vmatprep.mubr.f32.mxu0 0.0
    %1968 = vmatmul.mubr.f32.gmra.mrb[0].mxu0 %v1901
    %v1969 = vpop.f32.mrb[0].mxu0
    %v1970 = vadd.f32 %v1895, %v1969
    %v1971 = vpop.f32.mrb[0].mxu0
    %1972 = vdwg.mxu0
    %v1973 = vadd.f32 %v1970, %v264
    %v1974 = vmul.f32 %v1973, %v231
    %v1975 = vtanh.pop %v1974
    %v1976 = vmul.f32 %v1975, %v231
    %v1977 = vadd.f32 %v1976, %v238
    %v1978 = vmul.f32 %v1977, %v1723
    %1980 = vrot.lane.b32.xlu0 %v1977, 64
    %v1981 = vpop.permute.xlu0 %1980
    %v1983 = vmul.f32 %v1977, %v1981
    %1985 = vrot.lane.b32.xlu0 %v1983, 32
    %v1986 = vpop.permute.xlu0 %1985
    %v1988 = vadd.f32 %v1978, %v1986
    %v1989 = vtanh.pop %v1988
    %1991 = vrot.lane.b32.xlu0 %v1989, 64
    %v1992 = vpop.permute.xlu0 %1991
    %v1994 = vmul.f32 %v1977, %v1992
    %1995 = vmatprep.subr.mxu0 0.0
    %1996 = vmatpush1.msra.mxu0 %v240
    %1997 = vmatprep.subr.mxu0 0.0
    %1998 = vmatpush1.msra.mxu0 %v241
    %1999 = vmatprep.subr.mxu0 0.0
    %2000 = vmatpush1.msra.mxu0 %v242
    %2001 = vmatprep.subr.mxu0 0.0
    %2002 = vmatpush1.msra.mxu0 %v243
    %2003 = vmatprep.subr.mxu0 0.0
    %2004 = vmatpush1.msra.mxu0 0.0
    %2005 = vmatprep.subr.mxu0 0.0
    %2006 = vmatpush1.msra.mxu0 0.0
    %2007 = vmatprep.subr.mxu0 0.0
    %2008 = vmatpush1.msra.mxu0 0.0
    %2009 = vmatprep.subr.mxu0 0.0
    %2010 = vmatpush1.msra.mxu0 0.0
    %2011 = vmatprep.subr.mxu0 0.0
    %2012 = vmatpush1.msra.mxu0 0.0
    %2013 = vmatprep.subr.mxu0 0.0
    %2014 = vmatpush1.msra.mxu0 0.0
    %2015 = vmatprep.subr.mxu0 0.0
    %2016 = vmatpush1.msra.mxu0 0.0
    %2017 = vmatprep.subr.mxu0 0.0
    %2018 = vmatpush1.msra.mxu0 0.0
    %2019 = vmatprep.subr.mxu0 0.0
    %2020 = vmatpush1.msra.mxu0 0.0
    %2021 = vmatprep.subr.mxu0 0.0
    %2022 = vmatpush1.msra.mxu0 0.0
    %2023 = vmatprep.subr.mxu0 0.0
    %2024 = vmatpush1.msra.mxu0 0.0
    %2025 = vmatprep.subr.mxu0 0.0
    %2026 = vmatpush1.msra.mxu0 0.0
    %2027 = vmatprep.subr.mxu0 0.0
    %2028 = vmatpush1.msra.mxu0 0.0
    %2029 = vmatprep.subr.mxu0 0.0
    %2030 = vmatpush1.msra.mxu0 0.0
    %2031 = vmatprep.subr.mxu0 0.0
    %2032 = vmatpush1.msra.mxu0 0.0
    %2033 = vmatprep.subr.mxu0 0.0
    %2034 = vmatpush1.msra.mxu0 0.0
    %2035 = vmatprep.subr.mxu0 0.0
    %2036 = vmatpush1.msra.mxu0 0.0
    %2037 = vmatprep.subr.mxu0 0.0
    %2038 = vmatpush1.msra.mxu0 0.0
    %2039 = vmatprep.subr.mxu0 0.0
    %2040 = vmatpush1.msra.mxu0 0.0
    %2041 = vmatprep.subr.mxu0 0.0
    %2042 = vmatpush1.msra.mxu0 0.0
    %2043 = vmatprep.subr.mxu0 0.0
    %2044 = vmatpush1.msra.mxu0 0.0
    %2045 = vmatprep.subr.mxu0 0.0
    %2046 = vmatpush1.msra.mxu0 0.0
    %2047 = vmatprep.subr.mxu0 0.0
    %2048 = vmatpush1.msra.mxu0 0.0
    %2049 = vmatprep.subr.mxu0 0.0
    %2050 = vmatpush1.msra.mxu0 0.0
    %2051 = vmatprep.subr.mxu0 0.0
    %2052 = vmatpush1.msra.mxu0 0.0
    %2053 = vmatprep.subr.mxu0 0.0
    %2054 = vmatpush1.msra.mxu0 0.0
    %2055 = vmatprep.subr.mxu0 0.0
    %2056 = vmatpush1.msra.mxu0 0.0
    %2057 = vmatprep.subr.mxu0 0.0
    %2058 = vmatpush1.msra.mxu0 0.0
    %2059 = vmatprep.mubr.f32.mxu0 0.0
    %2060 = vmatmul.mubr.f32.gmra.mrb[0].mxu0 %v1901
    %v2061 = vpop.f32.mrb[0].mxu0
    %v2062 = vadd.f32 0.0, %v2061
    %v2063 = vpop.f32.mrb[0].mxu0
    %2064 = vdwg.mxu0
    %v2065 = vadd.f32 %v398, %v2062
    %v2066 = vadd.f32 %v2065, %v257
    %v2067 = vmul.f32 %v2066, %v231
    %v2068 = vtanh.pop %v2067
    %v2069 = vmul.f32 %v2068, %v231
    %v2070 = vadd.f32 %v2069, %v238
    %v2071 = vmul.f32 %v2070, %v1816
    %2073 = vrot.lane.b32.xlu0 %v2070, 64
    %v2074 = vpop.permute.xlu0 %2073
    %v2076 = vmul.f32 %v2070, %v2074
    %2078 = vrot.lane.b32.xlu0 %v2076, 32
    %v2079 = vpop.permute.xlu0 %2078
    %v2081 = vadd.f32 %v2071, %v2079
    %v2082 = vtanh.pop %v2081
    %2084 = vrot.lane.b32.xlu0 %v2082, 64
    %v2085 = vpop.permute.xlu0 %2084
    %v2087 = vmul.f32 %v2070, %v2085
    %2089 = vrot.lane.b32.xlu0 %v1994, 32
    %v2090 = vpop.permute.xlu0 %2089
    %v2091 = vsel %vm406, %v2090, 0
    %2093 = vmatprep.subr.mxu0 0.0
    %2094 = vmatpush1.msra.mxu0 %v244
    %2095 = vmatprep.subr.mxu0 0.0
    %2096 = vmatpush1.msra.mxu0 %v245
    %2097 = vmatprep.subr.mxu0 0.0
    %2098 = vmatpush1.msra.mxu0 %v246
    %2099 = vmatprep.subr.mxu0 0.0
    %2100 = vmatpush1.msra.mxu0 %v247
    %2101 = vmatprep.subr.mxu0 0.0
    %2102 = vmatpush1.msra.mxu0 0.0
    %2103 = vmatprep.subr.mxu0 0.0
    %2104 = vmatpush1.msra.mxu0 0.0
    %2105 = vmatprep.subr.mxu0 0.0
    %2106 = vmatpush1.msra.mxu0 0.0
    %2107 = vmatprep.subr.mxu0 0.0
    %2108 = vmatpush1.msra.mxu0 0.0
    %2109 = vmatprep.subr.mxu0 0.0
    %2110 = vmatpush1.msra.mxu0 0.0
    %2111 = vmatprep.subr.mxu0 0.0
    %2112 = vmatpush1.msra.mxu0 0.0
    %2113 = vmatprep.subr.mxu0 0.0
    %2114 = vmatpush1.msra.mxu0 0.0
    %2115 = vmatprep.subr.mxu0 0.0
    %2116 = vmatpush1.msra.mxu0 0.0
    %2117 = vmatprep.subr.mxu0 0.0
    %2118 = vmatpush1.msra.mxu0 0.0
    %2119 = vmatprep.subr.mxu0 0.0
    %2120 = vmatpush1.msra.mxu0 0.0
    %2121 = vmatprep.subr.mxu0 0.0
    %2122 = vmatpush1.msra.mxu0 0.0
    %2123 = vmatprep.subr.mxu0 0.0
    %2124 = vmatpush1.msra.mxu0 0.0
    %2125 = vmatprep.subr.mxu0 0.0
    %2126 = vmatpush1.msra.mxu0 0.0
    %2127 = vmatprep.subr.mxu0 0.0
    %2128 = vmatpush1.msra.mxu0 0.0
    %2129 = vmatprep.subr.mxu0 0.0
    %2130 = vmatpush1.msra.mxu0 0.0
    %2131 = vmatprep.subr.mxu0 0.0
    %2132 = vmatpush1.msra.mxu0 0.0
    %2133 = vmatprep.subr.mxu0 0.0
    %2134 = vmatpush1.msra.mxu0 0.0
    %2135 = vmatprep.subr.mxu0 0.0
    %2136 = vmatpush1.msra.mxu0 0.0
    %2137 = vmatprep.subr.mxu0 0.0
    %2138 = vmatpush1.msra.mxu0 0.0
    %2139 = vmatprep.subr.mxu0 0.0
    %2140 = vmatpush1.msra.mxu0 0.0
    %2141 = vmatprep.subr.mxu0 0.0
    %2142 = vmatpush1.msra.mxu0 0.0
    %2143 = vmatprep.subr.mxu0 0.0
    %2144 = vmatpush1.msra.mxu0 0.0
    %2145 = vmatprep.subr.mxu0 0.0
    %2146 = vmatpush1.msra.mxu0 0.0
    %2147 = vmatprep.subr.mxu0 0.0
    %2148 = vmatpush1.msra.mxu0 0.0
    %2149 = vmatprep.subr.mxu0 0.0
    %2150 = vmatpush1.msra.mxu0 0.0
    %2151 = vmatprep.subr.mxu0 0.0
    %2152 = vmatpush1.msra.mxu0 0.0
    %2153 = vmatprep.subr.mxu0 0.0
    %2154 = vmatpush1.msra.mxu0 0.0
    %2155 = vmatprep.subr.mxu0 0.0
    %2156 = vmatpush1.msra.mxu0 0.0
    %2157 = vmatprep.mubr.f32.mxu0 0.0
    %2158 = vmatmul.mubr.f32.gmra.mrb[0].mxu0 %v2091
    %v2159 = vpop.f32.mrb[0].mxu0
    %v2160 = vadd.f32 0.0, %v2159
    %v2161 = vpop.f32.mrb[0].mxu0
    %2162 = vdwg.mxu0
    %2164 = vrot.lane.b32.xlu0 %v2087, 32
    %v2165 = vpop.permute.xlu0 %2164
    %v2166 = vsel %vm406, %v2165, 0
    %2168 = vmatprep.subr.mxu0 0.0
    %2169 = vmatpush1.msra.mxu0 %v248
    %2170 = vmatprep.subr.mxu0 0.0
    %2171 = vmatpush1.msra.mxu0 %v249
    %2172 = vmatprep.subr.mxu0 0.0
    %2173 = vmatpush1.msra.mxu0 %v250
    %2174 = vmatprep.subr.mxu0 0.0
    %2175 = vmatpush1.msra.mxu0 %v251
    %2176 = vmatprep.subr.mxu0 0.0
    %2177 = vmatpush1.msra.mxu0 0.0
    %2178 = vmatprep.subr.mxu0 0.0
    %2179 = vmatpush1.msra.mxu0 0.0
    %2180 = vmatprep.subr.mxu0 0.0
    %2181 = vmatpush1.msra.mxu0 0.0
    %2182 = vmatprep.subr.mxu0 0.0
    %2183 = vmatpush1.msra.mxu0 0.0
    %2184 = vmatprep.subr.mxu0 0.0
    %2185 = vmatpush1.msra.mxu0 0.0
    %2186 = vmatprep.subr.mxu0 0.0
    %2187 = vmatpush1.msra.mxu0 0.0
    %2188 = vmatprep.subr.mxu0 0.0
    %2189 = vmatpush1.msra.mxu0 0.0
    %2190 = vmatprep.subr.mxu0 0.0
    %2191 = vmatpush1.msra.mxu0 0.0
    %2192 = vmatprep.subr.mxu0 0.0
    %2193 = vmatpush1.msra.mxu0 0.0
    %2194 = vmatprep.subr.mxu0 0.0
    %2195 = vmatpush1.msra.mxu0 0.0
    %2196 = vmatprep.subr.mxu0 0.0
    %2197 = vmatpush1.msra.mxu0 0.0
    %2198 = vmatprep.subr.mxu0 0.0
    %2199 = vmatpush1.msra.mxu0 0.0
    %2200 = vmatprep.subr.mxu0 0.0
    %2201 = vmatpush1.msra.mxu0 0.0
    %2202 = vmatprep.subr.mxu0 0.0
    %2203 = vmatpush1.msra.mxu0 0.0
    %2204 = vmatprep.subr.mxu0 0.0
    %2205 = vmatpush1.msra.mxu0 0.0
    %2206 = vmatprep.subr.mxu0 0.0
    %2207 = vmatpush1.msra.mxu0 0.0
    %2208 = vmatprep.subr.mxu0 0.0
    %2209 = vmatpush1.msra.mxu0 0.0
    %2210 = vmatprep.subr.mxu0 0.0
    %2211 = vmatpush1.msra.mxu0 0.0
    %2212 = vmatprep.subr.mxu0 0.0
    %2213 = vmatpush1.msra.mxu0 0.0
    %2214 = vmatprep.subr.mxu0 0.0
    %2215 = vmatpush1.msra.mxu0 0.0
    %2216 = vmatprep.subr.mxu0 0.0
    %2217 = vmatpush1.msra.mxu0 0.0
    %2218 = vmatprep.subr.mxu0 0.0
    %2219 = vmatpush1.msra.mxu0 0.0
    %2220 = vmatprep.subr.mxu0 0.0
    %2221 = vmatpush1.msra.mxu0 0.0
    %2222 = vmatprep.subr.mxu0 0.0
    %2223 = vmatpush1.msra.mxu0 0.0
    %2224 = vmatprep.subr.mxu0 0.0
    %2225 = vmatpush1.msra.mxu0 0.0
    %2226 = vmatprep.subr.mxu0 0.0
    %2227 = vmatpush1.msra.mxu0 0.0
    %2228 = vmatprep.subr.mxu0 0.0
    %2229 = vmatpush1.msra.mxu0 0.0
    %2230 = vmatprep.subr.mxu0 0.0
    %2231 = vmatpush1.msra.mxu0 0.0
    %2232 = vmatprep.mubr.f32.mxu0 0.0
    %2233 = vmatmul.mubr.f32.gmra.mrb[0].mxu0 %v2166
    %v2234 = vpop.f32.mrb[0].mxu0
    %v2235 = vadd.f32 %v2160, %v2234
    %v2236 = vpop.f32.mrb[0].mxu0
    %2237 = vdwg.mxu0
    %v2238 = vadd.f32 %v2235, %v264
    %v2239 = vmul.f32 %v2238, %v231
    %v2240 = vtanh.pop %v2239
    %v2241 = vmul.f32 %v2240, %v231
    %v2242 = vadd.f32 %v2241, %v238
    %v2243 = vmul.f32 %v2242, %v1988
    %2245 = vrot.lane.b32.xlu0 %v2242, 64
    %v2246 = vpop.permute.xlu0 %2245
    %v2248 = vmul.f32 %v2242, %v2246
    %2250 = vrot.lane.b32.xlu0 %v2248, 32
    %v2251 = vpop.permute.xlu0 %2250
    %v2253 = vadd.f32 %v2243, %v2251
    %v2254 = vtanh.pop %v2253
    %2256 = vrot.lane.b32.xlu0 %v2254, 64
    %v2257 = vpop.permute.xlu0 %2256
    %v2259 = vmul.f32 %v2242, %v2257
    %2260 = vmatprep.subr.mxu0 0.0
    %2261 = vmatpush1.msra.mxu0 %v240
    %2262 = vmatprep.subr.mxu0 0.0
    %2263 = vmatpush1.msra.mxu0 %v241
    %2264 = vmatprep.subr.mxu0 0.0
    %2265 = vmatpush1.msra.mxu0 %v242
    %2266 = vmatprep.subr.mxu0 0.0
    %2267 = vmatpush1.msra.mxu0 %v243
    %2268 = vmatprep.subr.mxu0 0.0
    %2269 = vmatpush1.msra.mxu0 0.0
    %2270 = vmatprep.subr.mxu0 0.0
    %2271 = vmatpush1.msra.mxu0 0.0
    %2272 = vmatprep.subr.mxu0 0.0
    %2273 = vmatpush1.msra.mxu0 0.0
    %2274 = vmatprep.subr.mxu0 0.0
    %2275 = vmatpush1.msra.mxu0 0.0
    %2276 = vmatprep.subr.mxu0 0.0
    %2277 = vmatpush1.msra.mxu0 0.0
    %2278 = vmatprep.subr.mxu0 0.0
    %2279 = vmatpush1.msra.mxu0 0.0
    %2280 = vmatprep.subr.mxu0 0.0
    %2281 = vmatpush1.msra.mxu0 0.0
    %2282 = vmatprep.subr.mxu0 0.0
    %2283 = vmatpush1.msra.mxu0 0.0
    %2284 = vmatprep.subr.mxu0 0.0
    %2285 = vmatpush1.msra.mxu0 0.0
    %2286 = vmatprep.subr.mxu0 0.0
    %2287 = vmatpush1.msra.mxu0 0.0
    %2288 = vmatprep.subr.mxu0 0.0
    %2289 = vmatpush1.msra.mxu0 0.0
    %2290 = vmatprep.subr.mxu0 0.0
    %2291 = vmatpush1.msra.mxu0 0.0
    %2292 = vmatprep.subr.mxu0 0.0
    %2293 = vmatpush1.msra.mxu0 0.0
    %2294 = vmatprep.subr.mxu0 0.0
    %2295 = vmatpush1.msra.mxu0 0.0
    %2296 = vmatprep.subr.mxu0 0.0
    %2297 = vmatpush1.msra.mxu0 0.0
    %2298 = vmatprep.subr.mxu0 0.0
    %2299 = vmatpush1.msra.mxu0 0.0
    %2300 = vmatprep.subr.mxu0 0.0
    %2301 = vmatpush1.msra.mxu0 0.0
    %2302 = vmatprep.subr.mxu0 0.0
    %2303 = vmatpush1.msra.mxu0 0.0
    %2304 = vmatprep.subr.mxu0 0.0
    %2305 = vmatpush1.msra.mxu0 0.0
    %2306 = vmatprep.subr.mxu0 0.0
    %2307 = vmatpush1.msra.mxu0 0.0
    %2308 = vmatprep.subr.mxu0 0.0
    %2309 = vmatpush1.msra.mxu0 0.0
    %2310 = vmatprep.subr.mxu0 0.0
    %2311 = vmatpush1.msra.mxu0 0.0
    %2312 = vmatprep.subr.mxu0 0.0
    %2313 = vmatpush1.msra.mxu0 0.0
    %2314 = vmatprep.subr.mxu0 0.0
    %2315 = vmatpush1.msra.mxu0 0.0
    %2316 = vmatprep.subr.mxu0 0.0
    %2317 = vmatpush1.msra.mxu0 0.0
    %2318 = vmatprep.subr.mxu0 0.0
    %2319 = vmatpush1.msra.mxu0 0.0
    %2320 = vmatprep.subr.mxu0 0.0
    %2321 = vmatpush1.msra.mxu0 0.0
    %2322 = vmatprep.subr.mxu0 0.0
    %2323 = vmatpush1.msra.mxu0 0.0
    %2324 = vmatprep.mubr.f32.mxu0 0.0
    %2325 = vmatmul.mubr.f32.gmra.mrb[0].mxu0 %v2166
    %v2326 = vpop.f32.mrb[0].mxu0
    %v2327 = vadd.f32 0.0, %v2326
    %v2328 = vpop.f32.mrb[0].mxu0
    %2329 = vdwg.mxu0
    %v2330 = vadd.f32 %v403, %v2327
    %v2331 = vadd.f32 %v2330, %v257
    %v2332 = vmul.f32 %v2331, %v231
    %v2333 = vtanh.pop %v2332
    %v2334 = vmul.f32 %v2333, %v231
    %v2335 = vadd.f32 %v2334, %v238
    %v2336 = vmul.f32 %v2335, %v2081
    %2338 = vrot.lane.b32.xlu0 %v2335, 64
    %v2339 = vpop.permute.xlu0 %2338
    %v2341 = vmul.f32 %v2335, %v2339
    %2343 = vrot.lane.b32.xlu0 %v2341, 32
    %v2344 = vpop.permute.xlu0 %2343
    %v2346 = vadd.f32 %v2336, %v2344
    %v2347 = vtanh.pop %v2346
    %2349 = vrot.lane.b32.xlu0 %v2347, 64
    %v2350 = vpop.permute.xlu0 %2349
    %v2352 = vmul.f32 %v2335, %v2350
    %2354 = vrot.lane.b32.xlu0 %v2259, 32
    %v2355 = vpop.permute.xlu0 %2354
    %v2356 = vsel %vm406, %v2355, 0
    %2358 = vmatprep.subr.mxu0 0.0
    %2359 = vmatpush1.msra.mxu0 %v244
    %2360 = vmatprep.subr.mxu0 0.0
    %2361 = vmatpush1.msra.mxu0 %v245
    %2362 = vmatprep.subr.mxu0 0.0
    %2363 = vmatpush1.msra.mxu0 %v246
    %2364 = vmatprep.subr.mxu0 0.0
    %2365 = vmatpush1.msra.mxu0 %v247
    %2366 = vmatprep.subr.mxu0 0.0
    %2367 = vmatpush1.msra.mxu0 0.0
    %2368 = vmatprep.subr.mxu0 0.0
    %2369 = vmatpush1.msra.mxu0 0.0
    %2370 = vmatprep.subr.mxu0 0.0
    %2371 = vmatpush1.msra.mxu0 0.0
    %2372 = vmatprep.subr.mxu0 0.0
    %2373 = vmatpush1.msra.mxu0 0.0
    %2374 = vmatprep.subr.mxu0 0.0
    %2375 = vmatpush1.msra.mxu0 0.0
    %2376 = vmatprep.subr.mxu0 0.0
    %2377 = vmatpush1.msra.mxu0 0.0
    %2378 = vmatprep.subr.mxu0 0.0
    %2379 = vmatpush1.msra.mxu0 0.0
    %2380 = vmatprep.subr.mxu0 0.0
    %2381 = vmatpush1.msra.mxu0 0.0
    %2382 = vmatprep.subr.mxu0 0.0
    %2383 = vmatpush1.msra.mxu0 0.0
    %2384 = vmatprep.subr.mxu0 0.0
    %2385 = vmatpush1.msra.mxu0 0.0
    %2386 = vmatprep.subr.mxu0 0.0
    %2387 = vmatpush1.msra.mxu0 0.0
    %2388 = vmatprep.subr.mxu0 0.0
    %2389 = vmatpush1.msra.mxu0 0.0
    %2390 = vmatprep.subr.mxu0 0.0
    %2391 = vmatpush1.msra.mxu0 0.0
    %2392 = vmatprep.subr.mxu0 0.0
    %2393 = vmatpush1.msra.mxu0 0.0
    %2394 = vmatprep.subr.mxu0 0.0
    %2395 = vmatpush1.msra.mxu0 0.0
    %2396 = vmatprep.subr.mxu0 0.0
    %2397 = vmatpush1.msra.mxu0 0.0
    %2398 = vmatprep.subr.mxu0 0.0
    %2399 = vmatpush1.msra.mxu0 0.0
    %2400 = vmatprep.subr.mxu0 0.0
    %2401 = vmatpush1.msra.mxu0 0.0
    %2402 = vmatprep.subr.mxu0 0.0
    %2403 = vmatpush1.msra.mxu0 0.0
    %2404 = vmatprep.subr.mxu0 0.0
    %2405 = vmatpush1.msra.mxu0 0.0
    %2406 = vmatprep.subr.mxu0 0.0
    %2407 = vmatpush1.msra.mxu0 0.0
    %2408 = vmatprep.subr.mxu0 0.0
    %2409 = vmatpush1.msra.mxu0 0.0
    %2410 = vmatprep.subr.mxu0 0.0
    %2411 = vmatpush1.msra.mxu0 0.0
    %2412 = vmatprep.subr.mxu0 0.0
    %2413 = vmatpush1.msra.mxu0 0.0
    %2414 = vmatprep.subr.mxu0 0.0
    %2415 = vmatpush1.msra.mxu0 0.0
    %2416 = vmatprep.subr.mxu0 0.0
    %2417 = vmatpush1.msra.mxu0 0.0
    %2418 = vmatprep.subr.mxu0 0.0
    %2419 = vmatpush1.msra.mxu0 0.0
    %2420 = vmatprep.subr.mxu0 0.0
    %2421 = vmatpush1.msra.mxu0 0.0
    %2422 = vmatprep.mubr.f32.mxu0 0.0
    %2423 = vmatmul.mubr.f32.gmra.mrb[0].mxu0 %v2356
    %v2424 = vpop.f32.mrb[0].mxu0
    %v2425 = vadd.f32 0.0, %v2424
    %v2426 = vpop.f32.mrb[0].mxu0
    %2427 = vdwg.mxu0
    %2429 = vrot.lane.b32.xlu0 %v2352, 32
    %v2430 = vpop.permute.xlu0 %2429
    %v2431 = vsel %vm406, %v2430, 0
    %2433 = vmatprep.subr.mxu0 0.0
    %2434 = vmatpush1.msra.mxu0 %v248
    %2435 = vmatprep.subr.mxu0 0.0
    %2436 = vmatpush1.msra.mxu0 %v249
    %2437 = vmatprep.subr.mxu0 0.0
    %2438 = vmatpush1.msra.mxu0 %v250
    %2439 = vmatprep.subr.mxu0 0.0
    %2440 = vmatpush1.msra.mxu0 %v251
    %2441 = vmatprep.subr.mxu0 0.0
    %2442 = vmatpush1.msra.mxu0 0.0
    %2443 = vmatprep.subr.mxu0 0.0
    %2444 = vmatpush1.msra.mxu0 0.0
    %2445 = vmatprep.subr.mxu0 0.0
    %2446 = vmatpush1.msra.mxu0 0.0
    %2447 = vmatprep.subr.mxu0 0.0
    %2448 = vmatpush1.msra.mxu0 0.0
    %2449 = vmatprep.subr.mxu0 0.0
    %2450 = vmatpush1.msra.mxu0 0.0
    %2451 = vmatprep.subr.mxu0 0.0
    %2452 = vmatpush1.msra.mxu0 0.0
    %2453 = vmatprep.subr.mxu0 0.0
    %2454 = vmatpush1.msra.mxu0 0.0
    %2455 = vmatprep.subr.mxu0 0.0
    %2456 = vmatpush1.msra.mxu0 0.0
    %2457 = vmatprep.subr.mxu0 0.0
    %2458 = vmatpush1.msra.mxu0 0.0
    %2459 = vmatprep.subr.mxu0 0.0
    %2460 = vmatpush1.msra.mxu0 0.0
    %2461 = vmatprep.subr.mxu0 0.0
    %2462 = vmatpush1.msra.mxu0 0.0
    %2463 = vmatprep.subr.mxu0 0.0
    %2464 = vmatpush1.msra.mxu0 0.0
    %2465 = vmatprep.subr.mxu0 0.0
    %2466 = vmatpush1.msra.mxu0 0.0
    %2467 = vmatprep.subr.mxu0 0.0
    %2468 = vmatpush1.msra.mxu0 0.0
    %2469 = vmatprep.subr.mxu0 0.0
    %2470 = vmatpush1.msra.mxu0 0.0
    %2471 = vmatprep.subr.mxu0 0.0
    %2472 = vmatpush1.msra.mxu0 0.0
    %2473 = vmatprep.subr.mxu0 0.0
    %2474 = vmatpush1.msra.mxu0 0.0
    %2475 = vmatprep.subr.mxu0 0.0
    %2476 = vmatpush1.msra.mxu0 0.0
    %2477 = vmatprep.subr.mxu0 0.0
    %2478 = vmatpush1.msra.mxu0 0.0
    %2479 = vmatprep.subr.mxu0 0.0
    %2480 = vmatpush1.msra.mxu0 0.0
    %2481 = vmatprep.subr.mxu0 0.0
    %2482 = vmatpush1.msra.mxu0 0.0
    %2483 = vmatprep.subr.mxu0 0.0
    %2484 = vmatpush1.msra.mxu0 0.0
    %2485 = vmatprep.subr.mxu0 0.0
    %2486 = vmatpush1.msra.mxu0 0.0
    %2487 = vmatprep.subr.mxu0 0.0
    %2488 = vmatpush1.msra.mxu0 0.0
    %2489 = vmatprep.subr.mxu0 0.0
    %2490 = vmatpush1.msra.mxu0 0.0
    %2491 = vmatprep.subr.mxu0 0.0
    %2492 = vmatpush1.msra.mxu0 0.0
    %2493 = vmatprep.subr.mxu0 0.0
    %2494 = vmatpush1.msra.mxu0 0.0
    %2495 = vmatprep.subr.mxu0 0.0
    %2496 = vmatpush1.msra.mxu0 0.0
    %2497 = vmatprep.mubr.f32.mxu0 0.0
    %2498 = vmatmul.mubr.f32.gmra.mrb[0].mxu0 %v2431
    %v2499 = vpop.f32.mrb[0].mxu0
    %v2500 = vadd.f32 %v2425, %v2499
    %v2501 = vpop.f32.mrb[0].mxu0
    %2502 = vdwg.mxu0
    %v2503 = vadd.f32 %v2500, %v264
    %v2504 = vmul.f32 %v2503, %v231
    %v2505 = vtanh.pop %v2504
    %v2506 = vmul.f32 %v2505, %v231
    %v2507 = vadd.f32 %v2506, %v238
    %v2508 = vmul.f32 %v2507, %v2253
    %2510 = vrot.lane.b32.xlu0 %v2507, 64
    %v2511 = vpop.permute.xlu0 %2510
    %v2513 = vmul.f32 %v2507, %v2511
    %2515 = vrot.lane.b32.xlu0 %v2513, 32
    %v2516 = vpop.permute.xlu0 %2515
    %v2518 = vadd.f32 %v2508, %v2516
    %v2519 = vtanh.pop %v2518
    %2521 = vrot.lane.b32.xlu0 %v2519, 64
    %v2522 = vpop.permute.xlu0 %2521
    %v2524 = vmul.f32 %v2507, %v2522
    %v2525 = vld [vmem:[%s1] sm:$0xff]
    %v2526 = vld [vmem:[#allocation11] sm:$0xf]
    %v2527 = vld [vmem:[#allocation13] sm:$0x1]
    %v2529 = vlaneseq
    %v2530 = vshrl.u32 %v2529, 7
    %v2531 = vsub.s32 0, %v2530
    %v2532 = vrot.slane %v2527, %v2531
    %vm2534 = vcmask 31744
    %v2536 = vsel %vm2534, %v2525, 0
    %vm2538 = vcmask 1043456
    %v2540 = vsel %vm2538, %v2526, 0
    %2542 = vmatprep.subr.mxu0 0.0
    %2543 = vmatpush1.msra.mxu0 %v2540
    %2544 = vmatprep.subr.mxu0 0.0
    %2545 = vmatpush1.msra.mxu0 0.0
    %2546 = vmatprep.subr.mxu0 0.0
    %2547 = vmatpush1.msra.mxu0 0.0
    %2548 = vmatprep.subr.mxu0 0.0
    %2549 = vmatpush1.msra.mxu0 0.0
    %2550 = vmatprep.subr.mxu0 0.0
    %2551 = vmatpush1.msra.mxu0 0.0
    %2552 = vmatprep.subr.mxu0 0.0
    %2553 = vmatpush1.msra.mxu0 0.0
    %2554 = vmatprep.subr.mxu0 0.0
    %2555 = vmatpush1.msra.mxu0 0.0
    %2556 = vmatprep.subr.mxu0 0.0
    %2557 = vmatpush1.msra.mxu0 0.0
    %2558 = vmatprep.subr.mxu0 0.0
    %2559 = vmatpush1.msra.mxu0 0.0
    %2560 = vmatprep.subr.mxu0 0.0
    %2561 = vmatpush1.msra.mxu0 0.0
    %2562 = vmatprep.subr.mxu0 0.0
    %2563 = vmatpush1.msra.mxu0 0.0
    %2564 = vmatprep.subr.mxu0 0.0
    %2565 = vmatpush1.msra.mxu0 0.0
    %2566 = vmatprep.subr.mxu0 0.0
    %2567 = vmatpush1.msra.mxu0 0.0
    %2568 = vmatprep.subr.mxu0 0.0
    %2569 = vmatpush1.msra.mxu0 0.0
    %2570 = vmatprep.subr.mxu0 0.0
    %2571 = vmatpush1.msra.mxu0 0.0
    %2572 = vmatprep.subr.mxu0 0.0
    %2573 = vmatpush1.msra.mxu0 0.0
    %2574 = vmatprep.subr.mxu0 0.0
    %2575 = vmatpush1.msra.mxu0 0.0
    %2576 = vmatprep.subr.mxu0 0.0
    %2577 = vmatpush1.msra.mxu0 0.0
    %2578 = vmatprep.subr.mxu0 0.0
    %2579 = vmatpush1.msra.mxu0 0.0
    %2580 = vmatprep.subr.mxu0 0.0
    %2581 = vmatpush1.msra.mxu0 0.0
    %2582 = vmatprep.subr.mxu0 0.0
    %2583 = vmatpush1.msra.mxu0 0.0
    %2584 = vmatprep.subr.mxu0 0.0
    %2585 = vmatpush1.msra.mxu0 0.0
    %2586 = vmatprep.subr.mxu0 0.0
    %2587 = vmatpush1.msra.mxu0 0.0
    %2588 = vmatprep.subr.mxu0 0.0
    %2589 = vmatpush1.msra.mxu0 0.0
    %2590 = vmatprep.subr.mxu0 0.0
    %2591 = vmatpush1.msra.mxu0 0.0
    %2592 = vmatprep.subr.mxu0 0.0
    %2593 = vmatpush1.msra.mxu0 0.0
    %2594 = vmatprep.subr.mxu0 0.0
    %2595 = vmatpush1.msra.mxu0 0.0
    %2596 = vmatprep.subr.mxu0 0.0
    %2597 = vmatpush1.msra.mxu0 0.0
    %2598 = vmatprep.subr.mxu0 0.0
    %2599 = vmatpush1.msra.mxu0 0.0
    %2600 = vmatprep.subr.mxu0 0.0
    %2601 = vmatpush1.msra.mxu0 0.0
    %2602 = vmatprep.subr.mxu0 0.0
    %2603 = vmatpush1.msra.mxu0 0.0
    %2604 = vmatprep.subr.mxu0 0.0
    %2605 = vmatpush1.msra.mxu0 0.0
    %2606 = vmatprep.mubr.f32.mxu0 0.0
    %2607 = vmatmul.mubr.f32.gmra.mrb[0].mxu0 %v2536
    %v2608 = vpop.f32.mrb[0].mxu0
    %v2609 = vadd.f32 %v2532, %v2608
    %v2610 = vpop.f32.mrb[0].mxu0
    %2611 = vdwg.mxu0
    %v2612 = vmax.f32 %v2609, 0.0
    %v2613 = vld [vmem:[%s12] sm:$0xff]
    %v2614 = vld [vmem:[%s12 + $0x8] sm:$0xff]
    %v2615 = vld [vmem:[%s12 + $0x10] sm:$0xff]
    %v2616 = vld [vmem:[%s12 + $0x18] sm:$0xff]
    %v2617 = vld [vmem:[#allocation14] sm:$0x1]
    %v2619 = vlaneseq
    %v2620 = vshrl.u32 %v2619, 7
    %v2621 = vsub.s32 0, %v2620
    %v2622 = vrot.slane %v2617, %v2621
    %v2625 = vsel %vm406, %v2612, 0
    %2627 = vmatprep.subr.mxu0 0.0
    %2628 = vmatpush1.msra.mxu0 %v2613
    %2629 = vmatprep.subr.mxu0 0.0
    %2630 = vmatpush1.msra.mxu0 %v2614
    %2631 = vmatprep.subr.mxu0 0.0
    %2632 = vmatpush1.msra.mxu0 %v2615
    %2633 = vmatprep.subr.mxu0 0.0
    %2634 = vmatpush1.msra.mxu0 %v2616
    %2635 = vmatprep.subr.mxu0 0.0
    %2636 = vmatpush1.msra.mxu0 0.0
    %2637 = vmatprep.subr.mxu0 0.0
    %2638 = vmatpush1.msra.mxu0 0.0
    %2639 = vmatprep.subr.mxu0 0.0
    %2640 = vmatpush1.msra.mxu0 0.0
    %2641 = vmatprep.subr.mxu0 0.0
    %2642 = vmatpush1.msra.mxu0 0.0
    %2643 = vmatprep.subr.mxu0 0.0
    %2644 = vmatpush1.msra.mxu0 0.0
    %2645 = vmatprep.subr.mxu0 0.0
    %2646 = vmatpush1.msra.mxu0 0.0
    %2647 = vmatprep.subr.mxu0 0.0
    %2648 = vmatpush1.msra.mxu0 0.0
    %2649 = vmatprep.subr.mxu0 0.0
    %2650 = vmatpush1.msra.mxu0 0.0
    %2651 = vmatprep.subr.mxu0 0.0
    %2652 = vmatpush1.msra.mxu0 0.0
    %2653 = vmatprep.subr.mxu0 0.0
    %2654 = vmatpush1.msra.mxu0 0.0
    %2655 = vmatprep.subr.mxu0 0.0
    %2656 = vmatpush1.msra.mxu0 0.0
    %2657 = vmatprep.subr.mxu0 0.0
    %2658 = vmatpush1.msra.mxu0 0.0
    %2659 = vmatprep.subr.mxu0 0.0
    %2660 = vmatpush1.msra.mxu0 0.0
    %2661 = vmatprep.subr.mxu0 0.0
    %2662 = vmatpush1.msra.mxu0 0.0
    %2663 = vmatprep.subr.mxu0 0.0
    %2664 = vmatpush1.msra.mxu0 0.0
    %2665 = vmatprep.subr.mxu0 0.0
    %2666 = vmatpush1.msra.mxu0 0.0
    %2667 = vmatprep.subr.mxu0 0.0
    %2668 = vmatpush1.msra.mxu0 0.0
    %2669 = vmatprep.subr.mxu0 0.0
    %2670 = vmatpush1.msra.mxu0 0.0
    %2671 = vmatprep.subr.mxu0 0.0
    %2672 = vmatpush1.msra.mxu0 0.0
    %2673 = vmatprep.subr.mxu0 0.0
    %2674 = vmatpush1.msra.mxu0 0.0
    %2675 = vmatprep.subr.mxu0 0.0
    %2676 = vmatpush1.msra.mxu0 0.0
    %2677 = vmatprep.subr.mxu0 0.0
    %2678 = vmatpush1.msra.mxu0 0.0
    %2679 = vmatprep.subr.mxu0 0.0
    %2680 = vmatpush1.msra.mxu0 0.0
    %2681 = vmatprep.subr.mxu0 0.0
    %2682 = vmatpush1.msra.mxu0 0.0
    %2683 = vmatprep.subr.mxu0 0.0
    %2684 = vmatpush1.msra.mxu0 0.0
    %2685 = vmatprep.subr.mxu0 0.0
    %2686 = vmatpush1.msra.mxu0 0.0
    %2687 = vmatprep.subr.mxu0 0.0
    %2688 = vmatpush1.msra.mxu0 0.0
    %2689 = vmatprep.subr.mxu0 0.0
    %2690 = vmatpush1.msra.mxu0 0.0
    %2691 = vmatprep.mubr.f32.mxu0 0.0
    %2692 = vmatmul.mubr.f32.gmra.mrb[0].mxu0 %v2625
    %v2693 = vpop.f32.mrb[0].mxu0
    %v2694 = vadd.f32 %v2622, %v2693
    %v2695 = vpop.f32.mrb[0].mxu0
    %2696 = vdwg.mxu0
    %v2697 = vmax.f32 %v2694, 0.0
    %v2698 = vtanh.pop %v2697
    %v2699 = vld [vmem:[#allocation16] sm:$0xff]
    %v2700 = vld [vmem:[#allocation16 + $0x8] sm:$0xff]
    %v2701 = vld [vmem:[#allocation16 + $0x10] sm:$0xff]
    %v2702 = vld [vmem:[#allocation16 + $0x18] sm:$0xff]
    %v2703 = vld [vmem:[#allocation17] sm:$0xff]
    %v2704 = vld [vmem:[#allocation17 + $0x8] sm:$0xff]
    %v2705 = vld [vmem:[#allocation17 + $0x10] sm:$0xff]
    %v2706 = vld [vmem:[#allocation17 + $0x18] sm:$0xff]
    %v2708 = vsel %vm406, %v2698, 0
    %2710 = vmatprep.subr.mxu0 0.0
    %2711 = vmatpush1.msra.mxu0 %v2703
    %2712 = vmatprep.subr.mxu0 0.0
    %2713 = vmatpush1.msra.mxu0 %v2704
    %2714 = vmatprep.subr.mxu0 0.0
    %2715 = vmatpush1.msra.mxu0 %v2705
    %2716 = vmatprep.subr.mxu0 0.0
    %2717 = vmatpush1.msra.mxu0 %v2706
    %2718 = vmatprep.subr.mxu0 0.0
    %2719 = vmatpush1.msra.mxu0 0.0
    %2720 = vmatprep.subr.mxu0 0.0
    %2721 = vmatpush1.msra.mxu0 0.0
    %2722 = vmatprep.subr.mxu0 0.0
    %2723 = vmatpush1.msra.mxu0 0.0
    %2724 = vmatprep.subr.mxu0 0.0
    %2725 = vmatpush1.msra.mxu0 0.0
    %2726 = vmatprep.subr.mxu0 0.0
    %2727 = vmatpush1.msra.mxu0 0.0
    %2728 = vmatprep.subr.mxu0 0.0
    %2729 = vmatpush1.msra.mxu0 0.0
    %2730 = vmatprep.subr.mxu0 0.0
    %2731 = vmatpush1.msra.mxu0 0.0
    %2732 = vmatprep.subr.mxu0 0.0
    %2733 = vmatpush1.msra.mxu0 0.0
    %2734 = vmatprep.subr.mxu0 0.0
    %2735 = vmatpush1.msra.mxu0 0.0
    %2736 = vmatprep.subr.mxu0 0.0
    %2737 = vmatpush1.msra.mxu0 0.0
    %2738 = vmatprep.subr.mxu0 0.0
    %2739 = vmatpush1.msra.mxu0 0.0
    %2740 = vmatprep.subr.mxu0 0.0
    %2741 = vmatpush1.msra.mxu0 0.0
    %2742 = vmatprep.subr.mxu0 0.0
    %2743 = vmatpush1.msra.mxu0 0.0
    %2744 = vmatprep.subr.mxu0 0.0
    %2745 = vmatpush1.msra.mxu0 0.0
    %2746 = vmatprep.subr.mxu0 0.0
    %2747 = vmatpush1.msra.mxu0 0.0
    %2748 = vmatprep.subr.mxu0 0.0
    %2749 = vmatpush1.msra.mxu0 0.0
    %2750 = vmatprep.subr.mxu0 0.0
    %2751 = vmatpush1.msra.mxu0 0.0
    %2752 = vmatprep.subr.mxu0 0.0
    %2753 = vmatpush1.msra.mxu0 0.0
    %2754 = vmatprep.subr.mxu0 0.0
    %2755 = vmatpush1.msra.mxu0 0.0
    %2756 = vmatprep.subr.mxu0 0.0
    %2757 = vmatpush1.msra.mxu0 0.0
    %2758 = vmatprep.subr.mxu0 0.0
    %2759 = vmatpush1.msra.mxu0 0.0
    %2760 = vmatprep.subr.mxu0 0.0
    %2761 = vmatpush1.msra.mxu0 0.0
    %2762 = vmatprep.subr.mxu0 0.0
    %2763 = vmatpush1.msra.mxu0 0.0
    %2764 = vmatprep.subr.mxu0 0.0
    %2765 = vmatpush1.msra.mxu0 0.0
    %2766 = vmatprep.subr.mxu0 0.0
    %2767 = vmatpush1.msra.mxu0 0.0
    %2768 = vmatprep.subr.mxu0 0.0
    %2769 = vmatpush1.msra.mxu0 0.0
    %2770 = vmatprep.subr.mxu0 0.0
    %2771 = vmatpush1.msra.mxu0 0.0
    %2772 = vmatprep.subr.mxu0 0.0
    %2773 = vmatpush1.msra.mxu0 0.0
    %2774 = vmatprep.mubr.f32.mxu0 0.0
    %2775 = vmatmul.mubr.f32.gmra.mrb[0].mxu0 %v2708
    %v2776 = vpop.f32.mrb[0].mxu0
    %v2777 = vadd.f32 0.0, %v2776
    %v2778 = vpop.f32.mrb[0].mxu0
    %2779 = vdwg.mxu0
    %2781 = vrot.lane.b32.xlu0 %v2524, 32
    %v2782 = vpop.permute.xlu0 %2781
    %v2783 = vsel %vm406, %v2782, 0
    %2785 = vmatprep.subr.mxu0 0.0
    %2786 = vmatpush1.msra.mxu0 %v2699
    %2787 = vmatprep.subr.mxu0 0.0
    %2788 = vmatpush1.msra.mxu0 %v2700
    %2789 = vmatprep.subr.mxu0 0.0
    %2790 = vmatpush1.msra.mxu0 %v2701
    %2791 = vmatprep.subr.mxu0 0.0
    %2792 = vmatpush1.msra.mxu0 %v2702
    %2793 = vmatprep.subr.mxu0 0.0
    %2794 = vmatpush1.msra.mxu0 0.0
    %2795 = vmatprep.subr.mxu0 0.0
    %2796 = vmatpush1.msra.mxu0 0.0
    %2797 = vmatprep.subr.mxu0 0.0
    %2798 = vmatpush1.msra.mxu0 0.0
    %2799 = vmatprep.subr.mxu0 0.0
    %2800 = vmatpush1.msra.mxu0 0.0
    %2801 = vmatprep.subr.mxu0 0.0
    %2802 = vmatpush1.msra.mxu0 0.0
    %2803 = vmatprep.subr.mxu0 0.0
    %2804 = vmatpush1.msra.mxu0 0.0
    %2805 = vmatprep.subr.mxu0 0.0
    %2806 = vmatpush1.msra.mxu0 0.0
    %2807 = vmatprep.subr.mxu0 0.0
    %2808 = vmatpush1.msra.mxu0 0.0
    %2809 = vmatprep.subr.mxu0 0.0
    %2810 = vmatpush1.msra.mxu0 0.0
    %2811 = vmatprep.subr.mxu0 0.0
    %2812 = vmatpush1.msra.mxu0 0.0
    %2813 = vmatprep.subr.mxu0 0.0
    %2814 = vmatpush1.msra.mxu0 0.0
    %2815 = vmatprep.subr.mxu0 0.0
    %2816 = vmatpush1.msra.mxu0 0.0
    %2817 = vmatprep.subr.mxu0 0.0
    %2818 = vmatpush1.msra.mxu0 0.0
    %2819 = vmatprep.subr.mxu0 0.0
    %2820 = vmatpush1.msra.mxu0 0.0
    %2821 = vmatprep.subr.mxu0 0.0
    %2822 = vmatpush1.msra.mxu0 0.0
    %2823 = vmatprep.subr.mxu0 0.0
    %2824 = vmatpush1.msra.mxu0 0.0
    %2825 = vmatprep.subr.mxu0 0.0
    %2826 = vmatpush1.msra.mxu0 0.0
    %2827 = vmatprep.subr.mxu0 0.0
    %2828 = vmatpush1.msra.mxu0 0.0
    %2829 = vmatprep.subr.mxu0 0.0
    %2830 = vmatpush1.msra.mxu0 0.0
    %2831 = vmatprep.subr.mxu0 0.0
    %2832 = vmatpush1.msra.mxu0 0.0
    %2833 = vmatprep.subr.mxu0 0.0
    %2834 = vmatpush1.msra.mxu0 0.0
    %2835 = vmatprep.subr.mxu0 0.0
    %2836 = vmatpush1.msra.mxu0 0.0
    %2837 = vmatprep.subr.mxu0 0.0
    %2838 = vmatpush1.msra.mxu0 0.0
    %2839 = vmatprep.subr.mxu0 0.0
    %2840 = vmatpush1.msra.mxu0 0.0
    %2841 = vmatprep.subr.mxu0 0.0
    %2842 = vmatpush1.msra.mxu0 0.0
    %2843 = vmatprep.subr.mxu0 0.0
    %2844 = vmatpush1.msra.mxu0 0.0
    %2845 = vmatprep.subr.mxu0 0.0
    %2846 = vmatpush1.msra.mxu0 0.0
    %2847 = vmatprep.subr.mxu0 0.0
    %2848 = vmatpush1.msra.mxu0 0.0
    %2849 = vmatprep.mubr.f32.mxu0 0.0
    %2850 = vmatmul.mubr.f32.gmra.mrb[0].mxu0 %v2783
    %v2851 = vpop.f32.mrb[0].mxu0
    %v2852 = vadd.f32 %v2777, %v2851
    %v2853 = vpop.f32.mrb[0].mxu0
    %2854 = vdwg.mxu0
    %v2855 = vld [vmem:[#allocation19] sm:$0x1]
    %v2857 = vlaneseq
    %v2858 = vshrl.u32 %v2857, 7
    %v2859 = vsub.s32 0, %v2858
    %v2860 = vrot.slane %v2855, %v2859
    %v2862 = vadd.f32 %v2852, %v2860
    %v2863 = vmax.f32 %v2862, 0.0
    %v2864 = vld [vmem:[%s17] sm:$0xff]
    %v2865 = vld [vmem:[%s17 + $0x8] sm:$0xff]
    %v2866 = vld [vmem:[%s17 + $0x10] sm:$0xff]
    %v2867 = vld [vmem:[%s17 + $0x18] sm:$0xff]
    %v2868 = vld [vmem:[%s17 + $0x20] sm:$0xff]
    %v2869 = vld [vmem:[%s17 + $0x28] sm:$0xff]
    %v2870 = vld [vmem:[%s17 + $0x30] sm:$0xff]
    %v2871 = vld [vmem:[%s17 + $0x38] sm:$0xff]
    %v2872 = vld [vmem:[#allocation20] sm:$0x1]
    %v2874 = vlaneseq
    %v2875 = vshrl.u32 %v2874, 7
    %v2876 = vsub.s32 0, %v2875
    %v2877 = vrot.slane %v2872, %v2876
    %vm2879 = vcmask 523264
    %v2881 = vsel %vm2879, %v2863, 0
    %2883 = vmatprep.subr.mxu0 0.0
    %2884 = vmatpush1.msra.mxu0 %v2864
    %2885 = vmatprep.subr.mxu0 0.0
    %2886 = vmatpush1.msra.mxu0 %v2865
    %2887 = vmatprep.subr.mxu0 0.0
    %2888 = vmatpush1.msra.mxu0 %v2866
    %2889 = vmatprep.subr.mxu0 0.0
    %2890 = vmatpush1.msra.mxu0 %v2867
    %2891 = vmatprep.subr.mxu0 0.0
    %2892 = vmatpush1.msra.mxu0 %v2868
    %2893 = vmatprep.subr.mxu0 0.0
    %2894 = vmatpush1.msra.mxu0 %v2869
    %2895 = vmatprep.subr.mxu0 0.0
    %2896 = vmatpush1.msra.mxu0 %v2870
    %2897 = vmatprep.subr.mxu0 0.0
    %2898 = vmatpush1.msra.mxu0 %v2871
    %2899 = vmatprep.subr.mxu0 0.0
    %2900 = vmatpush1.msra.mxu0 0.0
    %2901 = vmatprep.subr.mxu0 0.0
    %2902 = vmatpush1.msra.mxu0 0.0
    %2903 = vmatprep.subr.mxu0 0.0
    %2904 = vmatpush1.msra.mxu0 0.0
    %2905 = vmatprep.subr.mxu0 0.0
    %2906 = vmatpush1.msra.mxu0 0.0
    %2907 = vmatprep.subr.mxu0 0.0
    %2908 = vmatpush1.msra.mxu0 0.0
    %2909 = vmatprep.subr.mxu0 0.0
    %2910 = vmatpush1.msra.mxu0 0.0
    %2911 = vmatprep.subr.mxu0 0.0
    %2912 = vmatpush1.msra.mxu0 0.0
    %2913 = vmatprep.subr.mxu0 0.0
    %2914 = vmatpush1.msra.mxu0 0.0
    %2915 = vmatprep.subr.mxu0 0.0
    %2916 = vmatpush1.msra.mxu0 0.0
    %2917 = vmatprep.subr.mxu0 0.0
    %2918 = vmatpush1.msra.mxu0 0.0
    %2919 = vmatprep.subr.mxu0 0.0
    %2920 = vmatpush1.msra.mxu0 0.0
    %2921 = vmatprep.subr.mxu0 0.0
    %2922 = vmatpush1.msra.mxu0 0.0
    %2923 = vmatprep.subr.mxu0 0.0
    %2924 = vmatpush1.msra.mxu0 0.0
    %2925 = vmatprep.subr.mxu0 0.0
    %2926 = vmatpush1.msra.mxu0 0.0
    %2927 = vmatprep.subr.mxu0 0.0
    %2928 = vmatpush1.msra.mxu0 0.0
    %2929 = vmatprep.subr.mxu0 0.0
    %2930 = vmatpush1.msra.mxu0 0.0
    %2931 = vmatprep.subr.mxu0 0.0
    %2932 = vmatpush1.msra.mxu0 0.0
    %2933 = vmatprep.subr.mxu0 0.0
    %2934 = vmatpush1.msra.mxu0 0.0
    %2935 = vmatprep.subr.mxu0 0.0
    %2936 = vmatpush1.msra.mxu0 0.0
    %2937 = vmatprep.subr.mxu0 0.0
    %2938 = vmatpush1.msra.mxu0 0.0
    %2939 = vmatprep.subr.mxu0 0.0
    %2940 = vmatpush1.msra.mxu0 0.0
    %2941 = vmatprep.subr.mxu0 0.0
    %2942 = vmatpush1.msra.mxu0 0.0
    %2943 = vmatprep.subr.mxu0 0.0
    %2944 = vmatpush1.msra.mxu0 0.0
    %2945 = vmatprep.subr.mxu0 0.0
    %2946 = vmatpush1.msra.mxu0 0.0
    %2947 = vmatprep.mubr.f32.mxu0 0.0
    %2948 = vmatmul.mubr.f32.gmra.mrb[0].mxu0 %v2881
    %v2949 = vpop.f32.mrb[0].mxu0
    %v2950 = vadd.f32 %v2877, %v2949
    %v2951 = vpop.f32.mrb[0].mxu0
    %2952 = vdwg.mxu0
    %v2953 = vmax.f32 %v2950, 0.0
    %v2954 = vld [vmem:[#allocation22] sm:$0x1]
    %v2956 = vlaneseq
    %v2957 = vshrl.u32 %v2956, 7
    %v2958 = vsub.s32 0, %v2957
    %v2959 = vrot.slane %v2954, %v2958
    %v2961 = vmul.f32 %v2953, %v2959
    %v2962 = vsel %vm2879, %v2961, 0.0
    %2963 = vadd.xlane.f32.xlu0 %v2962
    %v2964 = vpop.xlane.xlu0 %2963
    %v2965 = vld [vmem:[#allocation2] sm:$0x1]
    %v2967 = vlaneseq
    %v2968 = vshrl.u32 %v2967, 7
    %v2969 = vsub.s32 0, %v2968
    %v2970 = vrot.slane %v2965, %v2969
    %v2972 = vadd.f32 %v2964, %v2970
    %v2973 = vtanh.pop %v2972
    %vm2974 = vcmask 7168
    %2975 = vst.msk [vmem:[%s21] sm:$0xff] %vm2974, %v2973
    // Predicated region
    $region138: #{critic_forward.1} parent=1 // pred_check
      _
    $region139: #{critic_forward.1} parent=1 // pred_check_branch
      %2977 = sbr.rel (0) target = $region141
    $region140: #{critic_forward.1} parent=1 // pred_region
      _
    $region141: #{critic_forward.1} parent=1 // pred_fallthru
      _
    // Predicated region
    $region142: #{critic_forward.1} parent=1 // pred_check
      _
    $region143: #{critic_forward.1} parent=1 // pred_check_branch
      %2979 = sbr.rel (0) target = $region145
    $region144: #{critic_forward.1} parent=1 // pred_region
      _
    $region145: #{critic_forward.1} parent=1 // pred_fallthru
      _
    %2980 = vsyncpa [#allocation4], 1
    %2981 = vsyncpa [#allocation6], 1
    %2982 = vsyncpa [#allocation9], 1
    %2983 = vsyncpa [#allocation12], 1
    %2984 = vsyncpa [#allocation15], 1
    %2985 = vsyncpa [#allocation18], 1
    %2986 = vsyncpa [#allocation21], 1

</llo_original>
